<compile_context>
chip_gen: v6e
topology: v6e:2x2x1
jax: 0.10.0
libtpu: 0.0.40
codegen_flags: <defaults>
</compile_context>

<pallas_src>
import functools
import math

import jax
import jax.numpy as jnp
from jax.experimental import pallas as pl
from jax.experimental.pallas import tpu as pltpu

# "-inf" stand-in for the masked max pool.  Do NOT lower: pooled values
# <= _NEG/2 are treated as "empty graph" and zeroed in the wrapper.
_NEG = -3.0e38


def _round_up(x, m):
    return ((x + m - 1) // m) * m


def _pad2(a, rows, cols):
    return jnp.pad(a, ((0, rows - a.shape[0]), (0, cols - a.shape[1])))


def _default_config():
    """(tm, tk, vmem_limit_bytes) chosen per TPU generation."""
    kind = ""
    try:
        kind = jax.devices()[0].device_kind.lower()
    except Exception:
        pass
    if ("v5 lite" in kind) or ("v5e" in kind) or ("v4" in kind):
        # 128-wide MXU: tk=128 is native; large row panels amortize the
        # ~600-cycle grid-step overhead; raise the 16 MiB scoped default.
        return 256, 128, 64 * 1024 * 1024
    if "v6" in kind:
        # 256x256 MXU, 128 MiB physical VMEM.
        return 256, 256, 64 * 1024 * 1024
    # v7x (and unknown): 256-wide MXU but only 64 MiB VMEM -> keep headroom.
    return 256, 256, 48 * 1024 * 1024


# --------------------------------------------------------------------------
# Kernel 1: GCN layer 1   h1 = relu((A @ X) @ W1 + b1)
#   grid = (row panels of A, K-reduction tiles); f32 VMEM accumulator.
#   X is fully VMEM-resident when small enough (sliced per-K in kernel),
#   otherwise streamed as (tk, F) panels.
# --------------------------------------------------------------------------
def _gcn1_kernel(a_ref, x_ref, w_ref, b_ref, o_ref, acc_ref, *, x_resident, tk):
    k = pl.program_id(1)

    @pl.when(k == 0)
    def _():
        acc_ref[...] = jnp.zeros_like(acc_ref)

    if x_resident:
        x_tile = x_ref[pl.ds(pl.multiple_of(k * tk, tk), tk), :]
    else:
        x_tile = x_ref[...]
    acc_ref[...] += jnp.dot(a_ref[...], x_tile,
                            preferred_element_type=jnp.float32)

    @pl.when(k == pl.num_programs(1) - 1)
    def _():
        h = jnp.dot(acc_ref[...].astype(jnp.bfloat16), w_ref[...],
                    preferred_element_type=jnp.float32) + b_ref[...]
        o_ref[...] = jnp.maximum(h, 0.0).astype(o_ref.dtype)


def _gcn_layer1(a, x, w, b, *, tm, tk, vmem_limit):
    n_pad = a.shape[0]
    f_pad = x.shape[1]
    h_out = w.shape[1]
    grid = (n_pad // tm, n_pad // tk)

    x_resident = x.size * x.dtype.itemsize <= vmem_limit // 4
    if x_resident:
        x_spec = pl.BlockSpec((n_pad, f_pad), lambda i, k: (0, 0))
        x_stream_factor = 1
    else:
        x_spec = pl.BlockSpec((tk, f_pad), lambda i, k: (k, 0))
        x_stream_factor = n_pad // tm          # X re-read once per row panel

    flops = 2 * n_pad * n_pad * f_pad + 2 * n_pad * f_pad * h_out
    bytes_accessed = (a.size * a.dtype.itemsize
                      + x.size * x.dtype.itemsize * x_stream_factor
                      + w.size * w.dtype.itemsize + b.size * 4
                      + n_pad * h_out * 2)

    kernel = functools.partial(_gcn1_kernel, x_resident=x_resident, tk=tk)
    return pl.pallas_call(
        kernel,
        out_shape=jax.ShapeDtypeStruct((n_pad, h_out), jnp.bfloat16),
        grid_spec=pltpu.PrefetchScalarGridSpec(
            num_scalar_prefetch=0,
            grid=grid,
            in_specs=[
                pl.BlockSpec((tm, tk), lambda i, k: (i, k)),        # A tile
                x_spec,                                             # X
                pl.BlockSpec((f_pad, h_out), lambda i, k: (0, 0)),  # W1 resident
                pl.BlockSpec((1, h_out), lambda i, k: (0, 0)),      # b1
            ],
            out_specs=pl.BlockSpec((tm, h_out), lambda i, k: (i, 0)),
            scratch_shapes=[pltpu.VMEM((tm, f_pad), jnp.float32)],
        ),
        compiler_params=pltpu.CompilerParams(
            dimension_semantics=("parallel", "arbitrary"),
            vmem_limit_bytes=vmem_limit,
        ),
        cost_estimate=pl.CostEstimate(flops=flops, transcendentals=0,
                                      bytes_accessed=bytes_accessed),
    )(a, x, w, b)


# --------------------------------------------------------------------------
# Kernel 2: fused GCN layer 2 + auxiliary heads + per-panel max pool.
#   node_emb = (A @ H1) @ W2 + b2 stays in registers per row panel:
#     - heads slab  = node_emb @ (Wv|Wt) + (bv|bt)   (lane-dense [tm, 128k])
#     - partial pool[i] = masked max over this panel's rows, per graph id.
#   Row axis is "parallel" (per-panel outputs only) -> megacore-safe on v7x.
# --------------------------------------------------------------------------
def _gcn2_fused_kernel(batch_ref, a_ref, h_ref, w2_ref, b2_ref, wh_ref, bh_ref,
                       heads_ref, pool_ref, acc_ref, *, h_resident, tk, g_pad):
    k = pl.program_id(1)

    @pl.when(k == 0)
    def _():
        acc_ref[...] = jnp.zeros_like(acc_ref)

    if h_resident:
        h_tile = h_ref[pl.ds(pl.multiple_of(k * tk, tk), tk), :]
    else:
        h_tile = h_ref[...]
    acc_ref[...] += jnp.dot(a_ref[...], h_tile,
                            preferred_element_type=jnp.float32)

    @pl.when(k == pl.num_programs(1) - 1)
    def _():
        # node_emb for this row panel: never written to / re-read from HBM.
        ne = (jnp.dot(acc_ref[...].astype(jnp.bfloat16), w2_ref[...],
                      preferred_element_type=jnp.float32) + b2_ref[...])

        # fused (Wv|Wt) heads -> one lane-dense output slab (unmasked stores).
        heads_ref[...] = (jnp.dot(ne.astype(jnp.bfloat16), wh_ref[...],
                                  preferred_element_type=jnp.float32)
                          + bh_ref[...])

        # per-panel partial global_max_pool; batch-id broadcast hoisted once.
        # Padded nodes carry id -1 and never match any graph.
        bid = jnp.broadcast_to(batch_ref[...], ne.shape)      # [tm, Hp] int32
        rows = []
        # TODO(synk): switch to a bounded lax.fori_loop / sorted-batch walk if
        # the number of graphs per batch grows beyond ~16.
        for g in range(g_pad):
            rows.append(jnp.max(jnp.where(bid == g, ne, _NEG),
                                axis=0, keepdims=True))
        pool_ref[0] = jnp.concatenate(rows, axis=0)           # [Gp, Hp]


def _gcn_layer2_heads_pool(batch_col, a, h1, w2, b2, wh, bh, *,
                           g_pad, tm, tk, vmem_limit):
    n_pad = a.shape[0]
    h_pad = h1.shape[1]
    h_out = w2.shape[1]
    p = wh.shape[1]
    n_row = n_pad // tm
    grid = (n_row, n_pad // tk)

    h_resident = h1.size * h1.dtype.itemsize <= vmem_limit // 4
    if h_resident:
        h_spec = pl.BlockSpec((n_pad, h_pad), lambda i, k: (0, 0))
        h_stream_factor = 1
    else:
        h_spec = pl.BlockSpec((tk, h_pad), lambda i, k: (k, 0))
        h_stream_factor = n_row

    flops = (2 * n_pad * n_pad * h_pad          # A @ H1
             + 2 * n_pad * h_pad * h_out        # @ W2
             + 2 * n_pad * h_out * p)           # fused heads
    bytes_accessed = (a.size * a.dtype.itemsize
                      + h1.size * h1.dtype.itemsize * h_stream_factor
                      + w2.size * 2 + wh.size * 2
                      + n_pad * p * 4 + n_row * g_pad * h_out * 4 + n_pad * 4)

    kernel = functools.partial(_gcn2_fused_kernel, h_resident=h_resident,
                               tk=tk, g_pad=g_pad)
    return pl.pallas_call(
        kernel,
        out_shape=(jax.ShapeDtypeStruct((n_pad, p), jnp.float32),
                   jax.ShapeDtypeStruct((n_row, g_pad, h_out), jnp.float32)),
        grid_spec=pltpu.PrefetchScalarGridSpec(
            num_scalar_prefetch=0,
            grid=grid,
            in_specs=[
                pl.BlockSpec((tm, 1), lambda i, k: (i, 0)),         # batch ids
                pl.BlockSpec((tm, tk), lambda i, k: (i, k)),        # A tile
                h_spec,                                             # H1
                pl.BlockSpec((h_pad, h_out), lambda i, k: (0, 0)),  # W2
                pl.BlockSpec((1, h_out), lambda i, k: (0, 0)),      # b2
                pl.BlockSpec((h_out, p), lambda i, k: (0, 0)),      # Wv|Wt
                pl.BlockSpec((1, p), lambda i, k: (0, 0)),          # bv|bt
            ],
            out_specs=(
                pl.BlockSpec((tm, p), lambda i, k: (i, 0)),             # heads
                pl.BlockSpec((1, g_pad, h_out), lambda i, k: (i, 0, 0)),  # pool_i
            ),
            scratch_shapes=[pltpu.VMEM((tm, h_pad), jnp.float32)],
        ),
        compiler_params=pltpu.CompilerParams(
            dimension_semantics=("parallel", "arbitrary"),
            vmem_limit_bytes=vmem_limit,
        ),
        cost_estimate=pl.CostEstimate(flops=flops, transcendentals=0,
                                      bytes_accessed=bytes_accessed),
    )(batch_col, a, h1, w2, b2, wh, bh)


# --------------------------------------------------------------------------
# Forward wrapper: padding / bf16 casting / head fusion + the two kernels.
# --------------------------------------------------------------------------
def gnn_forward(x, a_hat, batch, params, *, num_graphs, num_classes, dv, dt,
                tm=None, tk=None, vmem_limit_bytes=None):
    n, fin = x.shape
    hid = params["w1"].shape[1]

    d_tm, d_tk, d_vmem = _default_config()
    tm = d_tm if tm is None else tm
    tk = d_tk if tk is None else tk
    vmem_limit = d_vmem if vmem_limit_bytes is None else vmem_limit_bytes
    assert tm % 128 == 0 and tk % 128 == 0, "tm/tk must be multiples of 128"

    step = (tm * tk) // math.gcd(tm, tk)
    n_pad = _round_up(max(n, 1), step)
    f_pad = _round_up(fin, 128)
    h_pad = _round_up(hid, 128)
    g_pad = _round_up(num_graphs, 8)
    p = _round_up(dv + dt, 128)

    # heavy operands -> bf16 (f32 accumulation stays inside the kernels).
    # TODO(synk): on v7x A_hat could be cast to fp8 (e4m3) for the O(N^2)
    # aggregation; kept bf16 everywhere pending accuracy validation.
    a_b = _pad2(a_hat, n_pad, n_pad).astype(jnp.bfloat16)
    x_b = _pad2(x, n_pad, f_pad).astype(jnp.bfloat16)
    w1_b = _pad2(params["w1"], f_pad, h_pad).astype(jnp.bfloat16)
    b1_p = _pad2(params["b1"], 1, h_pad).astype(jnp.float32)
    w2_b = _pad2(params["w2"], h_pad, h_pad).astype(jnp.bfloat16)
    b2_p = _pad2(params["b2"], 1, h_pad).astype(jnp.float32)

    # fuse the two auxiliary heads into one lane-dense (128-wide) weight slab.
    wh_b = _pad2(jnp.concatenate([params["wv"], params["wt"]], axis=1),
                 h_pad, p).astype(jnp.bfloat16)
    bh_p = _pad2(jnp.concatenate([params["bv"], params["bt"]], axis=1),
                 1, p).astype(jnp.float32)

    # batch ids as an int32 column; padded nodes get id -1 (never pooled).
    batch_col = jnp.pad(batch.astype(jnp.int32), (0, n_pad - n),
                        constant_values=-1).reshape(n_pad, 1)

    # encoder layer 1: tiled A@X with resident X + f32 accumulation.
    h1 = _gcn_layer1(a_b, x_b, w1_b, b1_p, tm=tm, tk=tk,
                     vmem_limit=vmem_limit)                     # [Np, Hp] bf16

    # encoder layer 2 fused with heads + per-panel partial max pool.
    heads, partial_pool = _gcn_layer2_heads_pool(
        batch_col, a_b, h1, w2_b, b2_p, wh_b, bh_p,
        g_pad=g_pad, tm=tm, tk=tk, vmem_limit=vmem_limit)

    # combine per-panel pools + tiny [G,H]@[H,C] classifier in plain JAX
    # (negligible work; keeps the row-panel axis "parallel" on v7x).
    pooled = jnp.max(partial_pool, axis=0)                      # [Gp, Hp]
    # Empty / padded graphs -> 0 embedding instead of -3e38.  NOTE: a real
    # graph with zero nodes therefore yields logits from a zero embedding.
    pooled = jnp.where(pooled > _NEG * 0.5, pooled, 0.0)
    pooled = pooled[:num_graphs, :hid]
    logits = jnp.dot(pooled, params["wc"],
                     precision=jax.lax.Precision.HIGHEST) + params["bc"]

    out_v = heads[:n, :dv]
    out_t = heads[:n, dv:dv + dt]
    return logits, out_v, out_t


def build_normalized_adjacency(edge_index, num_nodes):
    """A_hat = D^{-1/2} (A + I) D^{-1/2} from a [2, E] edge_index (plain JAX glue)."""
    src, dst = edge_index[0], edge_index[1]
    a = jnp.zeros((num_nodes, num_nodes), jnp.float32)
    a = a.at[src, dst].set(1.0)
    a = a.at[dst, src].set(1.0)                           # undirected
    a = a + jnp.eye(num_nodes, dtype=jnp.float32)         # self loops
    deg = jnp.sum(a, axis=1)
    d_inv_sqrt = 1.0 / jnp.sqrt(jnp.maximum(deg, 1e-12))
    return a * d_inv_sqrt[:, None] * d_inv_sqrt[None, :]


def reference_forward(x, a_hat, batch, params, num_graphs):
    """Pure-JAX reference replicating the kernel's bf16-operand / f32-acc math."""
    bf = lambda t: t.astype(jnp.bfloat16).astype(jnp.float32)
    dot = functools.partial(jnp.dot, precision=jax.lax.Precision.HIGHEST)

    a = bf(a_hat)
    ax = dot(a, bf(x))
    h1 = jnp.maximum(dot(bf(ax), bf(params["w1"])) + params["b1"], 0.0)
    h1 = bf(h1)                                           # layer-1 output stored bf16
    ah = dot(a, h1)
    node_emb = dot(bf(ah), bf(params["w2"])) + params["b2"]

    ne_b = bf(node_emb)
    out_v = dot(ne_b, bf(params["wv"])) + params["bv"]
    out_t = dot(ne_b, bf(params["wt"])) + params["bt"]

    mask = batch[None, :] == jnp.arange(num_graphs, dtype=batch.dtype)[:, None]
    pooled = jnp.max(jnp.where(mask[:, :, None], node_emb[None, :, :],
                               jnp.float32(_NEG)), axis=1)
    out = dot(pooled, params["wc"]) + params["bc"]
    return out, out_v, out_t


if __name__ == "__main__":
    # ---- deterministic problem: 3 ring graphs (120 / 100 / 80 nodes) ----
    FIN, HID, C, DV, DT = 16, 32, 4, 8, 8
    sizes = (120, 100, 80)
    G = len(sizes)
    N = sum(sizes)

    key = jax.random.PRNGKey(0)
    ks = jax.random.split(key, 11)

    x = jax.random.normal(ks[0], (N, FIN), jnp.float32)

    srcs, dsts, bids = [], [], []
    off = 0
    for gid, s in enumerate(sizes):
        idx = jnp.arange(s, dtype=jnp.int32)
        srcs.append(off + idx)
        dsts.append(off + (idx + 1) % s)                 # ring within the graph
        bids.append(jnp.full((s,), gid, jnp.int32))
        off += s
    edge_index = jnp.stack([jnp.concatenate(srcs), jnp.concatenate(dsts)], 0)
    batch = jnp.concatenate(bids)

    a_hat = build_normalized_adjacency(edge_index, N)

    def init(k, shape, scale):
        return scale * jax.random.normal(k, shape, jnp.float32)

    params = {
        "w1": init(ks[1], (FIN, HID), 0.3), "b1": init(ks[6], (1, HID), 0.05),
        "w2": init(ks[2], (HID, HID), 0.2), "b2": init(ks[7], (1, HID), 0.05),
        "wv": init(ks[3], (HID, DV), 0.2),  "bv": init(ks[8], (1, DV), 0.05),
        "wt": init(ks[4], (HID, DT), 0.2),  "bt": init(ks[9], (1, DT), 0.05),
        "wc": init(ks[5], (HID, C), 0.2),   "bc": init(ks[10], (1, C), 0.05),
    }

    # tm=tk=128 here is TEST-ONLY so the small problem (N padded to 384)
    # exercises a 3x3 (row-panel, K) grid with real accumulation; production
    # defaults come from _default_config() (256-wide tiles on v6e/v7x).
    fwd = jax.jit(functools.partial(gnn_forward, num_graphs=G, num_classes=C,
                                    dv=DV, dt=DT, tm=128, tk=128))
    out, out_v, out_t = fwd(x, a_hat, batch, params)
    jax.block_until_ready((out, out_v, out_t))

    assert out.shape == (G, C)
    assert out_v.shape == (N, DV)
    assert out_t.shape == (N, DT)

    ref_out, ref_v, ref_t = reference_forward(x, a_hat, batch, params, G)
    assert jnp.allclose(out, ref_out, rtol=2e-2, atol=2e-2)
    assert jnp.allclose(out_v, ref_v, rtol=2e-2, atol=2e-2)
    assert jnp.allclose(out_t, ref_t, rtol=2e-2, atol=2e-2)

    print("KERNEL_OK")
</pallas_src>

<mosaic_0001>
module attributes {stable_mosaic.version = 11 : i64} {
  func.func @_gcn1_kernel(%arg0: i32, %arg1: i32, %arg2: memref<128x128xbf16, #tpu.memory_space<vmem>>, %arg3: memref<384x128xbf16, #tpu.memory_space<vmem>>, %arg4: memref<128x128xbf16, #tpu.memory_space<vmem>>, %arg5: memref<1x128xf32, #tpu.memory_space<vmem>>, %arg6: memref<128x128xbf16, #tpu.memory_space<vmem>>, %arg7: memref<128x128xf32, #tpu.memory_space<vmem>>) attributes {dimension_semantics = [#tpu.dimension_semantics<parallel>, #tpu.dimension_semantics<arbitrary>], iteration_bounds = array<i64: 3, 3>, scalar_prefetch = 0 : i64, scratch_operands = 1 : i64, tpu.core_type = #tpu.core_type<tc>, window_params = [{transform_indices = @transform_0, window_bounds = array<i64: 128, 128>}, {pipeline_mode = #tpu.pipeline_mode<synchronous>, transform_indices = @transform_1, window_bounds = array<i64: 384, 128>}, {pipeline_mode = #tpu.pipeline_mode<synchronous>, transform_indices = @transform_2, window_bounds = array<i64: 128, 128>}, {pipeline_mode = #tpu.pipeline_mode<synchronous>, transform_indices = @transform_3, window_bounds = array<i64: 1, 128>}, {transform_indices = @transform_4, window_bounds = array<i64: 128, 128>}]} {
    %c0_i32 = arith.constant 0 : i32
    %0 = arith.cmpi eq, %arg1, %c0_i32 : i32
    %1 = arith.extui %0 : i1 to i32
    %c0_i32_0 = arith.constant 0 : i32
    %2 = arith.cmpi ne, %1, %c0_i32_0 : i32
    scf.if %2 {
      %cst_8 = arith.constant 0.000000e+00 : f32
      %15 = vector.broadcast %cst_8 : f32 to vector<128x128xf32>
      %c0_9 = arith.constant 0 : index
      %c0_10 = arith.constant 0 : index
      %16 = vector.load %arg7[%c0_9, %c0_10] : memref<128x128xf32, #tpu.memory_space<vmem>>, vector<128x128xf32>
      tpu.vector_store %arg7[%c0_9, %c0_10], %15 {strides = array<i32>} : memref<128x128xf32, #tpu.memory_space<vmem>>, vector<128x128xf32>,
    } else {
    }
    %c128_i32 = arith.constant 128 : i32
    %3 = arith.muli %arg1, %c128_i32 : i32
    %4 = tpu.assume_multiple %3, 128 : i32
    %5 = arith.index_cast %4 : i32 to index
    %c0 = arith.constant 0 : index
    %6 = vector.load %arg3[%5, %c0] : memref<384x128xbf16, #tpu.memory_space<vmem>>, vector<128x128xbf16>
    %c0_1 = arith.constant 0 : index
    %c0_2 = arith.constant 0 : index
    %7 = vector.load %arg7[%c0_1, %c0_2] : memref<128x128xf32, #tpu.memory_space<vmem>>, vector<128x128xf32>
    %c0_3 = arith.constant 0 : index
    %c0_4 = arith.constant 0 : index
    %8 = vector.load %arg2[%c0_3, %c0_4] : memref<128x128xbf16, #tpu.memory_space<vmem>>, vector<128x128xbf16>
    %cst = arith.constant dense<0.000000e+00> : vector<128x128xf32>
    %9 = tpu.matmul %8, %6, %cst {dimension_numbers = #tpu.dot_dimension_numbers<[1], [0], [0], [1], [0, 0, 1, 1], [], []>} : vector<128x128xbf16>, vector<128x128xbf16>, vector<128x128xf32> -> vector<128x128xf32>
    %10 = arith.addf %7, %9 : vector<128x128xf32>
    %c0_5 = arith.constant 0 : index
    %c0_6 = arith.constant 0 : index
    %11 = vector.load %arg7[%c0_5, %c0_6] : memref<128x128xf32, #tpu.memory_space<vmem>>, vector<128x128xf32>
    tpu.vector_store %arg7[%c0_5, %c0_6], %10 {strides = array<i32>} : memref<128x128xf32, #tpu.memory_space<vmem>>, vector<128x128xf32>,
    %c2_i32 = arith.constant 2 : i32
    %12 = arith.cmpi eq, %arg1, %c2_i32 : i32
    %13 = arith.extui %12 : i1 to i32
    %c0_i32_7 = arith.constant 0 : i32
    %14 = arith.cmpi ne, %13, %c0_i32_7 : i32
    scf.if %14 {
      %c0_8 = arith.constant 0 : index
      %c0_9 = arith.constant 0 : index
      %15 = vector.load %arg7[%c0_8, %c0_9] : memref<128x128xf32, #tpu.memory_space<vmem>>, vector<128x128xf32>
      %16 = arith.truncf %15 : vector<128x128xf32> to vector<128x128xbf16>
      %c0_10 = arith.constant 0 : index
      %c0_11 = arith.constant 0 : index
      %17 = vector.load %arg4[%c0_10, %c0_11] : memref<128x128xbf16, #tpu.memory_space<vmem>>, vector<128x128xbf16>
      %cst_12 = arith.constant dense<0.000000e+00> : vector<128x128xf32>
      %18 = tpu.matmul %16, %17, %cst_12 {dimension_numbers = #tpu.dot_dimension_numbers<[1], [0], [0], [1], [0, 0, 1, 1], [], []>} : vector<128x128xbf16>, vector<128x128xbf16>, vector<128x128xf32> -> vector<128x128xf32>
      %c0_13 = arith.constant 0 : index
      %c0_14 = arith.constant 0 : index
      %19 = vector.load %arg5[%c0_13, %c0_14] : memref<1x128xf32, #tpu.memory_space<vmem>>, vector<1x128xf32>
      %20 = vector.broadcast %19 : vector<1x128xf32> to vector<128x128xf32>
      %21 = arith.addf %18, %20 : vector<128x128xf32>
      %cst_15 = arith.constant 0.000000e+00 : f32
      %22 = vector.broadcast %cst_15 : f32 to vector<128x128xf32>
      %23 = arith.maximumf %21, %22 : vector<128x128xf32>
      %24 = arith.truncf %23 : vector<128x128xf32> to vector<128x128xbf16>
      %c0_16 = arith.constant 0 : index
      %c0_17 = arith.constant 0 : index
      %25 = vector.load %arg6[%c0_16, %c0_17] : memref<128x128xbf16, #tpu.memory_space<vmem>>, vector<128x128xbf16>
      tpu.vector_store %arg6[%c0_16, %c0_17], %24 {strides = array<i32>} : memref<128x128xbf16, #tpu.memory_space<vmem>>, vector<128x128xbf16>,
    } else {
    }
    return
  }
  func.func @transform_0(%arg0: i32, %arg1: i32) -> (i32, i32) {
    %c0_i32 = arith.constant 0 : i32
    return %arg0, %arg1 : i32, i32
  }
  func.func @transform_1(%arg0: i32, %arg1: i32) -> (i32, i32) {
    %c0_i32 = arith.constant 0 : i32
    %c0_i32_0 = arith.constant 0 : i32
    %c0_i32_1 = arith.constant 0 : i32
    return %c0_i32, %c0_i32_0 : i32, i32
  }
  func.func @transform_2(%arg0: i32, %arg1: i32) -> (i32, i32) {
    %c0_i32 = arith.constant 0 : i32
    %c0_i32_0 = arith.constant 0 : i32
    %c0_i32_1 = arith.constant 0 : i32
    return %c0_i32, %c0_i32_0 : i32, i32
  }
  func.func @transform_3(%arg0: i32, %arg1: i32) -> (i32, i32) {
    %c0_i32 = arith.constant 0 : i32
    %c0_i32_0 = arith.constant 0 : i32
    %c0_i32_1 = arith.constant 0 : i32
    return %c0_i32, %c0_i32_0 : i32, i32
  }
  func.func @transform_4(%arg0: i32, %arg1: i32) -> (i32, i32) {
    %c0_i32 = arith.constant 0 : i32
    %c0_i32_0 = arith.constant 0 : i32
    return %arg0, %c0_i32 : i32, i32
  }
}

module attributes {stable_mosaic.version = 11 : i64} {
  func.func @_gcn2_fused_kernel(%arg0: i32, %arg1: i32, %arg2: memref<128x1xi32, #tpu.memory_space<vmem>>, %arg3: memref<128x128xbf16, #tpu.memory_space<vmem>>, %arg4: memref<384x128xbf16, #tpu.memory_space<vmem>>, %arg5: memref<128x128xbf16, #tpu.memory_space<vmem>>, %arg6: memref<1x128xf32, #tpu.memory_space<vmem>>, %arg7: memref<128x128xbf16, #tpu.memory_space<vmem>>, %arg8: memref<1x128xf32, #tpu.memory_space<vmem>>, %arg9: memref<128x128xf32, #tpu.memory_space<vmem>>, %arg10: memref<1x8x128xf32, #tpu.memory_space<vmem>>, %arg11: memref<128x128xf32, #tpu.memory_space<vmem>>) attributes {dimension_semantics = [#tpu.dimension_semantics<parallel>, #tpu.dimension_semantics<arbitrary>], iteration_bounds = array<i64: 3, 3>, scalar_prefetch = 0 : i64, scratch_operands = 1 : i64, tpu.core_type = #tpu.core_type<tc>, window_params = [{transform_indices = @transform_0, window_bounds = array<i64: 128, 1>}, {transform_indices = @transform_1, window_bounds = array<i64: 128, 128>}, {pipeline_mode = #tpu.pipeline_mode<synchronous>, transform_indices = @transform_2, window_bounds = array<i64: 384, 128>}, {pipeline_mode = #tpu.pipeline_mode<synchronous>, transform_indices = @transform_3, window_bounds = array<i64: 128, 128>}, {pipeline_mode = #tpu.pipeline_mode<synchronous>, transform_indices = @transform_4, window_bounds = array<i64: 1, 128>}, {pipeline_mode = #tpu.pipeline_mode<synchronous>, transform_indices = @transform_5, window_bounds = array<i64: 128, 128>}, {pipeline_mode = #tpu.pipeline_mode<synchronous>, transform_indices = @transform_6, window_bounds = array<i64: 1, 128>}, {transform_indices = @transform_7, window_bounds = array<i64: 128, 128>}, {transform_indices = @transform_8, window_bounds = array<i64: 1, 8, 128>}]} {
    %c0_i32 = arith.constant 0 : i32
    %0 = arith.cmpi eq, %arg1, %c0_i32 : i32
    %1 = arith.extui %0 : i1 to i32
    %c0_i32_0 = arith.constant 0 : i32
    %2 = arith.cmpi ne, %1, %c0_i32_0 : i32
    scf.if %2 {
      %cst_8 = arith.constant 0.000000e+00 : f32
      %15 = vector.broadcast %cst_8 : f32 to vector<128x128xf32>
      %c0_9 = arith.constant 0 : index
      %c0_10 = arith.constant 0 : index
      %16 = vector.load %arg11[%c0_9, %c0_10] : memref<128x128xf32, #tpu.memory_space<vmem>>, vector<128x128xf32>
      tpu.vector_store %arg11[%c0_9, %c0_10], %15 {strides = array<i32>} : memref<128x128xf32, #tpu.memory_space<vmem>>, vector<128x128xf32>,
    } else {
    }
    %c128_i32 = arith.constant 128 : i32
    %3 = arith.muli %arg1, %c128_i32 : i32
    %4 = tpu.assume_multiple %3, 128 : i32
    %5 = arith.index_cast %4 : i32 to index
    %c0 = arith.constant 0 : index
    %6 = vector.load %arg4[%5, %c0] : memref<384x128xbf16, #tpu.memory_space<vmem>>, vector<128x128xbf16>
    %c0_1 = arith.constant 0 : index
    %c0_2 = arith.constant 0 : index
    %7 = vector.load %arg11[%c0_1, %c0_2] : memref<128x128xf32, #tpu.memory_space<vmem>>, vector<128x128xf32>
    %c0_3 = arith.constant 0 : index
    %c0_4 = arith.constant 0 : index
    %8 = vector.load %arg3[%c0_3, %c0_4] : memref<128x128xbf16, #tpu.memory_space<vmem>>, vector<128x128xbf16>
    %cst = arith.constant dense<0.000000e+00> : vector<128x128xf32>
    %9 = tpu.matmul %8, %6, %cst {dimension_numbers = #tpu.dot_dimension_numbers<[1], [0], [0], [1], [0, 0, 1, 1], [], []>} : vector<128x128xbf16>, vector<128x128xbf16>, vector<128x128xf32> -> vector<128x128xf32>
    %10 = arith.addf %7, %9 : vector<128x128xf32>
    %c0_5 = arith.constant 0 : index
    %c0_6 = arith.constant 0 : index
    %11 = vector.load %arg11[%c0_5, %c0_6] : memref<128x128xf32, #tpu.memory_space<vmem>>, vector<128x128xf32>
    tpu.vector_store %arg11[%c0_5, %c0_6], %10 {strides = array<i32>} : memref<128x128xf32, #tpu.memory_space<vmem>>, vector<128x128xf32>,
    %c2_i32 = arith.constant 2 : i32
    %12 = arith.cmpi eq, %arg1, %c2_i32 : i32
    %13 = arith.extui %12 : i1 to i32
    %c0_i32_7 = arith.constant 0 : i32
    %14 = arith.cmpi ne, %13, %c0_i32_7 : i32
    scf.if %14 {
      %c0_8 = arith.constant 0 : index
      %c0_9 = arith.constant 0 : index
      %15 = vector.load %arg11[%c0_8, %c0_9] : memref<128x128xf32, #tpu.memory_space<vmem>>, vector<128x128xf32>
      %16 = arith.truncf %15 : vector<128x128xf32> to vector<128x128xbf16>
      %c0_10 = arith.constant 0 : index
      %c0_11 = arith.constant 0 : index
      %17 = vector.load %arg5[%c0_10, %c0_11] : memref<128x128xbf16, #tpu.memory_space<vmem>>, vector<128x128xbf16>
      %cst_12 = arith.constant dense<0.000000e+00> : vector<128x128xf32>
      %18 = tpu.matmul %16, %17, %cst_12 {dimension_numbers = #tpu.dot_dimension_numbers<[1], [0], [0], [1], [0, 0, 1, 1], [], []>} : vector<128x128xbf16>, vector<128x128xbf16>, vector<128x128xf32> -> vector<128x128xf32>
      %c0_13 = arith.constant 0 : index
      %c0_14 = arith.constant 0 : index
      %19 = vector.load %arg6[%c0_13, %c0_14] : memref<1x128xf32, #tpu.memory_space<vmem>>, vector<1x128xf32>
      %20 = vector.broadcast %19 : vector<1x128xf32> to vector<128x128xf32>
      %21 = arith.addf %18, %20 : vector<128x128xf32>
      %22 = arith.truncf %21 : vector<128x128xf32> to vector<128x128xbf16>
      %c0_15 = arith.constant 0 : index
      %c0_16 = arith.constant 0 : index
      %23 = vector.load %arg7[%c0_15, %c0_16] : memref<128x128xbf16, #tpu.memory_space<vmem>>, vector<128x128xbf16>
      %cst_17 = arith.constant dense<0.000000e+00> : vector<128x128xf32>
      %24 = tpu.matmul %22, %23, %cst_17 {dimension_numbers = #tpu.dot_dimension_numbers<[1], [0], [0], [1], [0, 0, 1, 1], [], []>} : vector<128x128xbf16>, vector<128x128xbf16>, vector<128x128xf32> -> vector<128x128xf32>
      %c0_18 = arith.constant 0 : index
      %c0_19 = arith.constant 0 : index
      %25 = vector.load %arg8[%c0_18, %c0_19] : memref<1x128xf32, #tpu.memory_space<vmem>>, vector<1x128xf32>
      %26 = vector.broadcast %25 : vector<1x128xf32> to vector<128x128xf32>
      %27 = arith.addf %24, %26 : vector<128x128xf32>
      %c0_20 = arith.constant 0 : index
      %c0_21 = arith.constant 0 : index
      %28 = vector.load %arg9[%c0_20, %c0_21] : memref<128x128xf32, #tpu.memory_space<vmem>>, vector<128x128xf32>
      tpu.vector_store %arg9[%c0_20, %c0_21], %27 {strides = array<i32>} : memref<128x128xf32, #tpu.memory_space<vmem>>, vector<128x128xf32>,
      %c0_22 = arith.constant 0 : index
      %c0_23 = arith.constant 0 : index
      %29 = vector.load %arg2[%c0_22, %c0_23] : memref<128x1xi32, #tpu.memory_space<vmem>>, vector<128x1xi32>
      %30 = vector.shape_cast %29 : vector<128x1xi32> to vector<128x1xi32>
      %31 = vector.broadcast %30 : vector<128x1xi32> to vector<128x128xi32>
      %c0_i32_24 = arith.constant 0 : i32
      %32 = vector.broadcast %c0_i32_24 : i32 to vector<128x128xi32>
      %33 = arith.cmpi eq, %31, %32 : vector<128x128xi32>
      %cst_25 = arith.constant -3.000000e+38 : f32
      %34 = vector.broadcast %cst_25 : f32 to vector<128x128xf32>
      %35 = arith.select %33, %21, %34 : vector<128x128xi1>, vector<128x128xf32>
      %cst_26 = arith.constant dense<0xFF800000> : vector<128xf32>
      %36 = vector.multi_reduction <maximumf>, %35, %cst_26 [0] : vector<128x128xf32> to vector<128xf32>
      %37 = vector.shape_cast %36 : vector<128xf32> to vector<1x128xf32>
      %c1_i32 = arith.constant 1 : i32
      %38 = vector.broadcast %c1_i32 : i32 to vector<128x128xi32>
      %39 = arith.cmpi eq, %31, %38 : vector<128x128xi32>
      %cst_27 = arith.constant -3.000000e+38 : f32
      %40 = vector.broadcast %cst_27 : f32 to vector<128x128xf32>
      %41 = arith.select %39, %21, %40 : vector<128x128xi1>, vector<128x128xf32>
      %cst_28 = arith.constant dense<0xFF800000> : vector<128xf32>
      %42 = vector.multi_reduction <maximumf>, %41, %cst_28 [0] : vector<128x128xf32> to vector<128xf32>
      %43 = vector.shape_cast %42 : vector<128xf32> to vector<1x128xf32>
      %c2_i32_29 = arith.constant 2 : i32
      %44 = vector.broadcast %c2_i32_29 : i32 to vector<128x128xi32>
      %45 = arith.cmpi eq, %31, %44 : vector<128x128xi32>
      %cst_30 = arith.constant -3.000000e+38 : f32
      %46 = vector.broadcast %cst_30 : f32 to vector<128x128xf32>
      %47 = arith.select %45, %21, %46 : vector<128x128xi1>, vector<128x128xf32>
      %cst_31 = arith.constant dense<0xFF800000> : vector<128xf32>
      %48 = vector.multi_reduction <maximumf>, %47, %cst_31 [0] : vector<128x128xf32> to vector<128xf32>
      %49 = vector.shape_cast %48 : vector<128xf32> to vector<1x128xf32>
      %c3_i32 = arith.constant 3 : i32
      %50 = vector.broadcast %c3_i32 : i32 to vector<128x128xi32>
      %51 = arith.cmpi eq, %31, %50 : vector<128x128xi32>
      %cst_32 = arith.constant -3.000000e+38 : f32
      %52 = vector.broadcast %cst_32 : f32 to vector<128x128xf32>
      %53 = arith.select %51, %21, %52 : vector<128x128xi1>, vector<128x128xf32>
      %cst_33 = arith.constant dense<0xFF800000> : vector<128xf32>
      %54 = vector.multi_reduction <maximumf>, %53, %cst_33 [0] : vector<128x128xf32> to vector<128xf32>
      %55 = vector.shape_cast %54 : vector<128xf32> to vector<1x128xf32>
      %c4_i32 = arith.constant 4 : i32
      %56 = vector.broadcast %c4_i32 : i32 to vector<128x128xi32>
      %57 = arith.cmpi eq, %31, %56 : vector<128x128xi32>
      %cst_34 = arith.constant -3.000000e+38 : f32
      %58 = vector.broadcast %cst_34 : f32 to vector<128x128xf32>
      %59 = arith.select %57, %21, %58 : vector<128x128xi1>, vector<128x128xf32>
      %cst_35 = arith.constant dense<0xFF800000> : vector<128xf32>
      %60 = vector.multi_reduction <maximumf>, %59, %cst_35 [0] : vector<128x128xf32> to vector<128xf32>
      %61 = vector.shape_cast %60 : vector<128xf32> to vector<1x128xf32>
      %c5_i32 = arith.constant 5 : i32
      %62 = vector.broadcast %c5_i32 : i32 to vector<128x128xi32>
      %63 = arith.cmpi eq, %31, %62 : vector<128x128xi32>
      %cst_36 = arith.constant -3.000000e+38 : f32
      %64 = vector.broadcast %cst_36 : f32 to vector<128x128xf32>
      %65 = arith.select %63, %21, %64 : vector<128x128xi1>, vector<128x128xf32>
      %cst_37 = arith.constant dense<0xFF800000> : vector<128xf32>
      %66 = vector.multi_reduction <maximumf>, %65, %cst_37 [0] : vector<128x128xf32> to vector<128xf32>
      %67 = vector.shape_cast %66 : vector<128xf32> to vector<1x128xf32>
      %c6_i32 = arith.constant 6 : i32
      %68 = vector.broadcast %c6_i32 : i32 to vector<128x128xi32>
      %69 = arith.cmpi eq, %31, %68 : vector<128x128xi32>
      %cst_38 = arith.constant -3.000000e+38 : f32
      %70 = vector.broadcast %cst_38 : f32 to vector<128x128xf32>
      %71 = arith.select %69, %21, %70 : vector<128x128xi1>, vector<128x128xf32>
      %cst_39 = arith.constant dense<0xFF800000> : vector<128xf32>
      %72 = vector.multi_reduction <maximumf>, %71, %cst_39 [0] : vector<128x128xf32> to vector<128xf32>
      %73 = vector.shape_cast %72 : vector<128xf32> to vector<1x128xf32>
      %c7_i32 = arith.constant 7 : i32
      %74 = vector.broadcast %c7_i32 : i32 to vector<128x128xi32>
      %75 = arith.cmpi eq, %31, %74 : vector<128x128xi32>
      %cst_40 = arith.constant -3.000000e+38 : f32
      %76 = vector.broadcast %cst_40 : f32 to vector<128x128xf32>
      %77 = arith.select %75, %21, %76 : vector<128x128xi1>, vector<128x128xf32>
      %cst_41 = arith.constant dense<0xFF800000> : vector<128xf32>
      %78 = vector.multi_reduction <maximumf>, %77, %cst_41 [0] : vector<128x128xf32> to vector<128xf32>
      %79 = vector.shape_cast %78 : vector<128xf32> to vector<1x128xf32>
      %80 = tpu.concatenate %37, %43, %49, %55, %61, %67, %73, %79 in 0 : vector<1x128xf32>, vector<1x128xf32>, vector<1x128xf32>, vector<1x128xf32>, vector<1x128xf32>, vector<1x128xf32>, vector<1x128xf32>, vector<1x128xf32> -> vector<8x128xf32>
      %c0_42 = arith.constant 0 : index
      %c0_43 = arith.constant 0 : index
      %c0_44 = arith.constant 0 : index
      %81 = vector.load %arg10[%c0_42, %c0_43, %c0_44] : memref<1x8x128xf32, #tpu.memory_space<vmem>>, vector<1x8x128xf32>
      %82 = vector.shape_cast %81 : vector<1x8x128xf32> to vector<8x128xf32>
      %83 = vector.shape_cast %80 : vector<8x128xf32> to vector<1x8x128xf32>
      tpu.vector_store %arg10[%c0_42, %c0_43, %c0_44], %83 {strides = array<i32>} : memref<1x8x128xf32, #tpu.memory_space<vmem>>, vector<1x8x128xf32>,
    } else {
    }
    return
  }
  func.func @transform_0(%arg0: i32, %arg1: i32) -> (i32, i32) {
    %c0_i32 = arith.constant 0 : i32
    %c0_i32_0 = arith.constant 0 : i32
    return %arg0, %c0_i32 : i32, i32
  }
  func.func @transform_1(%arg0: i32, %arg1: i32) -> (i32, i32) {
    %c0_i32 = arith.constant 0 : i32
    return %arg0, %arg1 : i32, i32
  }
  func.func @transform_2(%arg0: i32, %arg1: i32) -> (i32, i32) {
    %c0_i32 = arith.constant 0 : i32
    %c0_i32_0 = arith.constant 0 : i32
    %c0_i32_1 = arith.constant 0 : i32
    return %c0_i32, %c0_i32_0 : i32, i32
  }
  func.func @transform_3(%arg0: i32, %arg1: i32) -> (i32, i32) {
    %c0_i32 = arith.constant 0 : i32
    %c0_i32_0 = arith.constant 0 : i32
    %c0_i32_1 = arith.constant 0 : i32
    return %c0_i32, %c0_i32_0 : i32, i32
  }
  func.func @transform_4(%arg0: i32, %arg1: i32) -> (i32, i32) {
    %c0_i32 = arith.constant 0 : i32
    %c0_i32_0 = arith.constant 0 : i32
    %c0_i32_1 = arith.constant 0 : i32
    return %c0_i32, %c0_i32_0 : i32, i32
  }
  func.func @transform_5(%arg0: i32, %arg1: i32) -> (i32, i32) {
    %c0_i32 = arith.constant 0 : i32
    %c0_i32_0 = arith.constant 0 : i32
    %c0_i32_1 = arith.constant 0 : i32
    return %c0_i32, %c0_i32_0 : i32, i32
  }
  func.func @transform_6(%arg0: i32, %arg1: i32) -> (i32, i32) {
    %c0_i32 = arith.constant 0 : i32
    %c0_i32_0 = arith.constant 0 : i32
    %c0_i32_1 = arith.constant 0 : i32
    return %c0_i32, %c0_i32_0 : i32, i32
  }
  func.func @transform_7(%arg0: i32, %arg1: i32) -> (i32, i32) {
    %c0_i32 = arith.constant 0 : i32
    %c0_i32_0 = arith.constant 0 : i32
    return %arg0, %c0_i32 : i32, i32
  }
  func.func @transform_8(%arg0: i32, %arg1: i32) -> (i32, i32, i32) {
    %c0_i32 = arith.constant 0 : i32
    %c0_i32_0 = arith.constant 0 : i32
    %c0_i32_1 = arith.constant 0 : i32
    return %arg0, %c0_i32, %c0_i32_0 : i32, i32, i32
  }
}

</mosaic_0001>

<llo_original>
// kernel: gnn_forward.2
$region0: #{gnn_forward.2}
  #allocation0 [shape = 'u32[]', space=smem, size = 0x4, offset = 0x4, fixed_abs, tag = 'smem constant byte address 0x4 - core index']
  #allocation1 [shape = 'u32[144,128]{1,0:T(1,128)}', space=vmem, size = 0x12000, scoped, tag = 'internal scratch']
  #allocation2 [shape = 'f32[128,128]{1,0:T(8,128)}', space=vmem, size = 0x10000, scoped, tag = 'scratch operand']
  %s0 = inlined_call_operand.vmem [shape: bf16[384,384], index: 0, kind: input, shape index: {}]
  %s1 = inlined_call_operand.vmem [shape: bf16[384,128], index: 1, kind: input, shape index: {}]
  %s2 = inlined_call_operand.vmem [shape: bf16[128,128], index: 2, kind: input, shape index: {}]
  %s3 = inlined_call_operand.vmem [shape: f32[1,128], index: 3, kind: input, shape index: {}]
  %s4 = inlined_call_operand.vmem [shape: bf16[384,128], index: 4, kind: output, shape index: {}]
  %s5 = sld [smem:[#allocation0]]
  $region98: #{gnn_forward.2} parent=0
    _
  %s7 = ssub.s32 1, %s5
  %s8 = scalar_select 0, %s7, %s5
  $region1: #{gnn_forward.2} parent=0
    #allocation3 [shape = 'u8[65536]{0}', space=vmem, size = 0x10000, scoped, tag = 'input window, operand 0']
    loop: start=0, step=1, limit=11
    $region2: #{gnn_forward.2} parent=1 // loop_pre_header
      _
    $region3: #{gnn_forward.2} parent=1 // loop_header
      %s10 = sphi 0, %s14
      %p11 = scmp.ge.s32.totalorder %s10, 11
      %s17 = sphi 0, %s29
      %s18 = sphi 0, %s25
      %s19 = sphi 0, %s17
      %s20 = sphi 0, %s18
      %s21 = sphi 0, %s19
      %s22 = sphi 0, %s20
      %s34 = sphi 0, %s36
      %s37 = sphi 0, %s34
      %s38 = sphi 0, %s37
      %s54 = sphi 0, %s38
      %s58 = sphi 0, %s58
      %s60 = sphi 0, %s58
      %s61 = sphi 0, %s60
      %s75 = sphi 0, %s61
      %s79 = sphi 0, %s79
      %s81 = sphi 0, %s79
      %s82 = sphi 0, %s81
      %s96 = sphi 0, %s82
      %s100 = sphi 0, %s100
      %s102 = sphi 0, %s100
      %s103 = sphi 0, %s102
      %s117 = sphi 0, %s103
      %s123 = sphi 0, %s125
      %s126 = sphi 0, %s123
      %s127 = sphi 0, %s126
      %s143 = sphi 0, %s127
    $region4: #{gnn_forward.2} parent=1 // loop_header_branch
      %13 = sbr.rel (%p11) target = $region8
    $region5: #{gnn_forward.2} parent=1 // loop_body
      %s15 = ssub.s32 %s10, 1
      %s16 = ssub.s32 %s10, 2
      %s23 = sadd.s32 1, %s18
      %p24 = scmp.ge.s32.totalorder %s23, 3
      %s25 = scalar_select %p24, 0, %s23
      %s26 = sadd.s32 1, %s17
      %s27 = scalar_select %p24, %s26, %s17
      %p28 = scmp.ge.s32.totalorder %s27, 3
      %s29 = scalar_select %p28, 0, %s27
      %s30 = ssub.s32 %s17, %s29
      %s31 = ssub.s32 %s18, %s25
      %s32 = sor.u32 %s30, %s31
      %p33 = scmp.eq.s32.totalorder %s32, 0
      %s35 = sadd.s32 %s34, 1
      %s36 = scalar_select %p33, %s34, %s35
      %p39 = pneg %p33
      %p40 = scmp.eq.s32.totalorder %s10, 8
      %p41 = por %p39, %p40
      %p42 = scmp.ne.s32.totalorder %s34, %s37
      %p43 = scmp.eq.s32.totalorder %s10, 0
      %p44 = por %p42, %p43
      %p45 = scmp.ne.s32.totalorder %s34, %s37
      %p46 = scmp.eq.s32.totalorder %s15, 8
      %p47 = por %p45, %p46
      %p48 = scmp.ne.s32.totalorder %s37, %s38
      %p49 = scmp.eq.s32.totalorder %s15, 0
      %p50 = por %p48, %p49
      %p51 = scmp.ne.s32.totalorder %s37, %s38
      %p52 = scmp.eq.s32.totalorder %s16, 8
      %p53 = por %p51, %p52
      %p55 = scmp.ne.s32.totalorder %s38, %s54
      %p56 = scmp.eq.s32.totalorder %s16, 0
      %p57 = por %p55, %p56
      %s59 = sadd.s32 %s58, 1
      %p62 = scmp.eq.s32.totalorder %s10, 8
      %p63 = scmp.ne.s32.totalorder %s58, %s60
      %p64 = scmp.eq.s32.totalorder %s10, 0
      %p65 = por %p63, %p64
      %p66 = scmp.ne.s32.totalorder %s58, %s60
      %p67 = scmp.eq.s32.totalorder %s15, 8
      %p68 = por %p66, %p67
      %p69 = scmp.ne.s32.totalorder %s60, %s61
      %p70 = scmp.eq.s32.totalorder %s15, 0
      %p71 = por %p69, %p70
      %p72 = scmp.ne.s32.totalorder %s60, %s61
      %p73 = scmp.eq.s32.totalorder %s16, 8
      %p74 = por %p72, %p73
      %p76 = scmp.ne.s32.totalorder %s61, %s75
      %p77 = scmp.eq.s32.totalorder %s16, 0
      %p78 = por %p76, %p77
      %s80 = sadd.s32 %s79, 1
      %p83 = scmp.eq.s32.totalorder %s10, 8
      %p84 = scmp.ne.s32.totalorder %s79, %s81
      %p85 = scmp.eq.s32.totalorder %s10, 0
      %p86 = por %p84, %p85
      %p87 = scmp.ne.s32.totalorder %s79, %s81
      %p88 = scmp.eq.s32.totalorder %s15, 8
      %p89 = por %p87, %p88
      %p90 = scmp.ne.s32.totalorder %s81, %s82
      %p91 = scmp.eq.s32.totalorder %s15, 0
      %p92 = por %p90, %p91
      %p93 = scmp.ne.s32.totalorder %s81, %s82
      %p94 = scmp.eq.s32.totalorder %s16, 8
      %p95 = por %p93, %p94
      %p97 = scmp.ne.s32.totalorder %s82, %s96
      %p98 = scmp.eq.s32.totalorder %s16, 0
      %p99 = por %p97, %p98
      %s101 = sadd.s32 %s100, 1
      %p104 = scmp.eq.s32.totalorder %s10, 8
      %p105 = scmp.ne.s32.totalorder %s100, %s102
      %p106 = scmp.eq.s32.totalorder %s10, 0
      %p107 = por %p105, %p106
      %p108 = scmp.ne.s32.totalorder %s100, %s102
      %p109 = scmp.eq.s32.totalorder %s15, 8
      %p110 = por %p108, %p109
      %p111 = scmp.ne.s32.totalorder %s102, %s103
      %p112 = scmp.eq.s32.totalorder %s15, 0
      %p113 = por %p111, %p112
      %p114 = scmp.ne.s32.totalorder %s102, %s103
      %p115 = scmp.eq.s32.totalorder %s16, 8
      %p116 = por %p114, %p115
      %p118 = scmp.ne.s32.totalorder %s103, %s117
      %p119 = scmp.eq.s32.totalorder %s16, 0
      %p120 = por %p118, %p119
      %s121 = ssub.s32 %s17, %s29
      %p122 = scmp.eq.s32.totalorder %s121, 0
      %s124 = sadd.s32 %s123, 1
      %s125 = scalar_select %p122, %s123, %s124
      %p128 = pneg %p122
      %p129 = scmp.eq.s32.totalorder %s10, 8
      %p130 = por %p128, %p129
      %p131 = scmp.ne.s32.totalorder %s123, %s126
      %p132 = scmp.eq.s32.totalorder %s10, 0
      %p133 = por %p131, %p132
      %p134 = scmp.ne.s32.totalorder %s123, %s126
      %p135 = scmp.eq.s32.totalorder %s15, 8
      %p136 = por %p134, %p135
      %p137 = scmp.ne.s32.totalorder %s126, %s127
      %p138 = scmp.eq.s32.totalorder %s15, 0
      %p139 = por %p137, %p138
      %p140 = scmp.ne.s32.totalorder %s126, %s127
      %p141 = scmp.eq.s32.totalorder %s16, 8
      %p142 = por %p140, %p141
      %p144 = scmp.ne.s32.totalorder %s127, %s143
      %p145 = scmp.eq.s32.totalorder %s16, 0
      %p146 = por %p144, %p145
      %p147 = scmp.le.s32.totalorder 1, %s10
      %p148 = scmp.lt.s32.totalorder %s10, 10
      %p149 = pnand %p147, %p148
      %p150 = pneg %p149
      // Predicated region
      $region9: #{gnn_forward.2} parent=5 // pred_check
        _
      $region10: #{gnn_forward.2} parent=5 // pred_check_branch
        %152 = sbr.rel (%p149) target = $region12
      $region11: #{gnn_forward.2} parent=5 // pred_region
        %s153 = ssub.s32 %s10, 1
        // Predicated region
        $region13: #{gnn_forward.2} parent=11 // pred_check
          %p154 = pneg %p71
        $region14: #{gnn_forward.2} parent=11 // pred_check_branch
          %156 = sbr.rel (%p154) target = $region16
        $region15: #{gnn_forward.2} parent=11 // pred_region
          _
        $region16: #{gnn_forward.2} parent=11 // pred_fallthru
          _
        // Predicated region
        $region17: #{gnn_forward.2} parent=11 // pred_check
          %p157 = pneg %p92
        $region18: #{gnn_forward.2} parent=11 // pred_check_branch
          %159 = sbr.rel (%p157) target = $region20
        $region19: #{gnn_forward.2} parent=11 // pred_region
          _
        $region20: #{gnn_forward.2} parent=11 // pred_fallthru
          _
        // Predicated region
        $region21: #{gnn_forward.2} parent=11 // pred_check
          %p160 = pneg %p113
        $region22: #{gnn_forward.2} parent=11 // pred_check_branch
          %162 = sbr.rel (%p160) target = $region24
        $region23: #{gnn_forward.2} parent=11 // pred_region
          _
        $region24: #{gnn_forward.2} parent=11 // pred_fallthru
          _
      $region12: #{gnn_forward.2} parent=5 // pred_fallthru
        _
      %p163 = scmp.lt.s32.totalorder %s10, 9
      // Predicated region
      $region25: #{gnn_forward.2} parent=5 // pred_check
        %p164 = pneg %p163
      $region26: #{gnn_forward.2} parent=5 // pred_check_branch
        %166 = sbr.rel (%p164) target = $region28
      $region27: #{gnn_forward.2} parent=5 // pred_region
        // Predicated region
        $region29: #{gnn_forward.2} parent=27 // pred_check
          %p167 = pneg %p44
        $region30: #{gnn_forward.2} parent=27 // pred_check_branch
          %169 = sbr.rel (%p167) target = $region32
        $region31: #{gnn_forward.2} parent=27 // pred_region
          %s170 = sand.u32 %s34, 1
          %s171 = sand.u32 %s34, 1
          %s172 = smul.addr %s171, 64
          %s173 = scalar_lea.vmem [#allocation3], %s172
          %s174 = smul.u32 16, %s17
          %s175 = smul.addr %s174, 3
          %s176 = sadd.s32 %s18, %s175
          %s177 = smul.addr %s176, 4
          %s178 = scalar_lea.vmem %s0, %s177
          // Predicated region
          $region33: #{gnn_forward.2} parent=31 // pred_check
            _
          $region34: #{gnn_forward.2} parent=31 // pred_check_branch
            %180 = sbr.rel (0) target = $region36
          $region35: #{gnn_forward.2} parent=31 // pred_region
            // Predicated region
            $region37: #{gnn_forward.2} parent=35 // pred_check
              _
            $region38: #{gnn_forward.2} parent=35 // pred_check_branch
              %182 = sbr.rel target = $region40
            $region39: #{gnn_forward.2} parent=35 // pred_region
              // Predicated region
              $region52: #{gnn_forward.2} parent=39 // pred_check
                _
              $region53: #{gnn_forward.2} parent=39 // pred_check_branch
                %228 = sbr.rel (0) target = $region55
              $region54: #{gnn_forward.2} parent=39 // pred_region
                loop: start=0, step=1, limit=1
                $region56: #{gnn_forward.2} parent=54 // loop_pre_header
                  _
                $region57: #{gnn_forward.2} parent=54 // loop_header
                  %s230 = sphi 0, %s234
                  %p231 = scmp.ge.s32.totalorder %s230, 1
                  %s235 = sphi %s178, %s178
                  %s236 = sphi %s173, %s173
                $region58: #{gnn_forward.2} parent=54 // loop_header_branch
                  %233 = sbr.rel (%p231) target = $region62
                $region59: #{gnn_forward.2} parent=54 // loop_body
                  _
                $region60: #{gnn_forward.2} parent=54 // loop_footer
                  %s234 = sadd.s32 1, %s230
                $region61: #{gnn_forward.2} parent=54 // loop_footer_branch
                  %229 = sbr.rel target = $region57
                $region62: #{gnn_forward.2} parent=54 // loop_exit
                  _
                %s238 = ssub.s32 16, 1
                loop: start=0, step=1, limit=1
                $region63: #{gnn_forward.2} parent=54 // loop_pre_header
                  _
                $region64: #{gnn_forward.2} parent=54 // loop_header
                  %s240 = sphi 0, %s244
                  %p241 = scmp.ge.s32.totalorder %s240, 1
                  %s245 = sphi %s178, %s178
                  %s246 = sphi %s173, %s173
                $region65: #{gnn_forward.2} parent=54 // loop_header_branch
                  %243 = sbr.rel (%p241) target = $region69
                $region66: #{gnn_forward.2} parent=54 // loop_body
                  %v247 = vld [vmem:[%s245] sm:%s238]
                  %248 = vst [vmem:[%s246] sm:%s238] %v247
                  %v249 = vld [vmem:[%s245 + $0xc] sm:%s238]
                  %250 = vst [vmem:[%s246 + $0x4] sm:%s238] %v249
                  %v251 = vld [vmem:[%s245 + $0x18] sm:%s238]
                  %252 = vst [vmem:[%s246 + $0x8] sm:%s238] %v251
                  %v253 = vld [vmem:[%s245 + $0x24] sm:%s238]
                  %254 = vst [vmem:[%s246 + $0xc] sm:%s238] %v253
                  %v255 = vld [vmem:[%s245 + $0x30] sm:%s238]
                  %256 = vst [vmem:[%s246 + $0x10] sm:%s238] %v255
                  %v257 = vld [vmem:[%s245 + $0x3c] sm:%s238]
                  %258 = vst [vmem:[%s246 + $0x14] sm:%s238] %v257
                  %v259 = vld [vmem:[%s245 + $0x48] sm:%s238]
                  %260 = vst [vmem:[%s246 + $0x18] sm:%s238] %v259
                  %v261 = vld [vmem:[%s245 + $0x54] sm:%s238]
                  %262 = vst [vmem:[%s246 + $0x1c] sm:%s238] %v261
                  %v263 = vld [vmem:[%s245 + $0x60] sm:%s238]
                  %264 = vst [vmem:[%s246 + $0x20] sm:%s238] %v263
                  %v265 = vld [vmem:[%s245 + $0x6c] sm:%s238]
                  %266 = vst [vmem:[%s246 + $0x24] sm:%s238] %v265
                  %v267 = vld [vmem:[%s245 + $0x78] sm:%s238]
                  %268 = vst [vmem:[%s246 + $0x28] sm:%s238] %v267
                  %v269 = vld [vmem:[%s245 + $0x84] sm:%s238]
                  %270 = vst [vmem:[%s246 + $0x2c] sm:%s238] %v269
                  %v271 = vld [vmem:[%s245 + $0x90] sm:%s238]
                  %272 = vst [vmem:[%s246 + $0x30] sm:%s238] %v271
                  %v273 = vld [vmem:[%s245 + $0x9c] sm:%s238]
                  %274 = vst [vmem:[%s246 + $0x34] sm:%s238] %v273
                  %v275 = vld [vmem:[%s245 + $0xa8] sm:%s238]
                  %276 = vst [vmem:[%s246 + $0x38] sm:%s238] %v275
                  %v277 = vld [vmem:[%s245 + $0xb4] sm:%s238]
                  %278 = vst [vmem:[%s246 + $0x3c] sm:%s238] %v277
                $region67: #{gnn_forward.2} parent=54 // loop_footer
                  %s244 = sadd.s32 1, %s240
                $region68: #{gnn_forward.2} parent=54 // loop_footer_branch
                  %239 = sbr.rel target = $region64
                $region69: #{gnn_forward.2} parent=54 // loop_exit
                  _
              $region55: #{gnn_forward.2} parent=39 // pred_fallthru
                _
            $region40: #{gnn_forward.2} parent=35 // pred_fallthru
              _
            // Predicated region
            $region41: #{gnn_forward.2} parent=35 // pred_check
              _
            $region42: #{gnn_forward.2} parent=35 // pred_check_branch
              %184 = sbr.rel (0) target = $region44
            $region43: #{gnn_forward.2} parent=35 // pred_region
              %s186 = ssub.s32 16, 1
              loop: start=0, step=1, limit=1
              $region45: #{gnn_forward.2} parent=43 // loop_pre_header
                _
              $region46: #{gnn_forward.2} parent=43 // loop_header
                %s188 = sphi 0, %s192
                %p189 = scmp.ge.s32.totalorder %s188, 1
                %s193 = sphi %s178, %s178
                %s194 = sphi %s173, %s173
              $region47: #{gnn_forward.2} parent=43 // loop_header_branch
                %191 = sbr.rel (%p189) target = $region51
              $region48: #{gnn_forward.2} parent=43 // loop_body
                %v195 = vld [vmem:[%s193] sm:%s186]
                %196 = vst [vmem:[%s194] sm:%s186] %v195
                %v197 = vld [vmem:[%s193 + $0xc] sm:%s186]
                %198 = vst [vmem:[%s194 + $0x4] sm:%s186] %v197
                %v199 = vld [vmem:[%s193 + $0x18] sm:%s186]
                %200 = vst [vmem:[%s194 + $0x8] sm:%s186] %v199
                %v201 = vld [vmem:[%s193 + $0x24] sm:%s186]
                %202 = vst [vmem:[%s194 + $0xc] sm:%s186] %v201
                %v203 = vld [vmem:[%s193 + $0x30] sm:%s186]
                %204 = vst [vmem:[%s194 + $0x10] sm:%s186] %v203
                %v205 = vld [vmem:[%s193 + $0x3c] sm:%s186]
                %206 = vst [vmem:[%s194 + $0x14] sm:%s186] %v205
                %v207 = vld [vmem:[%s193 + $0x48] sm:%s186]
                %208 = vst [vmem:[%s194 + $0x18] sm:%s186] %v207
                %v209 = vld [vmem:[%s193 + $0x54] sm:%s186]
                %210 = vst [vmem:[%s194 + $0x1c] sm:%s186] %v209
                %v211 = vld [vmem:[%s193 + $0x60] sm:%s186]
                %212 = vst [vmem:[%s194 + $0x20] sm:%s186] %v211
                %v213 = vld [vmem:[%s193 + $0x6c] sm:%s186]
                %214 = vst [vmem:[%s194 + $0x24] sm:%s186] %v213
                %v215 = vld [vmem:[%s193 + $0x78] sm:%s186]
                %216 = vst [vmem:[%s194 + $0x28] sm:%s186] %v215
                %v217 = vld [vmem:[%s193 + $0x84] sm:%s186]
                %218 = vst [vmem:[%s194 + $0x2c] sm:%s186] %v217
                %v219 = vld [vmem:[%s193 + $0x90] sm:%s186]
                %220 = vst [vmem:[%s194 + $0x30] sm:%s186] %v219
                %v221 = vld [vmem:[%s193 + $0x9c] sm:%s186]
                %222 = vst [vmem:[%s194 + $0x34] sm:%s186] %v221
                %v223 = vld [vmem:[%s193 + $0xa8] sm:%s186]
                %224 = vst [vmem:[%s194 + $0x38] sm:%s186] %v223
                %v225 = vld [vmem:[%s193 + $0xb4] sm:%s186]
                %226 = vst [vmem:[%s194 + $0x3c] sm:%s186] %v225
              $region49: #{gnn_forward.2} parent=43 // loop_footer
                %s192 = sadd.s32 1, %s188
              $region50: #{gnn_forward.2} parent=43 // loop_footer_branch
                %187 = sbr.rel target = $region46
              $region51: #{gnn_forward.2} parent=43 // loop_exit
                _
            $region44: #{gnn_forward.2} parent=35 // pred_fallthru
              _
          $region36: #{gnn_forward.2} parent=31 // pred_fallthru
            _
          %279 = vnop
        $region32: #{gnn_forward.2} parent=27 // pred_fallthru
          _
      $region28: #{gnn_forward.2} parent=5 // pred_fallthru
        _
      %p280 = scmp.le.s32.totalorder 1, %s10
      %p281 = scmp.lt.s32.totalorder %s10, 10
      %p282 = pnand %p280, %p281
      %p283 = pneg %p282
      // Predicated region
      $region70: #{gnn_forward.2} parent=5 // pred_check
        _
      $region71: #{gnn_forward.2} parent=5 // pred_check_branch
        %285 = sbr.rel (%p282) target = $region73
      $region72: #{gnn_forward.2} parent=5 // pred_region
        %s286 = ssub.s32 %s10, 1
        %s287 = sand.u32 %s37, 1
        %s288 = sand.u32 %s37, 1
        %s289 = smul.addr %s288, 64
        %s290 = scalar_lea.vmem [#allocation3], %s289
        // Predicated region
        $region74: #{gnn_forward.2} parent=72 // pred_check
          %p291 = pneg %p50
        $region75: #{gnn_forward.2} parent=72 // pred_check_branch
          %293 = sbr.rel (%p291) target = $region77
        $region76: #{gnn_forward.2} parent=72 // pred_region
          _
        $region77: #{gnn_forward.2} parent=72 // pred_fallthru
          _
        %s294 = sand.u32 %s37, 1
        %s295 = sand.u32 %s37, 1
        %s296 = smul.addr %s295, 64
        %s297 = scalar_lea.vmem [#allocation3], %s296
        %p298 = pneg %p50
        %p299 = pneg %p47
        %p300 = pneg %p71
        %p301 = pneg %p68
        %p302 = pneg %p92
        %p303 = pneg %p89
        %p304 = pneg %p113
        %p305 = pneg %p110
        %p306 = pneg %p139
        %p307 = pneg %p136
        %s308 = smul.u32 16, %s19
        %p309 = scmp.lt.s32.totalorder %s308, 47
        %s310 = scalar_select %p309, %s308, 47
        %s311 = smul.addr %s310, 4
        %s312 = scalar_lea.vmem %s4, %s311
        %s313 = smul.u32 16, %s19
        %s314 = smul.u32 16, %s19
        %p315 = scmp.lt.s32.totalorder %s314, 47
        %s316 = scalar_select %p315, %s314, 47
        %s317 = smul.addr %s316, 4
        %s318 = scalar_lea.vmem %s4, %s317
        %s319 = smul.u32 16, %s19
        %p321 = scmp.eq.s32.totalorder %s20, 0
        // Predicated region
        $region78: #{gnn_forward.2} parent=72 // pred_check
          %p322 = pneg %p321
        $region79: #{gnn_forward.2} parent=72 // pred_check_branch
          %324 = sbr.rel (%p322) target = $region81
        $region80: #{gnn_forward.2} parent=72 // pred_region
          %325 = vst [vmem:[#allocation2] sm:$0xff] 0.0
          %326 = vst [vmem:[#allocation2 + $0x8] sm:$0xff] 0.0
          %327 = vst [vmem:[#allocation2 + $0x10] sm:$0xff] 0.0
          %328 = vst [vmem:[#allocation2 + $0x18] sm:$0xff] 0.0
          %329 = vst [vmem:[#allocation2 + $0x20] sm:$0xff] 0.0
          %330 = vst [vmem:[#allocation2 + $0x28] sm:$0xff] 0.0
          %331 = vst [vmem:[#allocation2 + $0x30] sm:$0xff] 0.0
          %332 = vst [vmem:[#allocation2 + $0x38] sm:$0xff] 0.0
          %333 = vst [vmem:[#allocation2 + $0x40] sm:$0xff] 0.0
          %334 = vst [vmem:[#allocation2 + $0x48] sm:$0xff] 0.0
          %335 = vst [vmem:[#allocation2 + $0x50] sm:$0xff] 0.0
          %336 = vst [vmem:[#allocation2 + $0x58] sm:$0xff] 0.0
          %337 = vst [vmem:[#allocation2 + $0x60] sm:$0xff] 0.0
          %338 = vst [vmem:[#allocation2 + $0x68] sm:$0xff] 0.0
          %339 = vst [vmem:[#allocation2 + $0x70] sm:$0xff] 0.0
          %340 = vst [vmem:[#allocation2 + $0x78] sm:$0xff] 0.0
        $region81: #{gnn_forward.2} parent=72 // pred_fallthru
          _
        %s341 = smul.u32 %s20, 128
        %s342 = sshra.s32 %s341, 3
        %s343 = sand.u32 %s341, 7
        %s344 = smul.addr %s342, 4
        %s345 = scalar_lea.vmem %s1, %s344
        %v346 = vld [vmem:[%s345] sm:$0xf]
        %v347 = vld [vmem:[%s345 + $0x4] sm:$0xf]
        %v348 = vld [vmem:[%s345 + $0x8] sm:$0xf]
        %v349 = vld [vmem:[%s345 + $0xc] sm:$0xf]
        %v350 = vld [vmem:[%s345 + $0x10] sm:$0xf]
        %v351 = vld [vmem:[%s345 + $0x14] sm:$0xf]
        %v352 = vld [vmem:[%s345 + $0x18] sm:$0xf]
        %v353 = vld [vmem:[%s345 + $0x1c] sm:$0xf]
        %v354 = vld [vmem:[%s345 + $0x20] sm:$0xf]
        %v355 = vld [vmem:[%s345 + $0x24] sm:$0xf]
        %v356 = vld [vmem:[%s345 + $0x28] sm:$0xf]
        %v357 = vld [vmem:[%s345 + $0x2c] sm:$0xf]
        %v358 = vld [vmem:[%s345 + $0x30] sm:$0xf]
        %v359 = vld [vmem:[%s345 + $0x34] sm:$0xf]
        %v360 = vld [vmem:[%s345 + $0x38] sm:$0xf]
        %v361 = vld [vmem:[%s345 + $0x3c] sm:$0xf]
        %v362 = vld [vmem:[#allocation2] sm:$0xff]
        %v363 = vld [vmem:[#allocation2 + $0x8] sm:$0xff]
        %v364 = vld [vmem:[#allocation2 + $0x10] sm:$0xff]
        %v365 = vld [vmem:[#allocation2 + $0x18] sm:$0xff]
        %v366 = vld [vmem:[#allocation2 + $0x20] sm:$0xff]
        %v367 = vld [vmem:[#allocation2 + $0x28] sm:$0xff]
        %v368 = vld [vmem:[#allocation2 + $0x30] sm:$0xff]
        %v369 = vld [vmem:[#allocation2 + $0x38] sm:$0xff]
        %v370 = vld [vmem:[#allocation2 + $0x40] sm:$0xff]
        %v371 = vld [vmem:[#allocation2 + $0x48] sm:$0xff]
        %v372 = vld [vmem:[#allocation2 + $0x50] sm:$0xff]
        %v373 = vld [vmem:[#allocation2 + $0x58] sm:$0xff]
        %v374 = vld [vmem:[#allocation2 + $0x60] sm:$0xff]
        %v375 = vld [vmem:[#allocation2 + $0x68] sm:$0xff]
        %v376 = vld [vmem:[#allocation2 + $0x70] sm:$0xff]
        %v377 = vld [vmem:[#allocation2 + $0x78] sm:$0xff]
        %v378 = vld [vmem:[%s290] sm:$0xf]
        %v379 = vld [vmem:[%s290 + $0x4] sm:$0xf]
        %v380 = vld [vmem:[%s290 + $0x8] sm:$0xf]
        %v381 = vld [vmem:[%s290 + $0xc] sm:$0xf]
        %v382 = vld [vmem:[%s290 + $0x10] sm:$0xf]
        %v383 = vld [vmem:[%s290 + $0x14] sm:$0xf]
        %v384 = vld [vmem:[%s290 + $0x18] sm:$0xf]
        %v385 = vld [vmem:[%s290 + $0x1c] sm:$0xf]
        %v386 = vld [vmem:[%s290 + $0x20] sm:$0xf]
        %v387 = vld [vmem:[%s290 + $0x24] sm:$0xf]
        %v388 = vld [vmem:[%s290 + $0x28] sm:$0xf]
        %v389 = vld [vmem:[%s290 + $0x2c] sm:$0xf]
        %v390 = vld [vmem:[%s290 + $0x30] sm:$0xf]
        %v391 = vld [vmem:[%s290 + $0x34] sm:$0xf]
        %v392 = vld [vmem:[%s290 + $0x38] sm:$0xf]
        %v393 = vld [vmem:[%s290 + $0x3c] sm:$0xf]
        %v410 = vunpack.c.l.b16 %v378
        %v411 = vunpack.c.l.b16 %v379
        %v412 = vunpack.c.l.b16 %v380
        %v413 = vunpack.c.l.b16 %v381
        %v414 = vunpack.c.l.b16 %v382
        %v415 = vunpack.c.l.b16 %v383
        %v416 = vunpack.c.l.b16 %v384
        %v417 = vunpack.c.l.b16 %v385
        %v418 = vunpack.c.l.b16 %v386
        %v419 = vunpack.c.l.b16 %v387
        %v420 = vunpack.c.l.b16 %v388
        %v421 = vunpack.c.l.b16 %v389
        %v422 = vunpack.c.l.b16 %v390
        %v423 = vunpack.c.l.b16 %v391
        %v424 = vunpack.c.l.b16 %v392
        %v425 = vunpack.c.l.b16 %v393
        %v426 = vpack.c.b16 %v411, %v410
        %v427 = vpack.c.b16 %v413, %v412
        %v428 = vpack.c.b16 %v415, %v414
        %v429 = vpack.c.b16 %v417, %v416
        %v430 = vpack.c.b16 %v419, %v418
        %v431 = vpack.c.b16 %v421, %v420
        %v432 = vpack.c.b16 %v423, %v422
        %v433 = vpack.c.b16 %v425, %v424
        %v458 = vunpack.c.l.b16 %v346
        %v459 = vunpack.c.l.b16 %v347
        %v460 = vunpack.c.l.b16 %v348
        %v461 = vunpack.c.l.b16 %v349
        %v462 = vunpack.c.l.b16 %v350
        %v463 = vunpack.c.l.b16 %v351
        %v464 = vunpack.c.l.b16 %v352
        %v465 = vunpack.c.l.b16 %v353
        %v466 = vunpack.c.l.b16 %v354
        %v467 = vunpack.c.l.b16 %v355
        %v468 = vunpack.c.l.b16 %v356
        %v469 = vunpack.c.l.b16 %v357
        %v470 = vunpack.c.l.b16 %v358
        %v471 = vunpack.c.l.b16 %v359
        %v472 = vunpack.c.l.b16 %v360
        %v473 = vunpack.c.l.b16 %v361
        %v474 = vpack.c.b16 %v459, %v458
        %v475 = vpack.c.b16 %v461, %v460
        %v476 = vpack.c.b16 %v463, %v462
        %v477 = vpack.c.b16 %v465, %v464
        %v478 = vpack.c.b16 %v467, %v466
        %v479 = vpack.c.b16 %v469, %v468
        %v480 = vpack.c.b16 %v471, %v470
        %v481 = vpack.c.b16 %v473, %v472
        %490 = vmatprep.subr.bf16.mxu0 0
        %491 = vmatpush1.bf16.msra.mxu0 %v481
        %492 = vmatprep.subr.bf16.mxu0 0
        %493 = vmatpush1.bf16.msra.mxu0 %v480
        %494 = vmatprep.subr.bf16.mxu0 0
        %495 = vmatpush1.bf16.msra.mxu0 %v479
        %496 = vmatprep.subr.bf16.mxu0 0
        %497 = vmatpush1.bf16.msra.mxu0 %v478
        %498 = vmatprep.subr.bf16.mxu0 0
        %499 = vmatpush1.bf16.msra.mxu0 %v477
        %500 = vmatprep.subr.bf16.mxu0 0
        %501 = vmatpush1.bf16.msra.mxu0 %v476
        %502 = vmatprep.subr.bf16.mxu0 0
        %503 = vmatpush1.bf16.msra.mxu0 %v475
        %504 = vmatprep.subr.bf16.mxu0 0
        %505 = vmatpush1.bf16.msra.mxu0 %v474
        %506 = vmatprep.subr.bf16.mxu0 0
        %507 = vmatpush2.bf16.msra.mxu0 0
        %508 = vmatprep.subr.bf16.mxu0 0
        %509 = vmatpush2.bf16.msra.mxu0 0
        %510 = vmatprep.subr.bf16.mxu0 0
        %511 = vmatpush2.bf16.msra.mxu0 0
        %512 = vmatprep.subr.bf16.mxu0 0
        %513 = vmatpush2.bf16.msra.mxu0 0
        %514 = vmatprep.subr.bf16.mxu0 0
        %515 = vmatpush2.bf16.msra.mxu0 0
        %516 = vmatprep.subr.bf16.mxu0 0
        %517 = vmatpush2.bf16.msra.mxu0 0
        %518 = vmatprep.subr.bf16.mxu0 0
        %519 = vmatpush2.bf16.msra.mxu0 0
        %520 = vmatprep.subr.bf16.mxu0 0
        %521 = vmatpush2.bf16.msra.mxu0 0
        %522 = vmatprep.mubr.bf16.mxu0 0
        %523 = vmatmul.mubr.bf16.gmra.mxu0 %v426
        %v524 = vpop.f32.mrf.mxu0
        %v525 = vadd.f32 0.0, %v524
        %v526 = vpop.f32.mrf.mxu0
        %v527 = vpop.f32.mrf.mxu0
        %v528 = vadd.f32 0.0, %v527
        %v529 = vpop.f32.mrf.mxu0
        %530 = vmatprep.mubr.bf16.mxu0 0
        %531 = vmatmul.mubr.bf16.gmra.mxu0 %v427
        %v532 = vpop.f32.mrf.mxu0
        %v533 = vadd.f32 0.0, %v532
        %v534 = vpop.f32.mrf.mxu0
        %v535 = vpop.f32.mrf.mxu0
        %v536 = vadd.f32 0.0, %v535
        %v537 = vpop.f32.mrf.mxu0
        %538 = vmatprep.mubr.bf16.mxu0 0
        %539 = vmatmul.mubr.bf16.gmra.mxu0 %v428
        %v540 = vpop.f32.mrf.mxu0
        %v541 = vadd.f32 0.0, %v540
        %v542 = vpop.f32.mrf.mxu0
        %v543 = vpop.f32.mrf.mxu0
        %v544 = vadd.f32 0.0, %v543
        %v545 = vpop.f32.mrf.mxu0
        %546 = vmatprep.mubr.bf16.mxu0 0
        %547 = vmatmul.mubr.bf16.gmra.mxu0 %v429
        %v548 = vpop.f32.mrf.mxu0
        %v549 = vadd.f32 0.0, %v548
        %v550 = vpop.f32.mrf.mxu0
        %v551 = vpop.f32.mrf.mxu0
        %v552 = vadd.f32 0.0, %v551
        %v553 = vpop.f32.mrf.mxu0
        %554 = vmatprep.mubr.bf16.mxu0 0
        %555 = vmatmul.mubr.bf16.gmra.mxu0 %v430
        %v556 = vpop.f32.mrf.mxu0
        %v557 = vadd.f32 0.0, %v556
        %v558 = vpop.f32.mrf.mxu0
        %v559 = vpop.f32.mrf.mxu0
        %v560 = vadd.f32 0.0, %v559
        %v561 = vpop.f32.mrf.mxu0
        %562 = vmatprep.mubr.bf16.mxu0 0
        %563 = vmatmul.mubr.bf16.gmra.mxu0 %v431
        %v564 = vpop.f32.mrf.mxu0
        %v565 = vadd.f32 0.0, %v564
        %v566 = vpop.f32.mrf.mxu0
        %v567 = vpop.f32.mrf.mxu0
        %v568 = vadd.f32 0.0, %v567
        %v569 = vpop.f32.mrf.mxu0
        %570 = vmatprep.mubr.bf16.mxu0 0
        %571 = vmatmul.mubr.bf16.gmra.mxu0 %v432
        %v572 = vpop.f32.mrf.mxu0
        %v573 = vadd.f32 0.0, %v572
        %v574 = vpop.f32.mrf.mxu0
        %v575 = vpop.f32.mrf.mxu0
        %v576 = vadd.f32 0.0, %v575
        %v577 = vpop.f32.mrf.mxu0
        %578 = vmatprep.mubr.bf16.mxu0 0
        %579 = vmatmul.mubr.bf16.gmra.mxu0 %v433
        %v580 = vpop.f32.mrf.mxu0
        %v581 = vadd.f32 0.0, %v580
        %v582 = vpop.f32.mrf.mxu0
        %v583 = vpop.f32.mrf.mxu0
        %v584 = vadd.f32 0.0, %v583
        %v585 = vpop.f32.mrf.mxu0
        %586 = vdwg.mxu0
        %v587 = vadd.f32 %v362, %v525
        %v588 = vadd.f32 %v363, %v528
        %v589 = vadd.f32 %v364, %v533
        %v590 = vadd.f32 %v365, %v536
        %v591 = vadd.f32 %v366, %v541
        %v592 = vadd.f32 %v367, %v544
        %v593 = vadd.f32 %v368, %v549
        %v594 = vadd.f32 %v369, %v552
        %v595 = vadd.f32 %v370, %v557
        %v596 = vadd.f32 %v371, %v560
        %v597 = vadd.f32 %v372, %v565
        %v598 = vadd.f32 %v373, %v568
        %v599 = vadd.f32 %v374, %v573
        %v600 = vadd.f32 %v375, %v576
        %v601 = vadd.f32 %v376, %v581
        %v602 = vadd.f32 %v377, %v584
        %603 = vst [vmem:[#allocation2] sm:$0xff] %v587
        %604 = vst [vmem:[#allocation2 + $0x8] sm:$0xff] %v588
        %605 = vst [vmem:[#allocation2 + $0x10] sm:$0xff] %v589
        %606 = vst [vmem:[#allocation2 + $0x18] sm:$0xff] %v590
        %607 = vst [vmem:[#allocation2 + $0x20] sm:$0xff] %v591
        %608 = vst [vmem:[#allocation2 + $0x28] sm:$0xff] %v592
        %609 = vst [vmem:[#allocation2 + $0x30] sm:$0xff] %v593
        %610 = vst [vmem:[#allocation2 + $0x38] sm:$0xff] %v594
        %611 = vst [vmem:[#allocation2 + $0x40] sm:$0xff] %v595
        %612 = vst [vmem:[#allocation2 + $0x48] sm:$0xff] %v596
        %613 = vst [vmem:[#allocation2 + $0x50] sm:$0xff] %v597
        %614 = vst [vmem:[#allocation2 + $0x58] sm:$0xff] %v598
        %615 = vst [vmem:[#allocation2 + $0x60] sm:$0xff] %v599
        %616 = vst [vmem:[#allocation2 + $0x68] sm:$0xff] %v600
        %617 = vst [vmem:[#allocation2 + $0x70] sm:$0xff] %v601
        %618 = vst [vmem:[#allocation2 + $0x78] sm:$0xff] %v602
        %p619 = scmp.eq.s32.totalorder %s20, 2
        // Predicated region
        $region82: #{gnn_forward.2} parent=72 // pred_check
          %p620 = pneg %p619
        $region83: #{gnn_forward.2} parent=72 // pred_check_branch
          %622 = sbr.rel (%p620) target = $region85
        $region84: #{gnn_forward.2} parent=72 // pred_region
          %v623 = vld [vmem:[#allocation2] sm:$0xff]
          %v624 = vld [vmem:[#allocation2 + $0x8] sm:$0xff]
          %v625 = vld [vmem:[#allocation2 + $0x10] sm:$0xff]
          %v626 = vld [vmem:[#allocation2 + $0x18] sm:$0xff]
          %v627 = vld [vmem:[#allocation2 + $0x20] sm:$0xff]
          %v628 = vld [vmem:[#allocation2 + $0x28] sm:$0xff]
          %v629 = vld [vmem:[#allocation2 + $0x30] sm:$0xff]
          %v630 = vld [vmem:[#allocation2 + $0x38] sm:$0xff]
          %v631 = vld [vmem:[#allocation2 + $0x40] sm:$0xff]
          %v632 = vld [vmem:[#allocation2 + $0x48] sm:$0xff]
          %v633 = vld [vmem:[#allocation2 + $0x50] sm:$0xff]
          %v634 = vld [vmem:[#allocation2 + $0x58] sm:$0xff]
          %v635 = vld [vmem:[#allocation2 + $0x60] sm:$0xff]
          %v636 = vld [vmem:[#allocation2 + $0x68] sm:$0xff]
          %v637 = vld [vmem:[#allocation2 + $0x70] sm:$0xff]
          %v638 = vld [vmem:[#allocation2 + $0x78] sm:$0xff]
          %v639 = vpack.c.bf16 %v624, %v623
          %v640 = vpack.c.bf16 %v626, %v625
          %v641 = vpack.c.bf16 %v628, %v627
          %v642 = vpack.c.bf16 %v630, %v629
          %v643 = vpack.c.bf16 %v632, %v631
          %v644 = vpack.c.bf16 %v634, %v633
          %v645 = vpack.c.bf16 %v636, %v635
          %v646 = vpack.c.bf16 %v638, %v637
          %v647 = vld [vmem:[%s2] sm:$0xf]
          %v648 = vld [vmem:[%s2 + $0x4] sm:$0xf]
          %v649 = vld [vmem:[%s2 + $0x8] sm:$0xf]
          %v650 = vld [vmem:[%s2 + $0xc] sm:$0xf]
          %v651 = vld [vmem:[%s2 + $0x10] sm:$0xf]
          %v652 = vld [vmem:[%s2 + $0x14] sm:$0xf]
          %v653 = vld [vmem:[%s2 + $0x18] sm:$0xf]
          %v654 = vld [vmem:[%s2 + $0x1c] sm:$0xf]
          %v655 = vld [vmem:[%s2 + $0x20] sm:$0xf]
          %v656 = vld [vmem:[%s2 + $0x24] sm:$0xf]
          %v657 = vld [vmem:[%s2 + $0x28] sm:$0xf]
          %v658 = vld [vmem:[%s2 + $0x2c] sm:$0xf]
          %v659 = vld [vmem:[%s2 + $0x30] sm:$0xf]
          %v660 = vld [vmem:[%s2 + $0x34] sm:$0xf]
          %v661 = vld [vmem:[%s2 + $0x38] sm:$0xf]
          %v662 = vld [vmem:[%s2 + $0x3c] sm:$0xf]
          %v663 = vld [vmem:[%s3] sm:$0x1]
          %v665 = vlaneseq
          %v666 = vshrl.u32 %v665, 7
          %v667 = vsub.s32 0, %v666
          %v668 = vrot.slane %v663, %v667
          %v686 = vunpack.c.l.b16 %v647
          %v687 = vunpack.c.l.b16 %v648
          %v688 = vunpack.c.l.b16 %v649
          %v689 = vunpack.c.l.b16 %v650
          %v690 = vunpack.c.l.b16 %v651
          %v691 = vunpack.c.l.b16 %v652
          %v692 = vunpack.c.l.b16 %v653
          %v693 = vunpack.c.l.b16 %v654
          %v694 = vunpack.c.l.b16 %v655
          %v695 = vunpack.c.l.b16 %v656
          %v696 = vunpack.c.l.b16 %v657
          %v697 = vunpack.c.l.b16 %v658
          %v698 = vunpack.c.l.b16 %v659
          %v699 = vunpack.c.l.b16 %v660
          %v700 = vunpack.c.l.b16 %v661
          %v701 = vunpack.c.l.b16 %v662
          %v702 = vpack.c.b16 %v687, %v686
          %v703 = vpack.c.b16 %v689, %v688
          %v704 = vpack.c.b16 %v691, %v690
          %v705 = vpack.c.b16 %v693, %v692
          %v706 = vpack.c.b16 %v695, %v694
          %v707 = vpack.c.b16 %v697, %v696
          %v708 = vpack.c.b16 %v699, %v698
          %v709 = vpack.c.b16 %v701, %v700
          %718 = vmatprep.subr.bf16.mxu0 0
          %719 = vmatpush1.bf16.msra.mxu0 %v709
          %720 = vmatprep.subr.bf16.mxu0 0
          %721 = vmatpush1.bf16.msra.mxu0 %v708
          %722 = vmatprep.subr.bf16.mxu0 0
          %723 = vmatpush1.bf16.msra.mxu0 %v707
          %724 = vmatprep.subr.bf16.mxu0 0
          %725 = vmatpush1.bf16.msra.mxu0 %v706
          %726 = vmatprep.subr.bf16.mxu0 0
          %727 = vmatpush1.bf16.msra.mxu0 %v705
          %728 = vmatprep.subr.bf16.mxu0 0
          %729 = vmatpush1.bf16.msra.mxu0 %v704
          %730 = vmatprep.subr.bf16.mxu0 0
          %731 = vmatpush1.bf16.msra.mxu0 %v703
          %732 = vmatprep.subr.bf16.mxu0 0
          %733 = vmatpush1.bf16.msra.mxu0 %v702
          %734 = vmatprep.subr.bf16.mxu0 0
          %735 = vmatpush2.bf16.msra.mxu0 0
          %736 = vmatprep.subr.bf16.mxu0 0
          %737 = vmatpush2.bf16.msra.mxu0 0
          %738 = vmatprep.subr.bf16.mxu0 0
          %739 = vmatpush2.bf16.msra.mxu0 0
          %740 = vmatprep.subr.bf16.mxu0 0
          %741 = vmatpush2.bf16.msra.mxu0 0
          %742 = vmatprep.subr.bf16.mxu0 0
          %743 = vmatpush2.bf16.msra.mxu0 0
          %744 = vmatprep.subr.bf16.mxu0 0
          %745 = vmatpush2.bf16.msra.mxu0 0
          %746 = vmatprep.subr.bf16.mxu0 0
          %747 = vmatpush2.bf16.msra.mxu0 0
          %748 = vmatprep.subr.bf16.mxu0 0
          %749 = vmatpush2.bf16.msra.mxu0 0
          %750 = vmatprep.mubr.bf16.mxu0 0
          %751 = vmatmul.mubr.bf16.gmra.mxu0 %v639
          %v752 = vpop.f32.mrf.mxu0
          %v753 = vadd.f32 %v668, %v752
          %v754 = vpop.f32.mrf.mxu0
          %v755 = vpop.f32.mrf.mxu0
          %v756 = vadd.f32 %v668, %v755
          %v757 = vpop.f32.mrf.mxu0
          %758 = vmatprep.mubr.bf16.mxu0 0
          %759 = vmatmul.mubr.bf16.gmra.mxu0 %v640
          %v760 = vpop.f32.mrf.mxu0
          %v761 = vadd.f32 %v668, %v760
          %v762 = vpop.f32.mrf.mxu0
          %v763 = vpop.f32.mrf.mxu0
          %v764 = vadd.f32 %v668, %v763
          %v765 = vpop.f32.mrf.mxu0
          %766 = vmatprep.mubr.bf16.mxu0 0
          %767 = vmatmul.mubr.bf16.gmra.mxu0 %v641
          %v768 = vpop.f32.mrf.mxu0
          %v769 = vadd.f32 %v668, %v768
          %v770 = vpop.f32.mrf.mxu0
          %v771 = vpop.f32.mrf.mxu0
          %v772 = vadd.f32 %v668, %v771
          %v773 = vpop.f32.mrf.mxu0
          %774 = vmatprep.mubr.bf16.mxu0 0
          %775 = vmatmul.mubr.bf16.gmra.mxu0 %v642
          %v776 = vpop.f32.mrf.mxu0
          %v777 = vadd.f32 %v668, %v776
          %v778 = vpop.f32.mrf.mxu0
          %v779 = vpop.f32.mrf.mxu0
          %v780 = vadd.f32 %v668, %v779
          %v781 = vpop.f32.mrf.mxu0
          %782 = vmatprep.mubr.bf16.mxu0 0
          %783 = vmatmul.mubr.bf16.gmra.mxu0 %v643
          %v784 = vpop.f32.mrf.mxu0
          %v785 = vadd.f32 %v668, %v784
          %v786 = vpop.f32.mrf.mxu0
          %v787 = vpop.f32.mrf.mxu0
          %v788 = vadd.f32 %v668, %v787
          %v789 = vpop.f32.mrf.mxu0
          %790 = vmatprep.mubr.bf16.mxu0 0
          %791 = vmatmul.mubr.bf16.gmra.mxu0 %v644
          %v792 = vpop.f32.mrf.mxu0
          %v793 = vadd.f32 %v668, %v792
          %v794 = vpop.f32.mrf.mxu0
          %v795 = vpop.f32.mrf.mxu0
          %v796 = vadd.f32 %v668, %v795
          %v797 = vpop.f32.mrf.mxu0
          %798 = vmatprep.mubr.bf16.mxu0 0
          %799 = vmatmul.mubr.bf16.gmra.mxu0 %v645
          %v800 = vpop.f32.mrf.mxu0
          %v801 = vadd.f32 %v668, %v800
          %v802 = vpop.f32.mrf.mxu0
          %v803 = vpop.f32.mrf.mxu0
          %v804 = vadd.f32 %v668, %v803
          %v805 = vpop.f32.mrf.mxu0
          %806 = vmatprep.mubr.bf16.mxu0 0
          %807 = vmatmul.mubr.bf16.gmra.mxu0 %v646
          %v808 = vpop.f32.mrf.mxu0
          %v809 = vadd.f32 %v668, %v808
          %v810 = vpop.f32.mrf.mxu0
          %v811 = vpop.f32.mrf.mxu0
          %v812 = vadd.f32 %v668, %v811
          %v813 = vpop.f32.mrf.mxu0
          %814 = vdwg.mxu0
          %v815 = vmax.f32 %v753, 0.0
          %v816 = vmax.f32 %v756, 0.0
          %v817 = vmax.f32 %v761, 0.0
          %v818 = vmax.f32 %v764, 0.0
          %v819 = vmax.f32 %v769, 0.0
          %v820 = vmax.f32 %v772, 0.0
          %v821 = vmax.f32 %v777, 0.0
          %v822 = vmax.f32 %v780, 0.0
          %v823 = vmax.f32 %v785, 0.0
          %v824 = vmax.f32 %v788, 0.0
          %v825 = vmax.f32 %v793, 0.0
          %v826 = vmax.f32 %v796, 0.0
          %v827 = vmax.f32 %v801, 0.0
          %v828 = vmax.f32 %v804, 0.0
          %v829 = vmax.f32 %v809, 0.0
          %v830 = vmax.f32 %v812, 0.0
          %v831 = vpack.c.bf16 %v816, %v815
          %v832 = vpack.c.bf16 %v818, %v817
          %v833 = vpack.c.bf16 %v820, %v819
          %v834 = vpack.c.bf16 %v822, %v821
          %v835 = vpack.c.bf16 %v824, %v823
          %v836 = vpack.c.bf16 %v826, %v825
          %v837 = vpack.c.bf16 %v828, %v827
          %v838 = vpack.c.bf16 %v830, %v829
          %v847 = vunpack.c.l.b16 %v831
          %v848 = vunpack.c.h.b16 %v831
          %v849 = vunpack.c.l.b16 %v832
          %v850 = vunpack.c.h.b16 %v832
          %v851 = vunpack.c.l.b16 %v833
          %v852 = vunpack.c.h.b16 %v833
          %v853 = vunpack.c.l.b16 %v834
          %v854 = vunpack.c.h.b16 %v834
          %v855 = vunpack.c.l.b16 %v835
          %v856 = vunpack.c.h.b16 %v835
          %v857 = vunpack.c.l.b16 %v836
          %v858 = vunpack.c.h.b16 %v836
          %v859 = vunpack.c.l.b16 %v837
          %v860 = vunpack.c.h.b16 %v837
          %v861 = vunpack.c.l.b16 %v838
          %v862 = vunpack.c.h.b16 %v838
          %v863 = vpack.c.b16 %v847, %v847
          %v864 = vpack.c.b16 %v848, %v848
          %v865 = vpack.c.b16 %v849, %v849
          %v866 = vpack.c.b16 %v850, %v850
          %v867 = vpack.c.b16 %v851, %v851
          %v868 = vpack.c.b16 %v852, %v852
          %v869 = vpack.c.b16 %v853, %v853
          %v870 = vpack.c.b16 %v854, %v854
          %v871 = vpack.c.b16 %v855, %v855
          %v872 = vpack.c.b16 %v856, %v856
          %v873 = vpack.c.b16 %v857, %v857
          %v874 = vpack.c.b16 %v858, %v858
          %v875 = vpack.c.b16 %v859, %v859
          %v876 = vpack.c.b16 %v860, %v860
          %v877 = vpack.c.b16 %v861, %v861
          %v878 = vpack.c.b16 %v862, %v862
          %895 = vst [vmem:[%s318] sm:$0xf] %v863
          %896 = vst [vmem:[%s318 + $0x4] sm:$0xf] %v864
          %897 = vst [vmem:[%s318 + $0x8] sm:$0xf] %v865
          %898 = vst [vmem:[%s318 + $0xc] sm:$0xf] %v866
          %899 = vst [vmem:[%s318 + $0x10] sm:$0xf] %v867
          %900 = vst [vmem:[%s318 + $0x14] sm:$0xf] %v868
          %901 = vst [vmem:[%s318 + $0x18] sm:$0xf] %v869
          %902 = vst [vmem:[%s318 + $0x1c] sm:$0xf] %v870
          %903 = vst [vmem:[%s318 + $0x20] sm:$0xf] %v871
          %904 = vst [vmem:[%s318 + $0x24] sm:$0xf] %v872
          %905 = vst [vmem:[%s318 + $0x28] sm:$0xf] %v873
          %906 = vst [vmem:[%s318 + $0x2c] sm:$0xf] %v874
          %907 = vst [vmem:[%s318 + $0x30] sm:$0xf] %v875
          %908 = vst [vmem:[%s318 + $0x34] sm:$0xf] %v876
          %909 = vst [vmem:[%s318 + $0x38] sm:$0xf] %v877
          %910 = vst [vmem:[%s318 + $0x3c] sm:$0xf] %v878
        $region85: #{gnn_forward.2} parent=72 // pred_fallthru
          _
        %s911 = smul.u32 16, %s19
        %p912 = scmp.lt.s32.totalorder %s911, 47
        %s913 = scalar_select %p912, %s911, 47
        %s914 = smul.addr %s913, 4
        %s915 = scalar_lea.vmem %s4, %s914
        // Predicated region
        $region86: #{gnn_forward.2} parent=72 // pred_check
          %p916 = pneg %p136
        $region87: #{gnn_forward.2} parent=72 // pred_check_branch
          %918 = sbr.rel (%p916) target = $region89
        $region88: #{gnn_forward.2} parent=72 // pred_region
          %s919 = smul.u32 16, %s19
        $region89: #{gnn_forward.2} parent=72 // pred_fallthru
          _
      $region73: #{gnn_forward.2} parent=5 // pred_fallthru
        _
      %p920 = scmp.le.s32.totalorder 2, %s10
      // Predicated region
      $region90: #{gnn_forward.2} parent=5 // pred_check
        %p921 = pneg %p920
      $region91: #{gnn_forward.2} parent=5 // pred_check_branch
        %923 = sbr.rel (%p921) target = $region93
      $region92: #{gnn_forward.2} parent=5 // pred_region
        %s924 = ssub.s32 %s10, 2
        // Predicated region
        $region94: #{gnn_forward.2} parent=92 // pred_check
          %p925 = pneg %p142
        $region95: #{gnn_forward.2} parent=92 // pred_check_branch
          %927 = sbr.rel (%p925) target = $region97
        $region96: #{gnn_forward.2} parent=92 // pred_region
          %s928 = smul.u32 16, %s21
          %p929 = scmp.lt.s32.totalorder %s928, 47
          %s930 = scalar_select %p929, %s928, 47
          %s931 = smul.addr %s930, 4
          %s932 = scalar_lea.vmem %s4, %s931
        $region97: #{gnn_forward.2} parent=92 // pred_fallthru
          _
      $region93: #{gnn_forward.2} parent=5 // pred_fallthru
        _
    $region6: #{gnn_forward.2} parent=1 // loop_footer
      %s14 = sadd.s32 1, %s10
    $region7: #{gnn_forward.2} parent=1 // loop_footer_branch
      %9 = sbr.rel target = $region3
    $region8: #{gnn_forward.2} parent=1 // loop_exit
      _

// kernel: gnn_forward.3
$region0: #{gnn_forward.3}
  #allocation0 [shape = 'u32[]', space=smem, size = 0x4, offset = 0x4, fixed_abs, tag = 'smem constant byte address 0x4 - core index']
  #allocation1 [shape = 'u32[144,128]{1,0:T(1,128)}', space=vmem, size = 0x12000, scoped, tag = 'internal scratch']
  #allocation2 [shape = 'f32[128,128]{1,0:T(8,128)}', space=vmem, size = 0x10000, scoped, tag = 'scratch operand']
  %s0 = inlined_call_operand.vmem [shape: s32[384,1], index: 0, kind: input, shape index: {}]
  %s1 = inlined_call_operand.vmem [shape: bf16[384,384], index: 1, kind: input, shape index: {}]
  %s2 = inlined_call_operand.vmem [shape: bf16[384,128], index: 2, kind: input, shape index: {}]
  %s3 = inlined_call_operand.vmem [shape: bf16[128,128], index: 3, kind: input, shape index: {}]
  %s4 = inlined_call_operand.vmem [shape: f32[1,128], index: 4, kind: input, shape index: {}]
  %s5 = inlined_call_operand.vmem [shape: bf16[128,128], index: 5, kind: input, shape index: {}]
  %s6 = inlined_call_operand.vmem [shape: f32[1,128], index: 6, kind: input, shape index: {}]
  %s7 = inlined_call_operand.vmem [shape: f32[384,128], index: 7, kind: output, shape index: {0}]
  %s8 = inlined_call_operand.vmem [shape: f32[3,8,128], index: 8, kind: output, shape index: {1}]
  %9 = xla_tuple %s7, %s8
  %s10 = sld [smem:[#allocation0]]
  $region118: #{gnn_forward.3} parent=0
    _
  %s12 = ssub.s32 1, %s10
  %s13 = scalar_select 0, %s12, %s10
  $region1: #{gnn_forward.3} parent=0
    #allocation3 [shape = 'u8[65536]{0}', space=vmem, size = 0x10000, scoped, tag = 'input window, operand 1']
    loop: start=0, step=1, limit=11
    $region2: #{gnn_forward.3} parent=1 // loop_pre_header
      _
    $region3: #{gnn_forward.3} parent=1 // loop_header
      %s15 = sphi 0, %s19
      %p16 = scmp.ge.s32.totalorder %s15, 11
      %s22 = sphi 0, %s34
      %s23 = sphi 0, %s30
      %s24 = sphi 0, %s22
      %s25 = sphi 0, %s23
      %s26 = sphi 0, %s24
      %s27 = sphi 0, %s25
      %s37 = sphi 0, %s39
      %s40 = sphi 0, %s37
      %s41 = sphi 0, %s40
      %s57 = sphi 0, %s41
      %s65 = sphi 0, %s67
      %s68 = sphi 0, %s65
      %s69 = sphi 0, %s68
      %s85 = sphi 0, %s69
      %s89 = sphi 0, %s89
      %s91 = sphi 0, %s89
      %s92 = sphi 0, %s91
      %s106 = sphi 0, %s92
      %s110 = sphi 0, %s110
      %s112 = sphi 0, %s110
      %s113 = sphi 0, %s112
      %s127 = sphi 0, %s113
      %s131 = sphi 0, %s131
      %s133 = sphi 0, %s131
      %s134 = sphi 0, %s133
      %s148 = sphi 0, %s134
      %s152 = sphi 0, %s152
      %s154 = sphi 0, %s152
      %s155 = sphi 0, %s154
      %s169 = sphi 0, %s155
      %s173 = sphi 0, %s173
      %s175 = sphi 0, %s173
      %s176 = sphi 0, %s175
      %s190 = sphi 0, %s176
      %s196 = sphi 0, %s198
      %s199 = sphi 0, %s196
      %s200 = sphi 0, %s199
      %s216 = sphi 0, %s200
      %s222 = sphi 0, %s224
      %s225 = sphi 0, %s222
      %s226 = sphi 0, %s225
      %s242 = sphi 0, %s226
    $region4: #{gnn_forward.3} parent=1 // loop_header_branch
      %18 = sbr.rel (%p16) target = $region8
    $region5: #{gnn_forward.3} parent=1 // loop_body
      %s20 = ssub.s32 %s15, 1
      %s21 = ssub.s32 %s15, 2
      %s28 = sadd.s32 1, %s23
      %p29 = scmp.ge.s32.totalorder %s28, 3
      %s30 = scalar_select %p29, 0, %s28
      %s31 = sadd.s32 1, %s22
      %s32 = scalar_select %p29, %s31, %s22
      %p33 = scmp.ge.s32.totalorder %s32, 3
      %s34 = scalar_select %p33, 0, %s32
      %s35 = ssub.s32 %s22, %s34
      %p36 = scmp.eq.s32.totalorder %s35, 0
      %s38 = sadd.s32 %s37, 1
      %s39 = scalar_select %p36, %s37, %s38
      %p42 = pneg %p36
      %p43 = scmp.eq.s32.totalorder %s15, 8
      %p44 = por %p42, %p43
      %p45 = scmp.ne.s32.totalorder %s37, %s40
      %p46 = scmp.eq.s32.totalorder %s15, 0
      %p47 = por %p45, %p46
      %p48 = scmp.ne.s32.totalorder %s37, %s40
      %p49 = scmp.eq.s32.totalorder %s20, 8
      %p50 = por %p48, %p49
      %p51 = scmp.ne.s32.totalorder %s40, %s41
      %p52 = scmp.eq.s32.totalorder %s20, 0
      %p53 = por %p51, %p52
      %p54 = scmp.ne.s32.totalorder %s40, %s41
      %p55 = scmp.eq.s32.totalorder %s21, 8
      %p56 = por %p54, %p55
      %p58 = scmp.ne.s32.totalorder %s41, %s57
      %p59 = scmp.eq.s32.totalorder %s21, 0
      %p60 = por %p58, %p59
      %s61 = ssub.s32 %s22, %s34
      %s62 = ssub.s32 %s23, %s30
      %s63 = sor.u32 %s61, %s62
      %p64 = scmp.eq.s32.totalorder %s63, 0
      %s66 = sadd.s32 %s65, 1
      %s67 = scalar_select %p64, %s65, %s66
      %p70 = pneg %p64
      %p71 = scmp.eq.s32.totalorder %s15, 8
      %p72 = por %p70, %p71
      %p73 = scmp.ne.s32.totalorder %s65, %s68
      %p74 = scmp.eq.s32.totalorder %s15, 0
      %p75 = por %p73, %p74
      %p76 = scmp.ne.s32.totalorder %s65, %s68
      %p77 = scmp.eq.s32.totalorder %s20, 8
      %p78 = por %p76, %p77
      %p79 = scmp.ne.s32.totalorder %s68, %s69
      %p80 = scmp.eq.s32.totalorder %s20, 0
      %p81 = por %p79, %p80
      %p82 = scmp.ne.s32.totalorder %s68, %s69
      %p83 = scmp.eq.s32.totalorder %s21, 8
      %p84 = por %p82, %p83
      %p86 = scmp.ne.s32.totalorder %s69, %s85
      %p87 = scmp.eq.s32.totalorder %s21, 0
      %p88 = por %p86, %p87
      %s90 = sadd.s32 %s89, 1
      %p93 = scmp.eq.s32.totalorder %s15, 8
      %p94 = scmp.ne.s32.totalorder %s89, %s91
      %p95 = scmp.eq.s32.totalorder %s15, 0
      %p96 = por %p94, %p95
      %p97 = scmp.ne.s32.totalorder %s89, %s91
      %p98 = scmp.eq.s32.totalorder %s20, 8
      %p99 = por %p97, %p98
      %p100 = scmp.ne.s32.totalorder %s91, %s92
      %p101 = scmp.eq.s32.totalorder %s20, 0
      %p102 = por %p100, %p101
      %p103 = scmp.ne.s32.totalorder %s91, %s92
      %p104 = scmp.eq.s32.totalorder %s21, 8
      %p105 = por %p103, %p104
      %p107 = scmp.ne.s32.totalorder %s92, %s106
      %p108 = scmp.eq.s32.totalorder %s21, 0
      %p109 = por %p107, %p108
      %s111 = sadd.s32 %s110, 1
      %p114 = scmp.eq.s32.totalorder %s15, 8
      %p115 = scmp.ne.s32.totalorder %s110, %s112
      %p116 = scmp.eq.s32.totalorder %s15, 0
      %p117 = por %p115, %p116
      %p118 = scmp.ne.s32.totalorder %s110, %s112
      %p119 = scmp.eq.s32.totalorder %s20, 8
      %p120 = por %p118, %p119
      %p121 = scmp.ne.s32.totalorder %s112, %s113
      %p122 = scmp.eq.s32.totalorder %s20, 0
      %p123 = por %p121, %p122
      %p124 = scmp.ne.s32.totalorder %s112, %s113
      %p125 = scmp.eq.s32.totalorder %s21, 8
      %p126 = por %p124, %p125
      %p128 = scmp.ne.s32.totalorder %s113, %s127
      %p129 = scmp.eq.s32.totalorder %s21, 0
      %p130 = por %p128, %p129
      %s132 = sadd.s32 %s131, 1
      %p135 = scmp.eq.s32.totalorder %s15, 8
      %p136 = scmp.ne.s32.totalorder %s131, %s133
      %p137 = scmp.eq.s32.totalorder %s15, 0
      %p138 = por %p136, %p137
      %p139 = scmp.ne.s32.totalorder %s131, %s133
      %p140 = scmp.eq.s32.totalorder %s20, 8
      %p141 = por %p139, %p140
      %p142 = scmp.ne.s32.totalorder %s133, %s134
      %p143 = scmp.eq.s32.totalorder %s20, 0
      %p144 = por %p142, %p143
      %p145 = scmp.ne.s32.totalorder %s133, %s134
      %p146 = scmp.eq.s32.totalorder %s21, 8
      %p147 = por %p145, %p146
      %p149 = scmp.ne.s32.totalorder %s134, %s148
      %p150 = scmp.eq.s32.totalorder %s21, 0
      %p151 = por %p149, %p150
      %s153 = sadd.s32 %s152, 1
      %p156 = scmp.eq.s32.totalorder %s15, 8
      %p157 = scmp.ne.s32.totalorder %s152, %s154
      %p158 = scmp.eq.s32.totalorder %s15, 0
      %p159 = por %p157, %p158
      %p160 = scmp.ne.s32.totalorder %s152, %s154
      %p161 = scmp.eq.s32.totalorder %s20, 8
      %p162 = por %p160, %p161
      %p163 = scmp.ne.s32.totalorder %s154, %s155
      %p164 = scmp.eq.s32.totalorder %s20, 0
      %p165 = por %p163, %p164
      %p166 = scmp.ne.s32.totalorder %s154, %s155
      %p167 = scmp.eq.s32.totalorder %s21, 8
      %p168 = por %p166, %p167
      %p170 = scmp.ne.s32.totalorder %s155, %s169
      %p171 = scmp.eq.s32.totalorder %s21, 0
      %p172 = por %p170, %p171
      %s174 = sadd.s32 %s173, 1
      %p177 = scmp.eq.s32.totalorder %s15, 8
      %p178 = scmp.ne.s32.totalorder %s173, %s175
      %p179 = scmp.eq.s32.totalorder %s15, 0
      %p180 = por %p178, %p179
      %p181 = scmp.ne.s32.totalorder %s173, %s175
      %p182 = scmp.eq.s32.totalorder %s20, 8
      %p183 = por %p181, %p182
      %p184 = scmp.ne.s32.totalorder %s175, %s176
      %p185 = scmp.eq.s32.totalorder %s20, 0
      %p186 = por %p184, %p185
      %p187 = scmp.ne.s32.totalorder %s175, %s176
      %p188 = scmp.eq.s32.totalorder %s21, 8
      %p189 = por %p187, %p188
      %p191 = scmp.ne.s32.totalorder %s176, %s190
      %p192 = scmp.eq.s32.totalorder %s21, 0
      %p193 = por %p191, %p192
      %s194 = ssub.s32 %s22, %s34
      %p195 = scmp.eq.s32.totalorder %s194, 0
      %s197 = sadd.s32 %s196, 1
      %s198 = scalar_select %p195, %s196, %s197
      %p201 = pneg %p195
      %p202 = scmp.eq.s32.totalorder %s15, 8
      %p203 = por %p201, %p202
      %p204 = scmp.ne.s32.totalorder %s196, %s199
      %p205 = scmp.eq.s32.totalorder %s15, 0
      %p206 = por %p204, %p205
      %p207 = scmp.ne.s32.totalorder %s196, %s199
      %p208 = scmp.eq.s32.totalorder %s20, 8
      %p209 = por %p207, %p208
      %p210 = scmp.ne.s32.totalorder %s199, %s200
      %p211 = scmp.eq.s32.totalorder %s20, 0
      %p212 = por %p210, %p211
      %p213 = scmp.ne.s32.totalorder %s199, %s200
      %p214 = scmp.eq.s32.totalorder %s21, 8
      %p215 = por %p213, %p214
      %p217 = scmp.ne.s32.totalorder %s200, %s216
      %p218 = scmp.eq.s32.totalorder %s21, 0
      %p219 = por %p217, %p218
      %s220 = ssub.s32 %s22, %s34
      %p221 = scmp.eq.s32.totalorder %s220, 0
      %s223 = sadd.s32 %s222, 1
      %s224 = scalar_select %p221, %s222, %s223
      %p227 = pneg %p221
      %p228 = scmp.eq.s32.totalorder %s15, 8
      %p229 = por %p227, %p228
      %p230 = scmp.ne.s32.totalorder %s222, %s225
      %p231 = scmp.eq.s32.totalorder %s15, 0
      %p232 = por %p230, %p231
      %p233 = scmp.ne.s32.totalorder %s222, %s225
      %p234 = scmp.eq.s32.totalorder %s20, 8
      %p235 = por %p233, %p234
      %p236 = scmp.ne.s32.totalorder %s225, %s226
      %p237 = scmp.eq.s32.totalorder %s20, 0
      %p238 = por %p236, %p237
      %p239 = scmp.ne.s32.totalorder %s225, %s226
      %p240 = scmp.eq.s32.totalorder %s21, 8
      %p241 = por %p239, %p240
      %p243 = scmp.ne.s32.totalorder %s226, %s242
      %p244 = scmp.eq.s32.totalorder %s21, 0
      %p245 = por %p243, %p244
      %p246 = scmp.le.s32.totalorder 1, %s15
      %p247 = scmp.lt.s32.totalorder %s15, 10
      %p248 = pnand %p246, %p247
      %p249 = pneg %p248
      // Predicated region
      $region9: #{gnn_forward.3} parent=5 // pred_check
        _
      $region10: #{gnn_forward.3} parent=5 // pred_check_branch
        %251 = sbr.rel (%p248) target = $region12
      $region11: #{gnn_forward.3} parent=5 // pred_region
        %s252 = ssub.s32 %s15, 1
        // Predicated region
        $region13: #{gnn_forward.3} parent=11 // pred_check
          %p253 = pneg %p102
        $region14: #{gnn_forward.3} parent=11 // pred_check_branch
          %255 = sbr.rel (%p253) target = $region16
        $region15: #{gnn_forward.3} parent=11 // pred_region
          _
        $region16: #{gnn_forward.3} parent=11 // pred_fallthru
          _
        // Predicated region
        $region17: #{gnn_forward.3} parent=11 // pred_check
          %p256 = pneg %p123
        $region18: #{gnn_forward.3} parent=11 // pred_check_branch
          %258 = sbr.rel (%p256) target = $region20
        $region19: #{gnn_forward.3} parent=11 // pred_region
          _
        $region20: #{gnn_forward.3} parent=11 // pred_fallthru
          _
        // Predicated region
        $region21: #{gnn_forward.3} parent=11 // pred_check
          %p259 = pneg %p144
        $region22: #{gnn_forward.3} parent=11 // pred_check_branch
          %261 = sbr.rel (%p259) target = $region24
        $region23: #{gnn_forward.3} parent=11 // pred_region
          _
        $region24: #{gnn_forward.3} parent=11 // pred_fallthru
          _
        // Predicated region
        $region25: #{gnn_forward.3} parent=11 // pred_check
          %p262 = pneg %p165
        $region26: #{gnn_forward.3} parent=11 // pred_check_branch
          %264 = sbr.rel (%p262) target = $region28
        $region27: #{gnn_forward.3} parent=11 // pred_region
          _
        $region28: #{gnn_forward.3} parent=11 // pred_fallthru
          _
        // Predicated region
        $region29: #{gnn_forward.3} parent=11 // pred_check
          %p265 = pneg %p186
        $region30: #{gnn_forward.3} parent=11 // pred_check_branch
          %267 = sbr.rel (%p265) target = $region32
        $region31: #{gnn_forward.3} parent=11 // pred_region
          _
        $region32: #{gnn_forward.3} parent=11 // pred_fallthru
          _
      $region12: #{gnn_forward.3} parent=5 // pred_fallthru
        _
      %p268 = scmp.lt.s32.totalorder %s15, 9
      // Predicated region
      $region33: #{gnn_forward.3} parent=5 // pred_check
        %p269 = pneg %p268
      $region34: #{gnn_forward.3} parent=5 // pred_check_branch
        %271 = sbr.rel (%p269) target = $region36
      $region35: #{gnn_forward.3} parent=5 // pred_region
        // Predicated region
        $region37: #{gnn_forward.3} parent=35 // pred_check
          %p272 = pneg %p47
        $region38: #{gnn_forward.3} parent=35 // pred_check_branch
          %274 = sbr.rel (%p272) target = $region40
        $region39: #{gnn_forward.3} parent=35 // pred_region
          %s275 = smul.u32 16, %s22
          %p276 = scmp.lt.s32.totalorder %s275, 47
          %s277 = scalar_select %p276, %s275, 47
          %s278 = smul.addr %s277, 8
          %s279 = scalar_lea.vmem %s0, %s278
          %s280 = smul.u32 16, %s22
        $region40: #{gnn_forward.3} parent=35 // pred_fallthru
          _
        // Predicated region
        $region41: #{gnn_forward.3} parent=35 // pred_check
          %p281 = pneg %p75
        $region42: #{gnn_forward.3} parent=35 // pred_check_branch
          %283 = sbr.rel (%p281) target = $region44
        $region43: #{gnn_forward.3} parent=35 // pred_region
          %s284 = sand.u32 %s65, 1
          %s285 = sand.u32 %s65, 1
          %s286 = smul.addr %s285, 64
          %s287 = scalar_lea.vmem [#allocation3], %s286
          %s288 = smul.u32 16, %s22
          %s289 = smul.addr %s288, 3
          %s290 = sadd.s32 %s23, %s289
          %s291 = smul.addr %s290, 4
          %s292 = scalar_lea.vmem %s1, %s291
          // Predicated region
          $region45: #{gnn_forward.3} parent=43 // pred_check
            _
          $region46: #{gnn_forward.3} parent=43 // pred_check_branch
            %294 = sbr.rel (0) target = $region48
          $region47: #{gnn_forward.3} parent=43 // pred_region
            // Predicated region
            $region49: #{gnn_forward.3} parent=47 // pred_check
              _
            $region50: #{gnn_forward.3} parent=47 // pred_check_branch
              %296 = sbr.rel target = $region52
            $region51: #{gnn_forward.3} parent=47 // pred_region
              // Predicated region
              $region64: #{gnn_forward.3} parent=51 // pred_check
                _
              $region65: #{gnn_forward.3} parent=51 // pred_check_branch
                %342 = sbr.rel (0) target = $region67
              $region66: #{gnn_forward.3} parent=51 // pred_region
                loop: start=0, step=1, limit=1
                $region68: #{gnn_forward.3} parent=66 // loop_pre_header
                  _
                $region69: #{gnn_forward.3} parent=66 // loop_header
                  %s344 = sphi 0, %s348
                  %p345 = scmp.ge.s32.totalorder %s344, 1
                  %s349 = sphi %s292, %s292
                  %s350 = sphi %s287, %s287
                $region70: #{gnn_forward.3} parent=66 // loop_header_branch
                  %347 = sbr.rel (%p345) target = $region74
                $region71: #{gnn_forward.3} parent=66 // loop_body
                  _
                $region72: #{gnn_forward.3} parent=66 // loop_footer
                  %s348 = sadd.s32 1, %s344
                $region73: #{gnn_forward.3} parent=66 // loop_footer_branch
                  %343 = sbr.rel target = $region69
                $region74: #{gnn_forward.3} parent=66 // loop_exit
                  _
                %s352 = ssub.s32 16, 1
                loop: start=0, step=1, limit=1
                $region75: #{gnn_forward.3} parent=66 // loop_pre_header
                  _
                $region76: #{gnn_forward.3} parent=66 // loop_header
                  %s354 = sphi 0, %s358
                  %p355 = scmp.ge.s32.totalorder %s354, 1
                  %s359 = sphi %s292, %s292
                  %s360 = sphi %s287, %s287
                $region77: #{gnn_forward.3} parent=66 // loop_header_branch
                  %357 = sbr.rel (%p355) target = $region81
                $region78: #{gnn_forward.3} parent=66 // loop_body
                  %v361 = vld [vmem:[%s359] sm:%s352]
                  %362 = vst [vmem:[%s360] sm:%s352] %v361
                  %v363 = vld [vmem:[%s359 + $0xc] sm:%s352]
                  %364 = vst [vmem:[%s360 + $0x4] sm:%s352] %v363
                  %v365 = vld [vmem:[%s359 + $0x18] sm:%s352]
                  %366 = vst [vmem:[%s360 + $0x8] sm:%s352] %v365
                  %v367 = vld [vmem:[%s359 + $0x24] sm:%s352]
                  %368 = vst [vmem:[%s360 + $0xc] sm:%s352] %v367
                  %v369 = vld [vmem:[%s359 + $0x30] sm:%s352]
                  %370 = vst [vmem:[%s360 + $0x10] sm:%s352] %v369
                  %v371 = vld [vmem:[%s359 + $0x3c] sm:%s352]
                  %372 = vst [vmem:[%s360 + $0x14] sm:%s352] %v371
                  %v373 = vld [vmem:[%s359 + $0x48] sm:%s352]
                  %374 = vst [vmem:[%s360 + $0x18] sm:%s352] %v373
                  %v375 = vld [vmem:[%s359 + $0x54] sm:%s352]
                  %376 = vst [vmem:[%s360 + $0x1c] sm:%s352] %v375
                  %v377 = vld [vmem:[%s359 + $0x60] sm:%s352]
                  %378 = vst [vmem:[%s360 + $0x20] sm:%s352] %v377
                  %v379 = vld [vmem:[%s359 + $0x6c] sm:%s352]
                  %380 = vst [vmem:[%s360 + $0x24] sm:%s352] %v379
                  %v381 = vld [vmem:[%s359 + $0x78] sm:%s352]
                  %382 = vst [vmem:[%s360 + $0x28] sm:%s352] %v381
                  %v383 = vld [vmem:[%s359 + $0x84] sm:%s352]
                  %384 = vst [vmem:[%s360 + $0x2c] sm:%s352] %v383
                  %v385 = vld [vmem:[%s359 + $0x90] sm:%s352]
                  %386 = vst [vmem:[%s360 + $0x30] sm:%s352] %v385
                  %v387 = vld [vmem:[%s359 + $0x9c] sm:%s352]
                  %388 = vst [vmem:[%s360 + $0x34] sm:%s352] %v387
                  %v389 = vld [vmem:[%s359 + $0xa8] sm:%s352]
                  %390 = vst [vmem:[%s360 + $0x38] sm:%s352] %v389
                  %v391 = vld [vmem:[%s359 + $0xb4] sm:%s352]
                  %392 = vst [vmem:[%s360 + $0x3c] sm:%s352] %v391
                $region79: #{gnn_forward.3} parent=66 // loop_footer
                  %s358 = sadd.s32 1, %s354
                $region80: #{gnn_forward.3} parent=66 // loop_footer_branch
                  %353 = sbr.rel target = $region76
                $region81: #{gnn_forward.3} parent=66 // loop_exit
                  _
              $region67: #{gnn_forward.3} parent=51 // pred_fallthru
                _
            $region52: #{gnn_forward.3} parent=47 // pred_fallthru
              _
            // Predicated region
            $region53: #{gnn_forward.3} parent=47 // pred_check
              _
            $region54: #{gnn_forward.3} parent=47 // pred_check_branch
              %298 = sbr.rel (0) target = $region56
            $region55: #{gnn_forward.3} parent=47 // pred_region
              %s300 = ssub.s32 16, 1
              loop: start=0, step=1, limit=1
              $region57: #{gnn_forward.3} parent=55 // loop_pre_header
                _
              $region58: #{gnn_forward.3} parent=55 // loop_header
                %s302 = sphi 0, %s306
                %p303 = scmp.ge.s32.totalorder %s302, 1
                %s307 = sphi %s292, %s292
                %s308 = sphi %s287, %s287
              $region59: #{gnn_forward.3} parent=55 // loop_header_branch
                %305 = sbr.rel (%p303) target = $region63
              $region60: #{gnn_forward.3} parent=55 // loop_body
                %v309 = vld [vmem:[%s307] sm:%s300]
                %310 = vst [vmem:[%s308] sm:%s300] %v309
                %v311 = vld [vmem:[%s307 + $0xc] sm:%s300]
                %312 = vst [vmem:[%s308 + $0x4] sm:%s300] %v311
                %v313 = vld [vmem:[%s307 + $0x18] sm:%s300]
                %314 = vst [vmem:[%s308 + $0x8] sm:%s300] %v313
                %v315 = vld [vmem:[%s307 + $0x24] sm:%s300]
                %316 = vst [vmem:[%s308 + $0xc] sm:%s300] %v315
                %v317 = vld [vmem:[%s307 + $0x30] sm:%s300]
                %318 = vst [vmem:[%s308 + $0x10] sm:%s300] %v317
                %v319 = vld [vmem:[%s307 + $0x3c] sm:%s300]
                %320 = vst [vmem:[%s308 + $0x14] sm:%s300] %v319
                %v321 = vld [vmem:[%s307 + $0x48] sm:%s300]
                %322 = vst [vmem:[%s308 + $0x18] sm:%s300] %v321
                %v323 = vld [vmem:[%s307 + $0x54] sm:%s300]
                %324 = vst [vmem:[%s308 + $0x1c] sm:%s300] %v323
                %v325 = vld [vmem:[%s307 + $0x60] sm:%s300]
                %326 = vst [vmem:[%s308 + $0x20] sm:%s300] %v325
                %v327 = vld [vmem:[%s307 + $0x6c] sm:%s300]
                %328 = vst [vmem:[%s308 + $0x24] sm:%s300] %v327
                %v329 = vld [vmem:[%s307 + $0x78] sm:%s300]
                %330 = vst [vmem:[%s308 + $0x28] sm:%s300] %v329
                %v331 = vld [vmem:[%s307 + $0x84] sm:%s300]
                %332 = vst [vmem:[%s308 + $0x2c] sm:%s300] %v331
                %v333 = vld [vmem:[%s307 + $0x90] sm:%s300]
                %334 = vst [vmem:[%s308 + $0x30] sm:%s300] %v333
                %v335 = vld [vmem:[%s307 + $0x9c] sm:%s300]
                %336 = vst [vmem:[%s308 + $0x34] sm:%s300] %v335
                %v337 = vld [vmem:[%s307 + $0xa8] sm:%s300]
                %338 = vst [vmem:[%s308 + $0x38] sm:%s300] %v337
                %v339 = vld [vmem:[%s307 + $0xb4] sm:%s300]
                %340 = vst [vmem:[%s308 + $0x3c] sm:%s300] %v339
              $region61: #{gnn_forward.3} parent=55 // loop_footer
                %s306 = sadd.s32 1, %s302
              $region62: #{gnn_forward.3} parent=55 // loop_footer_branch
                %301 = sbr.rel target = $region58
              $region63: #{gnn_forward.3} parent=55 // loop_exit
                _
            $region56: #{gnn_forward.3} parent=47 // pred_fallthru
              _
          $region48: #{gnn_forward.3} parent=43 // pred_fallthru
            _
          %393 = vnop
        $region44: #{gnn_forward.3} parent=35 // pred_fallthru
          _
      $region36: #{gnn_forward.3} parent=5 // pred_fallthru
        _
      %p394 = scmp.le.s32.totalorder 1, %s15
      %p395 = scmp.lt.s32.totalorder %s15, 10
      %p396 = pnand %p394, %p395
      %p397 = pneg %p396
      // Predicated region
      $region82: #{gnn_forward.3} parent=5 // pred_check
        _
      $region83: #{gnn_forward.3} parent=5 // pred_check_branch
        %399 = sbr.rel (%p396) target = $region85
      $region84: #{gnn_forward.3} parent=5 // pred_region
        %s400 = ssub.s32 %s15, 1
        %s401 = sand.u32 %s68, 1
        %s402 = sand.u32 %s68, 1
        %s403 = smul.addr %s402, 64
        %s404 = scalar_lea.vmem [#allocation3], %s403
        // Predicated region
        $region86: #{gnn_forward.3} parent=84 // pred_check
          %p405 = pneg %p81
        $region87: #{gnn_forward.3} parent=84 // pred_check_branch
          %407 = sbr.rel (%p405) target = $region89
        $region88: #{gnn_forward.3} parent=84 // pred_region
          _
        $region89: #{gnn_forward.3} parent=84 // pred_fallthru
          _
        %s408 = smul.u32 16, %s24
        %p409 = scmp.lt.s32.totalorder %s408, 47
        %s410 = scalar_select %p409, %s408, 47
        %s411 = smul.addr %s410, 8
        %s412 = scalar_lea.vmem %s0, %s411
        %p413 = pneg %p53
        %p414 = pneg %p50
        %s415 = sand.u32 %s68, 1
        %s416 = sand.u32 %s68, 1
        %s417 = smul.addr %s416, 64
        %s418 = scalar_lea.vmem [#allocation3], %s417
        %p419 = pneg %p81
        %p420 = pneg %p78
        %p421 = pneg %p102
        %p422 = pneg %p99
        %p423 = pneg %p123
        %p424 = pneg %p120
        %p425 = pneg %p144
        %p426 = pneg %p141
        %p427 = pneg %p165
        %p428 = pneg %p162
        %p429 = pneg %p186
        %p430 = pneg %p183
        %p431 = pneg %p212
        %p432 = pneg %p209
        %s433 = smul.u32 16, %s24
        %p434 = scmp.lt.s32.totalorder %s433, 47
        %s435 = scalar_select %p434, %s433, 47
        %s436 = smul.addr %s435, 8
        %s437 = scalar_lea.vmem %s7, %s436
        %p438 = pneg %p238
        %p439 = pneg %p235
        %p440 = scmp.lt.s32.totalorder %s24, 2
        %s441 = scalar_select %p440, %s24, 2
        %s442 = smul.addr %s441, 8
        %s443 = scalar_lea.vmem %s8, %s442
        %s444 = smul.u32 16, %s24
        %p445 = scmp.lt.s32.totalorder %s444, 47
        %s446 = scalar_select %p445, %s444, 47
        %s447 = smul.addr %s446, 8
        %s448 = scalar_lea.vmem %s0, %s447
        %s449 = smul.u32 16, %s24
        %s450 = smul.u32 16, %s24
        %s451 = smul.u32 16, %s24
        %p452 = scmp.lt.s32.totalorder %s451, 47
        %s453 = scalar_select %p452, %s451, 47
        %s454 = smul.addr %s453, 8
        %s455 = scalar_lea.vmem %s7, %s454
        %s456 = smul.u32 16, %s24
        %p457 = scmp.lt.s32.totalorder %s24, 2
        %s458 = scalar_select %p457, %s24, 2
        %s459 = smul.addr %s458, 8
        %s460 = scalar_lea.vmem %s8, %s459
        %p462 = scmp.eq.s32.totalorder %s25, 0
        // Predicated region
        $region90: #{gnn_forward.3} parent=84 // pred_check
          %p463 = pneg %p462
        $region91: #{gnn_forward.3} parent=84 // pred_check_branch
          %465 = sbr.rel (%p463) target = $region93
        $region92: #{gnn_forward.3} parent=84 // pred_region
          %466 = vst [vmem:[#allocation2] sm:$0xff] 0.0
          %467 = vst [vmem:[#allocation2 + $0x8] sm:$0xff] 0.0
          %468 = vst [vmem:[#allocation2 + $0x10] sm:$0xff] 0.0
          %469 = vst [vmem:[#allocation2 + $0x18] sm:$0xff] 0.0
          %470 = vst [vmem:[#allocation2 + $0x20] sm:$0xff] 0.0
          %471 = vst [vmem:[#allocation2 + $0x28] sm:$0xff] 0.0
          %472 = vst [vmem:[#allocation2 + $0x30] sm:$0xff] 0.0
          %473 = vst [vmem:[#allocation2 + $0x38] sm:$0xff] 0.0
          %474 = vst [vmem:[#allocation2 + $0x40] sm:$0xff] 0.0
          %475 = vst [vmem:[#allocation2 + $0x48] sm:$0xff] 0.0
          %476 = vst [vmem:[#allocation2 + $0x50] sm:$0xff] 0.0
          %477 = vst [vmem:[#allocation2 + $0x58] sm:$0xff] 0.0
          %478 = vst [vmem:[#allocation2 + $0x60] sm:$0xff] 0.0
          %479 = vst [vmem:[#allocation2 + $0x68] sm:$0xff] 0.0
          %480 = vst [vmem:[#allocation2 + $0x70] sm:$0xff] 0.0
          %481 = vst [vmem:[#allocation2 + $0x78] sm:$0xff] 0.0
        $region93: #{gnn_forward.3} parent=84 // pred_fallthru
          _
        %s482 = smul.u32 %s25, 128
        %s483 = sshra.s32 %s482, 3
        %s484 = sand.u32 %s482, 7
        %s485 = smul.addr %s483, 4
        %s486 = scalar_lea.vmem %s2, %s485
        %v487 = vld [vmem:[%s486] sm:$0xf]
        %v488 = vld [vmem:[%s486 + $0x4] sm:$0xf]
        %v489 = vld [vmem:[%s486 + $0x8] sm:$0xf]
        %v490 = vld [vmem:[%s486 + $0xc] sm:$0xf]
        %v491 = vld [vmem:[%s486 + $0x10] sm:$0xf]
        %v492 = vld [vmem:[%s486 + $0x14] sm:$0xf]
        %v493 = vld [vmem:[%s486 + $0x18] sm:$0xf]
        %v494 = vld [vmem:[%s486 + $0x1c] sm:$0xf]
        %v495 = vld [vmem:[%s486 + $0x20] sm:$0xf]
        %v496 = vld [vmem:[%s486 + $0x24] sm:$0xf]
        %v497 = vld [vmem:[%s486 + $0x28] sm:$0xf]
        %v498 = vld [vmem:[%s486 + $0x2c] sm:$0xf]
        %v499 = vld [vmem:[%s486 + $0x30] sm:$0xf]
        %v500 = vld [vmem:[%s486 + $0x34] sm:$0xf]
        %v501 = vld [vmem:[%s486 + $0x38] sm:$0xf]
        %v502 = vld [vmem:[%s486 + $0x3c] sm:$0xf]
        %v503 = vld [vmem:[#allocation2] sm:$0xff]
        %v504 = vld [vmem:[#allocation2 + $0x8] sm:$0xff]
        %v505 = vld [vmem:[#allocation2 + $0x10] sm:$0xff]
        %v506 = vld [vmem:[#allocation2 + $0x18] sm:$0xff]
        %v507 = vld [vmem:[#allocation2 + $0x20] sm:$0xff]
        %v508 = vld [vmem:[#allocation2 + $0x28] sm:$0xff]
        %v509 = vld [vmem:[#allocation2 + $0x30] sm:$0xff]
        %v510 = vld [vmem:[#allocation2 + $0x38] sm:$0xff]
        %v511 = vld [vmem:[#allocation2 + $0x40] sm:$0xff]
        %v512 = vld [vmem:[#allocation2 + $0x48] sm:$0xff]
        %v513 = vld [vmem:[#allocation2 + $0x50] sm:$0xff]
        %v514 = vld [vmem:[#allocation2 + $0x58] sm:$0xff]
        %v515 = vld [vmem:[#allocation2 + $0x60] sm:$0xff]
        %v516 = vld [vmem:[#allocation2 + $0x68] sm:$0xff]
        %v517 = vld [vmem:[#allocation2 + $0x70] sm:$0xff]
        %v518 = vld [vmem:[#allocation2 + $0x78] sm:$0xff]
        %v519 = vld [vmem:[%s404] sm:$0xf]
        %v520 = vld [vmem:[%s404 + $0x4] sm:$0xf]
        %v521 = vld [vmem:[%s404 + $0x8] sm:$0xf]
        %v522 = vld [vmem:[%s404 + $0xc] sm:$0xf]
        %v523 = vld [vmem:[%s404 + $0x10] sm:$0xf]
        %v524 = vld [vmem:[%s404 + $0x14] sm:$0xf]
        %v525 = vld [vmem:[%s404 + $0x18] sm:$0xf]
        %v526 = vld [vmem:[%s404 + $0x1c] sm:$0xf]
        %v527 = vld [vmem:[%s404 + $0x20] sm:$0xf]
        %v528 = vld [vmem:[%s404 + $0x24] sm:$0xf]
        %v529 = vld [vmem:[%s404 + $0x28] sm:$0xf]
        %v530 = vld [vmem:[%s404 + $0x2c] sm:$0xf]
        %v531 = vld [vmem:[%s404 + $0x30] sm:$0xf]
        %v532 = vld [vmem:[%s404 + $0x34] sm:$0xf]
        %v533 = vld [vmem:[%s404 + $0x38] sm:$0xf]
        %v534 = vld [vmem:[%s404 + $0x3c] sm:$0xf]
        %v551 = vunpack.c.l.b16 %v519
        %v552 = vunpack.c.l.b16 %v520
        %v553 = vunpack.c.l.b16 %v521
        %v554 = vunpack.c.l.b16 %v522
        %v555 = vunpack.c.l.b16 %v523
        %v556 = vunpack.c.l.b16 %v524
        %v557 = vunpack.c.l.b16 %v525
        %v558 = vunpack.c.l.b16 %v526
        %v559 = vunpack.c.l.b16 %v527
        %v560 = vunpack.c.l.b16 %v528
        %v561 = vunpack.c.l.b16 %v529
        %v562 = vunpack.c.l.b16 %v530
        %v563 = vunpack.c.l.b16 %v531
        %v564 = vunpack.c.l.b16 %v532
        %v565 = vunpack.c.l.b16 %v533
        %v566 = vunpack.c.l.b16 %v534
        %v567 = vpack.c.b16 %v552, %v551
        %v568 = vpack.c.b16 %v554, %v553
        %v569 = vpack.c.b16 %v556, %v555
        %v570 = vpack.c.b16 %v558, %v557
        %v571 = vpack.c.b16 %v560, %v559
        %v572 = vpack.c.b16 %v562, %v561
        %v573 = vpack.c.b16 %v564, %v563
        %v574 = vpack.c.b16 %v566, %v565
        %v599 = vunpack.c.l.b16 %v487
        %v600 = vunpack.c.l.b16 %v488
        %v601 = vunpack.c.l.b16 %v489
        %v602 = vunpack.c.l.b16 %v490
        %v603 = vunpack.c.l.b16 %v491
        %v604 = vunpack.c.l.b16 %v492
        %v605 = vunpack.c.l.b16 %v493
        %v606 = vunpack.c.l.b16 %v494
        %v607 = vunpack.c.l.b16 %v495
        %v608 = vunpack.c.l.b16 %v496
        %v609 = vunpack.c.l.b16 %v497
        %v610 = vunpack.c.l.b16 %v498
        %v611 = vunpack.c.l.b16 %v499
        %v612 = vunpack.c.l.b16 %v500
        %v613 = vunpack.c.l.b16 %v501
        %v614 = vunpack.c.l.b16 %v502
        %v615 = vpack.c.b16 %v600, %v599
        %v616 = vpack.c.b16 %v602, %v601
        %v617 = vpack.c.b16 %v604, %v603
        %v618 = vpack.c.b16 %v606, %v605
        %v619 = vpack.c.b16 %v608, %v607
        %v620 = vpack.c.b16 %v610, %v609
        %v621 = vpack.c.b16 %v612, %v611
        %v622 = vpack.c.b16 %v614, %v613
        %631 = vmatprep.subr.bf16.mxu0 0
        %632 = vmatpush1.bf16.msra.mxu0 %v622
        %633 = vmatprep.subr.bf16.mxu0 0
        %634 = vmatpush1.bf16.msra.mxu0 %v621
        %635 = vmatprep.subr.bf16.mxu0 0
        %636 = vmatpush1.bf16.msra.mxu0 %v620
        %637 = vmatprep.subr.bf16.mxu0 0
        %638 = vmatpush1.bf16.msra.mxu0 %v619
        %639 = vmatprep.subr.bf16.mxu0 0
        %640 = vmatpush1.bf16.msra.mxu0 %v618
        %641 = vmatprep.subr.bf16.mxu0 0
        %642 = vmatpush1.bf16.msra.mxu0 %v617
        %643 = vmatprep.subr.bf16.mxu0 0
        %644 = vmatpush1.bf16.msra.mxu0 %v616
        %645 = vmatprep.subr.bf16.mxu0 0
        %646 = vmatpush1.bf16.msra.mxu0 %v615
        %647 = vmatprep.subr.bf16.mxu0 0
        %648 = vmatpush2.bf16.msra.mxu0 0
        %649 = vmatprep.subr.bf16.mxu0 0
        %650 = vmatpush2.bf16.msra.mxu0 0
        %651 = vmatprep.subr.bf16.mxu0 0
        %652 = vmatpush2.bf16.msra.mxu0 0
        %653 = vmatprep.subr.bf16.mxu0 0
        %654 = vmatpush2.bf16.msra.mxu0 0
        %655 = vmatprep.subr.bf16.mxu0 0
        %656 = vmatpush2.bf16.msra.mxu0 0
        %657 = vmatprep.subr.bf16.mxu0 0
        %658 = vmatpush2.bf16.msra.mxu0 0
        %659 = vmatprep.subr.bf16.mxu0 0
        %660 = vmatpush2.bf16.msra.mxu0 0
        %661 = vmatprep.subr.bf16.mxu0 0
        %662 = vmatpush2.bf16.msra.mxu0 0
        %663 = vmatprep.mubr.bf16.mxu0 0
        %664 = vmatmul.mubr.bf16.gmra.mxu0 %v567
        %v665 = vpop.f32.mrf.mxu0
        %v666 = vadd.f32 0.0, %v665
        %v667 = vpop.f32.mrf.mxu0
        %v668 = vpop.f32.mrf.mxu0
        %v669 = vadd.f32 0.0, %v668
        %v670 = vpop.f32.mrf.mxu0
        %671 = vmatprep.mubr.bf16.mxu0 0
        %672 = vmatmul.mubr.bf16.gmra.mxu0 %v568
        %v673 = vpop.f32.mrf.mxu0
        %v674 = vadd.f32 0.0, %v673
        %v675 = vpop.f32.mrf.mxu0
        %v676 = vpop.f32.mrf.mxu0
        %v677 = vadd.f32 0.0, %v676
        %v678 = vpop.f32.mrf.mxu0
        %679 = vmatprep.mubr.bf16.mxu0 0
        %680 = vmatmul.mubr.bf16.gmra.mxu0 %v569
        %v681 = vpop.f32.mrf.mxu0
        %v682 = vadd.f32 0.0, %v681
        %v683 = vpop.f32.mrf.mxu0
        %v684 = vpop.f32.mrf.mxu0
        %v685 = vadd.f32 0.0, %v684
        %v686 = vpop.f32.mrf.mxu0
        %687 = vmatprep.mubr.bf16.mxu0 0
        %688 = vmatmul.mubr.bf16.gmra.mxu0 %v570
        %v689 = vpop.f32.mrf.mxu0
        %v690 = vadd.f32 0.0, %v689
        %v691 = vpop.f32.mrf.mxu0
        %v692 = vpop.f32.mrf.mxu0
        %v693 = vadd.f32 0.0, %v692
        %v694 = vpop.f32.mrf.mxu0
        %695 = vmatprep.mubr.bf16.mxu0 0
        %696 = vmatmul.mubr.bf16.gmra.mxu0 %v571
        %v697 = vpop.f32.mrf.mxu0
        %v698 = vadd.f32 0.0, %v697
        %v699 = vpop.f32.mrf.mxu0
        %v700 = vpop.f32.mrf.mxu0
        %v701 = vadd.f32 0.0, %v700
        %v702 = vpop.f32.mrf.mxu0
        %703 = vmatprep.mubr.bf16.mxu0 0
        %704 = vmatmul.mubr.bf16.gmra.mxu0 %v572
        %v705 = vpop.f32.mrf.mxu0
        %v706 = vadd.f32 0.0, %v705
        %v707 = vpop.f32.mrf.mxu0
        %v708 = vpop.f32.mrf.mxu0
        %v709 = vadd.f32 0.0, %v708
        %v710 = vpop.f32.mrf.mxu0
        %711 = vmatprep.mubr.bf16.mxu0 0
        %712 = vmatmul.mubr.bf16.gmra.mxu0 %v573
        %v713 = vpop.f32.mrf.mxu0
        %v714 = vadd.f32 0.0, %v713
        %v715 = vpop.f32.mrf.mxu0
        %v716 = vpop.f32.mrf.mxu0
        %v717 = vadd.f32 0.0, %v716
        %v718 = vpop.f32.mrf.mxu0
        %719 = vmatprep.mubr.bf16.mxu0 0
        %720 = vmatmul.mubr.bf16.gmra.mxu0 %v574
        %v721 = vpop.f32.mrf.mxu0
        %v722 = vadd.f32 0.0, %v721
        %v723 = vpop.f32.mrf.mxu0
        %v724 = vpop.f32.mrf.mxu0
        %v725 = vadd.f32 0.0, %v724
        %v726 = vpop.f32.mrf.mxu0
        %727 = vdwg.mxu0
        %v728 = vadd.f32 %v503, %v666
        %v729 = vadd.f32 %v504, %v669
        %v730 = vadd.f32 %v505, %v674
        %v731 = vadd.f32 %v506, %v677
        %v732 = vadd.f32 %v507, %v682
        %v733 = vadd.f32 %v508, %v685
        %v734 = vadd.f32 %v509, %v690
        %v735 = vadd.f32 %v510, %v693
        %v736 = vadd.f32 %v511, %v698
        %v737 = vadd.f32 %v512, %v701
        %v738 = vadd.f32 %v513, %v706
        %v739 = vadd.f32 %v514, %v709
        %v740 = vadd.f32 %v515, %v714
        %v741 = vadd.f32 %v516, %v717
        %v742 = vadd.f32 %v517, %v722
        %v743 = vadd.f32 %v518, %v725
        %744 = vst [vmem:[#allocation2] sm:$0xff] %v728
        %745 = vst [vmem:[#allocation2 + $0x8] sm:$0xff] %v729
        %746 = vst [vmem:[#allocation2 + $0x10] sm:$0xff] %v730
        %747 = vst [vmem:[#allocation2 + $0x18] sm:$0xff] %v731
        %748 = vst [vmem:[#allocation2 + $0x20] sm:$0xff] %v732
        %749 = vst [vmem:[#allocation2 + $0x28] sm:$0xff] %v733
        %750 = vst [vmem:[#allocation2 + $0x30] sm:$0xff] %v734
        %751 = vst [vmem:[#allocation2 + $0x38] sm:$0xff] %v735
        %752 = vst [vmem:[#allocation2 + $0x40] sm:$0xff] %v736
        %753 = vst [vmem:[#allocation2 + $0x48] sm:$0xff] %v737
        %754 = vst [vmem:[#allocation2 + $0x50] sm:$0xff] %v738
        %755 = vst [vmem:[#allocation2 + $0x58] sm:$0xff] %v739
        %756 = vst [vmem:[#allocation2 + $0x60] sm:$0xff] %v740
        %757 = vst [vmem:[#allocation2 + $0x68] sm:$0xff] %v741
        %758 = vst [vmem:[#allocation2 + $0x70] sm:$0xff] %v742
        %759 = vst [vmem:[#allocation2 + $0x78] sm:$0xff] %v743
        %p760 = scmp.eq.s32.totalorder %s25, 2
        // Predicated region
        $region94: #{gnn_forward.3} parent=84 // pred_check
          %p761 = pneg %p760
        $region95: #{gnn_forward.3} parent=84 // pred_check_branch
          %763 = sbr.rel (%p761) target = $region97
        $region96: #{gnn_forward.3} parent=84 // pred_region
          %v764 = vld [vmem:[#allocation2] sm:$0xff]
          %v765 = vld [vmem:[#allocation2 + $0x8] sm:$0xff]
          %v766 = vld [vmem:[#allocation2 + $0x10] sm:$0xff]
          %v767 = vld [vmem:[#allocation2 + $0x18] sm:$0xff]
          %v768 = vld [vmem:[#allocation2 + $0x20] sm:$0xff]
          %v769 = vld [vmem:[#allocation2 + $0x28] sm:$0xff]
          %v770 = vld [vmem:[#allocation2 + $0x30] sm:$0xff]
          %v771 = vld [vmem:[#allocation2 + $0x38] sm:$0xff]
          %v772 = vld [vmem:[#allocation2 + $0x40] sm:$0xff]
          %v773 = vld [vmem:[#allocation2 + $0x48] sm:$0xff]
          %v774 = vld [vmem:[#allocation2 + $0x50] sm:$0xff]
          %v775 = vld [vmem:[#allocation2 + $0x58] sm:$0xff]
          %v776 = vld [vmem:[#allocation2 + $0x60] sm:$0xff]
          %v777 = vld [vmem:[#allocation2 + $0x68] sm:$0xff]
          %v778 = vld [vmem:[#allocation2 + $0x70] sm:$0xff]
          %v779 = vld [vmem:[#allocation2 + $0x78] sm:$0xff]
          %v780 = vpack.c.bf16 %v765, %v764
          %v781 = vpack.c.bf16 %v767, %v766
          %v782 = vpack.c.bf16 %v769, %v768
          %v783 = vpack.c.bf16 %v771, %v770
          %v784 = vpack.c.bf16 %v773, %v772
          %v785 = vpack.c.bf16 %v775, %v774
          %v786 = vpack.c.bf16 %v777, %v776
          %v787 = vpack.c.bf16 %v779, %v778
          %v788 = vld [vmem:[%s3] sm:$0xf]
          %v789 = vld [vmem:[%s3 + $0x4] sm:$0xf]
          %v790 = vld [vmem:[%s3 + $0x8] sm:$0xf]
          %v791 = vld [vmem:[%s3 + $0xc] sm:$0xf]
          %v792 = vld [vmem:[%s3 + $0x10] sm:$0xf]
          %v793 = vld [vmem:[%s3 + $0x14] sm:$0xf]
          %v794 = vld [vmem:[%s3 + $0x18] sm:$0xf]
          %v795 = vld [vmem:[%s3 + $0x1c] sm:$0xf]
          %v796 = vld [vmem:[%s3 + $0x20] sm:$0xf]
          %v797 = vld [vmem:[%s3 + $0x24] sm:$0xf]
          %v798 = vld [vmem:[%s3 + $0x28] sm:$0xf]
          %v799 = vld [vmem:[%s3 + $0x2c] sm:$0xf]
          %v800 = vld [vmem:[%s3 + $0x30] sm:$0xf]
          %v801 = vld [vmem:[%s3 + $0x34] sm:$0xf]
          %v802 = vld [vmem:[%s3 + $0x38] sm:$0xf]
          %v803 = vld [vmem:[%s3 + $0x3c] sm:$0xf]
          %v804 = vld [vmem:[%s4] sm:$0x1]
          %v806 = vlaneseq
          %v807 = vshrl.u32 %v806, 7
          %v808 = vsub.s32 0, %v807
          %v809 = vrot.slane %v804, %v808
          %v827 = vunpack.c.l.b16 %v788
          %v828 = vunpack.c.l.b16 %v789
          %v829 = vunpack.c.l.b16 %v790
          %v830 = vunpack.c.l.b16 %v791
          %v831 = vunpack.c.l.b16 %v792
          %v832 = vunpack.c.l.b16 %v793
          %v833 = vunpack.c.l.b16 %v794
          %v834 = vunpack.c.l.b16 %v795
          %v835 = vunpack.c.l.b16 %v796
          %v836 = vunpack.c.l.b16 %v797
          %v837 = vunpack.c.l.b16 %v798
          %v838 = vunpack.c.l.b16 %v799
          %v839 = vunpack.c.l.b16 %v800
          %v840 = vunpack.c.l.b16 %v801
          %v841 = vunpack.c.l.b16 %v802
          %v842 = vunpack.c.l.b16 %v803
          %v843 = vpack.c.b16 %v828, %v827
          %v844 = vpack.c.b16 %v830, %v829
          %v845 = vpack.c.b16 %v832, %v831
          %v846 = vpack.c.b16 %v834, %v833
          %v847 = vpack.c.b16 %v836, %v835
          %v848 = vpack.c.b16 %v838, %v837
          %v849 = vpack.c.b16 %v840, %v839
          %v850 = vpack.c.b16 %v842, %v841
          %859 = vmatprep.subr.bf16.mxu0 0
          %860 = vmatpush1.bf16.msra.mxu0 %v850
          %861 = vmatprep.subr.bf16.mxu0 0
          %862 = vmatpush1.bf16.msra.mxu0 %v849
          %863 = vmatprep.subr.bf16.mxu0 0
          %864 = vmatpush1.bf16.msra.mxu0 %v848
          %865 = vmatprep.subr.bf16.mxu0 0
          %866 = vmatpush1.bf16.msra.mxu0 %v847
          %867 = vmatprep.subr.bf16.mxu0 0
          %868 = vmatpush1.bf16.msra.mxu0 %v846
          %869 = vmatprep.subr.bf16.mxu0 0
          %870 = vmatpush1.bf16.msra.mxu0 %v845
          %871 = vmatprep.subr.bf16.mxu0 0
          %872 = vmatpush1.bf16.msra.mxu0 %v844
          %873 = vmatprep.subr.bf16.mxu0 0
          %874 = vmatpush1.bf16.msra.mxu0 %v843
          %875 = vmatprep.subr.bf16.mxu0 0
          %876 = vmatpush2.bf16.msra.mxu0 0
          %877 = vmatprep.subr.bf16.mxu0 0
          %878 = vmatpush2.bf16.msra.mxu0 0
          %879 = vmatprep.subr.bf16.mxu0 0
          %880 = vmatpush2.bf16.msra.mxu0 0
          %881 = vmatprep.subr.bf16.mxu0 0
          %882 = vmatpush2.bf16.msra.mxu0 0
          %883 = vmatprep.subr.bf16.mxu0 0
          %884 = vmatpush2.bf16.msra.mxu0 0
          %885 = vmatprep.subr.bf16.mxu0 0
          %886 = vmatpush2.bf16.msra.mxu0 0
          %887 = vmatprep.subr.bf16.mxu0 0
          %888 = vmatpush2.bf16.msra.mxu0 0
          %889 = vmatprep.subr.bf16.mxu0 0
          %890 = vmatpush2.bf16.msra.mxu0 0
          %891 = vmatprep.mubr.bf16.mxu0 0
          %892 = vmatmul.mubr.bf16.gmra.mxu0 %v780
          %v893 = vpop.f32.mrf.mxu0
          %v894 = vadd.f32 %v809, %v893
          %v895 = vpop.f32.mrf.mxu0
          %v896 = vpop.f32.mrf.mxu0
          %v897 = vadd.f32 %v809, %v896
          %v898 = vpop.f32.mrf.mxu0
          %899 = vmatprep.mubr.bf16.mxu0 0
          %900 = vmatmul.mubr.bf16.gmra.mxu0 %v781
          %v901 = vpop.f32.mrf.mxu0
          %v902 = vadd.f32 %v809, %v901
          %v903 = vpop.f32.mrf.mxu0
          %v904 = vpop.f32.mrf.mxu0
          %v905 = vadd.f32 %v809, %v904
          %v906 = vpop.f32.mrf.mxu0
          %907 = vmatprep.mubr.bf16.mxu0 0
          %908 = vmatmul.mubr.bf16.gmra.mxu0 %v782
          %v909 = vpop.f32.mrf.mxu0
          %v910 = vadd.f32 %v809, %v909
          %v911 = vpop.f32.mrf.mxu0
          %v912 = vpop.f32.mrf.mxu0
          %v913 = vadd.f32 %v809, %v912
          %v914 = vpop.f32.mrf.mxu0
          %915 = vmatprep.mubr.bf16.mxu0 0
          %916 = vmatmul.mubr.bf16.gmra.mxu0 %v783
          %v917 = vpop.f32.mrf.mxu0
          %v918 = vadd.f32 %v809, %v917
          %v919 = vpop.f32.mrf.mxu0
          %v920 = vpop.f32.mrf.mxu0
          %v921 = vadd.f32 %v809, %v920
          %v922 = vpop.f32.mrf.mxu0
          %923 = vmatprep.mubr.bf16.mxu0 0
          %924 = vmatmul.mubr.bf16.gmra.mxu0 %v784
          %v925 = vpop.f32.mrf.mxu0
          %v926 = vadd.f32 %v809, %v925
          %v927 = vpop.f32.mrf.mxu0
          %v928 = vpop.f32.mrf.mxu0
          %v929 = vadd.f32 %v809, %v928
          %v930 = vpop.f32.mrf.mxu0
          %931 = vmatprep.mubr.bf16.mxu0 0
          %932 = vmatmul.mubr.bf16.gmra.mxu0 %v785
          %v933 = vpop.f32.mrf.mxu0
          %v934 = vadd.f32 %v809, %v933
          %v935 = vpop.f32.mrf.mxu0
          %v936 = vpop.f32.mrf.mxu0
          %v937 = vadd.f32 %v809, %v936
          %v938 = vpop.f32.mrf.mxu0
          %939 = vmatprep.mubr.bf16.mxu0 0
          %940 = vmatmul.mubr.bf16.gmra.mxu0 %v786
          %v941 = vpop.f32.mrf.mxu0
          %v942 = vadd.f32 %v809, %v941
          %v943 = vpop.f32.mrf.mxu0
          %v944 = vpop.f32.mrf.mxu0
          %v945 = vadd.f32 %v809, %v944
          %v946 = vpop.f32.mrf.mxu0
          %947 = vmatprep.mubr.bf16.mxu0 0
          %948 = vmatmul.mubr.bf16.gmra.mxu0 %v787
          %v949 = vpop.f32.mrf.mxu0
          %v950 = vadd.f32 %v809, %v949
          %v951 = vpop.f32.mrf.mxu0
          %v952 = vpop.f32.mrf.mxu0
          %v953 = vadd.f32 %v809, %v952
          %v954 = vpop.f32.mrf.mxu0
          %955 = vdwg.mxu0
          %v956 = vpack.c.bf16 %v897, %v894
          %v957 = vpack.c.bf16 %v905, %v902
          %v958 = vpack.c.bf16 %v913, %v910
          %v959 = vpack.c.bf16 %v921, %v918
          %v960 = vpack.c.bf16 %v929, %v926
          %v961 = vpack.c.bf16 %v937, %v934
          %v962 = vpack.c.bf16 %v945, %v942
          %v963 = vpack.c.bf16 %v953, %v950
          %v964 = vld [vmem:[%s5] sm:$0xf]
          %v965 = vld [vmem:[%s5 + $0x4] sm:$0xf]
          %v966 = vld [vmem:[%s5 + $0x8] sm:$0xf]
          %v967 = vld [vmem:[%s5 + $0xc] sm:$0xf]
          %v968 = vld [vmem:[%s5 + $0x10] sm:$0xf]
          %v969 = vld [vmem:[%s5 + $0x14] sm:$0xf]
          %v970 = vld [vmem:[%s5 + $0x18] sm:$0xf]
          %v971 = vld [vmem:[%s5 + $0x1c] sm:$0xf]
          %v972 = vld [vmem:[%s5 + $0x20] sm:$0xf]
          %v973 = vld [vmem:[%s5 + $0x24] sm:$0xf]
          %v974 = vld [vmem:[%s5 + $0x28] sm:$0xf]
          %v975 = vld [vmem:[%s5 + $0x2c] sm:$0xf]
          %v976 = vld [vmem:[%s5 + $0x30] sm:$0xf]
          %v977 = vld [vmem:[%s5 + $0x34] sm:$0xf]
          %v978 = vld [vmem:[%s5 + $0x38] sm:$0xf]
          %v979 = vld [vmem:[%s5 + $0x3c] sm:$0xf]
          %v980 = vld [vmem:[%s6] sm:$0x1]
          %v982 = vlaneseq
          %v983 = vshrl.u32 %v982, 7
          %v984 = vsub.s32 0, %v983
          %v985 = vrot.slane %v980, %v984
          %v1003 = vunpack.c.l.b16 %v964
          %v1004 = vunpack.c.l.b16 %v965
          %v1005 = vunpack.c.l.b16 %v966
          %v1006 = vunpack.c.l.b16 %v967
          %v1007 = vunpack.c.l.b16 %v968
          %v1008 = vunpack.c.l.b16 %v969
          %v1009 = vunpack.c.l.b16 %v970
          %v1010 = vunpack.c.l.b16 %v971
          %v1011 = vunpack.c.l.b16 %v972
          %v1012 = vunpack.c.l.b16 %v973
          %v1013 = vunpack.c.l.b16 %v974
          %v1014 = vunpack.c.l.b16 %v975
          %v1015 = vunpack.c.l.b16 %v976
          %v1016 = vunpack.c.l.b16 %v977
          %v1017 = vunpack.c.l.b16 %v978
          %v1018 = vunpack.c.l.b16 %v979
          %v1019 = vpack.c.b16 %v1004, %v1003
          %v1020 = vpack.c.b16 %v1006, %v1005
          %v1021 = vpack.c.b16 %v1008, %v1007
          %v1022 = vpack.c.b16 %v1010, %v1009
          %v1023 = vpack.c.b16 %v1012, %v1011
          %v1024 = vpack.c.b16 %v1014, %v1013
          %v1025 = vpack.c.b16 %v1016, %v1015
          %v1026 = vpack.c.b16 %v1018, %v1017
          %1035 = vmatprep.subr.bf16.mxu0 0
          %1036 = vmatpush1.bf16.msra.mxu0 %v1026
          %1037 = vmatprep.subr.bf16.mxu0 0
          %1038 = vmatpush1.bf16.msra.mxu0 %v1025
          %1039 = vmatprep.subr.bf16.mxu0 0
          %1040 = vmatpush1.bf16.msra.mxu0 %v1024
          %1041 = vmatprep.subr.bf16.mxu0 0
          %1042 = vmatpush1.bf16.msra.mxu0 %v1023
          %1043 = vmatprep.subr.bf16.mxu0 0
          %1044 = vmatpush1.bf16.msra.mxu0 %v1022
          %1045 = vmatprep.subr.bf16.mxu0 0
          %1046 = vmatpush1.bf16.msra.mxu0 %v1021
          %1047 = vmatprep.subr.bf16.mxu0 0
          %1048 = vmatpush1.bf16.msra.mxu0 %v1020
          %1049 = vmatprep.subr.bf16.mxu0 0
          %1050 = vmatpush1.bf16.msra.mxu0 %v1019
          %1051 = vmatprep.subr.bf16.mxu0 0
          %1052 = vmatpush2.bf16.msra.mxu0 0
          %1053 = vmatprep.subr.bf16.mxu0 0
          %1054 = vmatpush2.bf16.msra.mxu0 0
          %1055 = vmatprep.subr.bf16.mxu0 0
          %1056 = vmatpush2.bf16.msra.mxu0 0
          %1057 = vmatprep.subr.bf16.mxu0 0
          %1058 = vmatpush2.bf16.msra.mxu0 0
          %1059 = vmatprep.subr.bf16.mxu0 0
          %1060 = vmatpush2.bf16.msra.mxu0 0
          %1061 = vmatprep.subr.bf16.mxu0 0
          %1062 = vmatpush2.bf16.msra.mxu0 0
          %1063 = vmatprep.subr.bf16.mxu0 0
          %1064 = vmatpush2.bf16.msra.mxu0 0
          %1065 = vmatprep.subr.bf16.mxu0 0
          %1066 = vmatpush2.bf16.msra.mxu0 0
          %1067 = vmatprep.mubr.bf16.mxu0 0
          %1068 = vmatmul.mubr.bf16.gmra.mxu0 %v956
          %v1069 = vpop.f32.mrf.mxu0
          %v1070 = vadd.f32 %v985, %v1069
          %v1071 = vpop.f32.mrf.mxu0
          %v1072 = vpop.f32.mrf.mxu0
          %v1073 = vadd.f32 %v985, %v1072
          %v1074 = vpop.f32.mrf.mxu0
          %1075 = vmatprep.mubr.bf16.mxu0 0
          %1076 = vmatmul.mubr.bf16.gmra.mxu0 %v957
          %v1077 = vpop.f32.mrf.mxu0
          %v1078 = vadd.f32 %v985, %v1077
          %v1079 = vpop.f32.mrf.mxu0
          %v1080 = vpop.f32.mrf.mxu0
          %v1081 = vadd.f32 %v985, %v1080
          %v1082 = vpop.f32.mrf.mxu0
          %1083 = vmatprep.mubr.bf16.mxu0 0
          %1084 = vmatmul.mubr.bf16.gmra.mxu0 %v958
          %v1085 = vpop.f32.mrf.mxu0
          %v1086 = vadd.f32 %v985, %v1085
          %v1087 = vpop.f32.mrf.mxu0
          %v1088 = vpop.f32.mrf.mxu0
          %v1089 = vadd.f32 %v985, %v1088
          %v1090 = vpop.f32.mrf.mxu0
          %1091 = vmatprep.mubr.bf16.mxu0 0
          %1092 = vmatmul.mubr.bf16.gmra.mxu0 %v959
          %v1093 = vpop.f32.mrf.mxu0
          %v1094 = vadd.f32 %v985, %v1093
          %v1095 = vpop.f32.mrf.mxu0
          %v1096 = vpop.f32.mrf.mxu0
          %v1097 = vadd.f32 %v985, %v1096
          %v1098 = vpop.f32.mrf.mxu0
          %1099 = vmatprep.mubr.bf16.mxu0 0
          %1100 = vmatmul.mubr.bf16.gmra.mxu0 %v960
          %v1101 = vpop.f32.mrf.mxu0
          %v1102 = vadd.f32 %v985, %v1101
          %v1103 = vpop.f32.mrf.mxu0
          %v1104 = vpop.f32.mrf.mxu0
          %v1105 = vadd.f32 %v985, %v1104
          %v1106 = vpop.f32.mrf.mxu0
          %1107 = vmatprep.mubr.bf16.mxu0 0
          %1108 = vmatmul.mubr.bf16.gmra.mxu0 %v961
          %v1109 = vpop.f32.mrf.mxu0
          %v1110 = vadd.f32 %v985, %v1109
          %v1111 = vpop.f32.mrf.mxu0
          %v1112 = vpop.f32.mrf.mxu0
          %v1113 = vadd.f32 %v985, %v1112
          %v1114 = vpop.f32.mrf.mxu0
          %1115 = vmatprep.mubr.bf16.mxu0 0
          %1116 = vmatmul.mubr.bf16.gmra.mxu0 %v962
          %v1117 = vpop.f32.mrf.mxu0
          %v1118 = vadd.f32 %v985, %v1117
          %v1119 = vpop.f32.mrf.mxu0
          %v1120 = vpop.f32.mrf.mxu0
          %v1121 = vadd.f32 %v985, %v1120
          %v1122 = vpop.f32.mrf.mxu0
          %1123 = vmatprep.mubr.bf16.mxu0 0
          %1124 = vmatmul.mubr.bf16.gmra.mxu0 %v963
          %v1125 = vpop.f32.mrf.mxu0
          %v1126 = vadd.f32 %v985, %v1125
          %v1127 = vpop.f32.mrf.mxu0
          %v1128 = vpop.f32.mrf.mxu0
          %v1129 = vadd.f32 %v985, %v1128
          %v1130 = vpop.f32.mrf.mxu0
          %1131 = vdwg.mxu0
          %1132 = vst [vmem:[%s455] sm:$0xff] %v1070
          %1133 = vst [vmem:[%s455 + $0x8] sm:$0xff] %v1073
          %1134 = vst [vmem:[%s455 + $0x10] sm:$0xff] %v1078
          %1135 = vst [vmem:[%s455 + $0x18] sm:$0xff] %v1081
          %1136 = vst [vmem:[%s455 + $0x20] sm:$0xff] %v1086
          %1137 = vst [vmem:[%s455 + $0x28] sm:$0xff] %v1089
          %1138 = vst [vmem:[%s455 + $0x30] sm:$0xff] %v1094
          %1139 = vst [vmem:[%s455 + $0x38] sm:$0xff] %v1097
          %1140 = vst [vmem:[%s455 + $0x40] sm:$0xff] %v1102
          %1141 = vst [vmem:[%s455 + $0x48] sm:$0xff] %v1105
          %1142 = vst [vmem:[%s455 + $0x50] sm:$0xff] %v1110
          %1143 = vst [vmem:[%s455 + $0x58] sm:$0xff] %v1113
          %1144 = vst [vmem:[%s455 + $0x60] sm:$0xff] %v1118
          %1145 = vst [vmem:[%s455 + $0x68] sm:$0xff] %v1121
          %1146 = vst [vmem:[%s455 + $0x70] sm:$0xff] %v1126
          %1147 = vst [vmem:[%s455 + $0x78] sm:$0xff] %v1129
          %v1148 = vld [vmem:[%s448] sm:$0xff]
          %v1149 = vld [vmem:[%s448 + $0x8] sm:$0xff]
          %v1150 = vld [vmem:[%s448 + $0x10] sm:$0xff]
          %v1151 = vld [vmem:[%s448 + $0x18] sm:$0xff]
          %v1152 = vld [vmem:[%s448 + $0x20] sm:$0xff]
          %v1153 = vld [vmem:[%s448 + $0x28] sm:$0xff]
          %v1154 = vld [vmem:[%s448 + $0x30] sm:$0xff]
          %v1155 = vld [vmem:[%s448 + $0x38] sm:$0xff]
          %v1156 = vld [vmem:[%s448 + $0x40] sm:$0xff]
          %v1157 = vld [vmem:[%s448 + $0x48] sm:$0xff]
          %v1158 = vld [vmem:[%s448 + $0x50] sm:$0xff]
          %v1159 = vld [vmem:[%s448 + $0x58] sm:$0xff]
          %v1160 = vld [vmem:[%s448 + $0x60] sm:$0xff]
          %v1161 = vld [vmem:[%s448 + $0x68] sm:$0xff]
          %v1162 = vld [vmem:[%s448 + $0x70] sm:$0xff]
          %v1163 = vld [vmem:[%s448 + $0x78] sm:$0xff]
          %1164 = vset.pattern.permute.xlu0 0
          %1165 = vperm.xlu0 %1164, %v1148
          %v1166 = vpop.permute.xlu0 %1165
          %1167 = vset.pattern.permute.xlu0 0
          %1168 = vperm.xlu0 %1167, %v1149
          %v1169 = vpop.permute.xlu0 %1168
          %1170 = vset.pattern.permute.xlu0 0
          %1171 = vperm.xlu0 %1170, %v1150
          %v1172 = vpop.permute.xlu0 %1171
          %1173 = vset.pattern.permute.xlu0 0
          %1174 = vperm.xlu0 %1173, %v1151
          %v1175 = vpop.permute.xlu0 %1174
          %1176 = vset.pattern.permute.xlu0 0
          %1177 = vperm.xlu0 %1176, %v1152
          %v1178 = vpop.permute.xlu0 %1177
          %1179 = vset.pattern.permute.xlu0 0
          %1180 = vperm.xlu0 %1179, %v1153
          %v1181 = vpop.permute.xlu0 %1180
          %1182 = vset.pattern.permute.xlu0 0
          %1183 = vperm.xlu0 %1182, %v1154
          %v1184 = vpop.permute.xlu0 %1183
          %1185 = vset.pattern.permute.xlu0 0
          %1186 = vperm.xlu0 %1185, %v1155
          %v1187 = vpop.permute.xlu0 %1186
          %1188 = vset.pattern.permute.xlu0 0
          %1189 = vperm.xlu0 %1188, %v1156
          %v1190 = vpop.permute.xlu0 %1189
          %1191 = vset.pattern.permute.xlu0 0
          %1192 = vperm.xlu0 %1191, %v1157
          %v1193 = vpop.permute.xlu0 %1192
          %1194 = vset.pattern.permute.xlu0 0
          %1195 = vperm.xlu0 %1194, %v1158
          %v1196 = vpop.permute.xlu0 %1195
          %1197 = vset.pattern.permute.xlu0 0
          %1198 = vperm.xlu0 %1197, %v1159
          %v1199 = vpop.permute.xlu0 %1198
          %1200 = vset.pattern.permute.xlu0 0
          %1201 = vperm.xlu0 %1200, %v1160
          %v1202 = vpop.permute.xlu0 %1201
          %1203 = vset.pattern.permute.xlu0 0
          %1204 = vperm.xlu0 %1203, %v1161
          %v1205 = vpop.permute.xlu0 %1204
          %1206 = vset.pattern.permute.xlu0 0
          %1207 = vperm.xlu0 %1206, %v1162
          %v1208 = vpop.permute.xlu0 %1207
          %1209 = vset.pattern.permute.xlu0 0
          %1210 = vperm.xlu0 %1209, %v1163
          %v1211 = vpop.permute.xlu0 %1210
          %vm1212 = vcmp.eq.s32.totalorder %v1166, 0
          %vm1213 = vcmp.eq.s32.totalorder %v1169, 0
          %vm1214 = vcmp.eq.s32.totalorder %v1172, 0
          %vm1215 = vcmp.eq.s32.totalorder %v1175, 0
          %vm1216 = vcmp.eq.s32.totalorder %v1178, 0
          %vm1217 = vcmp.eq.s32.totalorder %v1181, 0
          %vm1218 = vcmp.eq.s32.totalorder %v1184, 0
          %vm1219 = vcmp.eq.s32.totalorder %v1187, 0
          %vm1220 = vcmp.eq.s32.totalorder %v1190, 0
          %vm1221 = vcmp.eq.s32.totalorder %v1193, 0
          %vm1222 = vcmp.eq.s32.totalorder %v1196, 0
          %vm1223 = vcmp.eq.s32.totalorder %v1199, 0
          %vm1224 = vcmp.eq.s32.totalorder %v1202, 0
          %vm1225 = vcmp.eq.s32.totalorder %v1205, 0
          %vm1226 = vcmp.eq.s32.totalorder %v1208, 0
          %vm1227 = vcmp.eq.s32.totalorder %v1211, 0
          %v1228 = vsel %vm1212, %v894, -3e+38
          %v1229 = vsel %vm1213, %v897, -3e+38
          %v1230 = vsel %vm1214, %v902, -3e+38
          %v1231 = vsel %vm1215, %v905, -3e+38
          %v1232 = vsel %vm1216, %v910, -3e+38
          %v1233 = vsel %vm1217, %v913, -3e+38
          %v1234 = vsel %vm1218, %v918, -3e+38
          %v1235 = vsel %vm1219, %v921, -3e+38
          %v1236 = vsel %vm1220, %v926, -3e+38
          %v1237 = vsel %vm1221, %v929, -3e+38
          %v1238 = vsel %vm1222, %v934, -3e+38
          %v1239 = vsel %vm1223, %v937, -3e+38
          %v1240 = vsel %vm1224, %v942, -3e+38
          %v1241 = vsel %vm1225, %v945, -3e+38
          %v1242 = vsel %vm1226, %v950, -3e+38
          %v1243 = vsel %vm1227, %v953, -3e+38
          %v1244 = vmax.f32 %v1228, %v1232
          %v1245 = vmax.f32 %v1229, %v1233
          %v1246 = vmax.f32 %v1230, %v1234
          %v1247 = vmax.f32 %v1231, %v1235
          %v1248 = vmax.f32 %v1244, %v1236
          %v1249 = vmax.f32 %v1245, %v1237
          %v1250 = vmax.f32 %v1246, %v1238
          %v1251 = vmax.f32 %v1247, %v1239
          %v1252 = vmax.f32 %v1248, %v1240
          %v1253 = vmax.f32 %v1249, %v1241
          %v1254 = vmax.f32 %v1250, %v1242
          %v1255 = vmax.f32 %v1251, %v1243
          %v1256 = vmax.f32 %v1252, %v1253
          %v1257 = vmax.f32 %v1254, %v1255
          %v1258 = vmax.f32 %v1256, %v1257
          %v1259 = vrot.slane %v1258, 4
          %v1260 = vmax.f32 %v1258, %v1259
          %v1261 = vrot.slane %v1260, 2
          %v1262 = vmax.f32 %v1260, %v1261
          %v1263 = vrot.slane %v1262, 1
          %v1264 = vmax.f32 %v1262, %v1263
          %vm1265 = vcmp.eq.s32.totalorder %v1166, 1
          %vm1266 = vcmp.eq.s32.totalorder %v1169, 1
          %vm1267 = vcmp.eq.s32.totalorder %v1172, 1
          %vm1268 = vcmp.eq.s32.totalorder %v1175, 1
          %vm1269 = vcmp.eq.s32.totalorder %v1178, 1
          %vm1270 = vcmp.eq.s32.totalorder %v1181, 1
          %vm1271 = vcmp.eq.s32.totalorder %v1184, 1
          %vm1272 = vcmp.eq.s32.totalorder %v1187, 1
          %vm1273 = vcmp.eq.s32.totalorder %v1190, 1
          %vm1274 = vcmp.eq.s32.totalorder %v1193, 1
          %vm1275 = vcmp.eq.s32.totalorder %v1196, 1
          %vm1276 = vcmp.eq.s32.totalorder %v1199, 1
          %vm1277 = vcmp.eq.s32.totalorder %v1202, 1
          %vm1278 = vcmp.eq.s32.totalorder %v1205, 1
          %vm1279 = vcmp.eq.s32.totalorder %v1208, 1
          %vm1280 = vcmp.eq.s32.totalorder %v1211, 1
          %v1281 = vsel %vm1265, %v894, -3e+38
          %v1282 = vsel %vm1266, %v897, -3e+38
          %v1283 = vsel %vm1267, %v902, -3e+38
          %v1284 = vsel %vm1268, %v905, -3e+38
          %v1285 = vsel %vm1269, %v910, -3e+38
          %v1286 = vsel %vm1270, %v913, -3e+38
          %v1287 = vsel %vm1271, %v918, -3e+38
          %v1288 = vsel %vm1272, %v921, -3e+38
          %v1289 = vsel %vm1273, %v926, -3e+38
          %v1290 = vsel %vm1274, %v929, -3e+38
          %v1291 = vsel %vm1275, %v934, -3e+38
          %v1292 = vsel %vm1276, %v937, -3e+38
          %v1293 = vsel %vm1277, %v942, -3e+38
          %v1294 = vsel %vm1278, %v945, -3e+38
          %v1295 = vsel %vm1279, %v950, -3e+38
          %v1296 = vsel %vm1280, %v953, -3e+38
          %v1297 = vmax.f32 %v1281, %v1285
          %v1298 = vmax.f32 %v1282, %v1286
          %v1299 = vmax.f32 %v1283, %v1287
          %v1300 = vmax.f32 %v1284, %v1288
          %v1301 = vmax.f32 %v1297, %v1289
          %v1302 = vmax.f32 %v1298, %v1290
          %v1303 = vmax.f32 %v1299, %v1291
          %v1304 = vmax.f32 %v1300, %v1292
          %v1305 = vmax.f32 %v1301, %v1293
          %v1306 = vmax.f32 %v1302, %v1294
          %v1307 = vmax.f32 %v1303, %v1295
          %v1308 = vmax.f32 %v1304, %v1296
          %v1309 = vmax.f32 %v1305, %v1306
          %v1310 = vmax.f32 %v1307, %v1308
          %v1311 = vmax.f32 %v1309, %v1310
          %v1312 = vrot.slane %v1311, 4
          %v1313 = vmax.f32 %v1311, %v1312
          %v1314 = vrot.slane %v1313, 2
          %v1315 = vmax.f32 %v1313, %v1314
          %v1316 = vrot.slane %v1315, 1
          %v1317 = vmax.f32 %v1315, %v1316
          %vm1318 = vcmp.eq.s32.totalorder %v1166, 2
          %vm1319 = vcmp.eq.s32.totalorder %v1169, 2
          %vm1320 = vcmp.eq.s32.totalorder %v1172, 2
          %vm1321 = vcmp.eq.s32.totalorder %v1175, 2
          %vm1322 = vcmp.eq.s32.totalorder %v1178, 2
          %vm1323 = vcmp.eq.s32.totalorder %v1181, 2
          %vm1324 = vcmp.eq.s32.totalorder %v1184, 2
          %vm1325 = vcmp.eq.s32.totalorder %v1187, 2
          %vm1326 = vcmp.eq.s32.totalorder %v1190, 2
          %vm1327 = vcmp.eq.s32.totalorder %v1193, 2
          %vm1328 = vcmp.eq.s32.totalorder %v1196, 2
          %vm1329 = vcmp.eq.s32.totalorder %v1199, 2
          %vm1330 = vcmp.eq.s32.totalorder %v1202, 2
          %vm1331 = vcmp.eq.s32.totalorder %v1205, 2
          %vm1332 = vcmp.eq.s32.totalorder %v1208, 2
          %vm1333 = vcmp.eq.s32.totalorder %v1211, 2
          %v1334 = vsel %vm1318, %v894, -3e+38
          %v1335 = vsel %vm1319, %v897, -3e+38
          %v1336 = vsel %vm1320, %v902, -3e+38
          %v1337 = vsel %vm1321, %v905, -3e+38
          %v1338 = vsel %vm1322, %v910, -3e+38
          %v1339 = vsel %vm1323, %v913, -3e+38
          %v1340 = vsel %vm1324, %v918, -3e+38
          %v1341 = vsel %vm1325, %v921, -3e+38
          %v1342 = vsel %vm1326, %v926, -3e+38
          %v1343 = vsel %vm1327, %v929, -3e+38
          %v1344 = vsel %vm1328, %v934, -3e+38
          %v1345 = vsel %vm1329, %v937, -3e+38
          %v1346 = vsel %vm1330, %v942, -3e+38
          %v1347 = vsel %vm1331, %v945, -3e+38
          %v1348 = vsel %vm1332, %v950, -3e+38
          %v1349 = vsel %vm1333, %v953, -3e+38
          %v1350 = vmax.f32 %v1334, %v1338
          %v1351 = vmax.f32 %v1335, %v1339
          %v1352 = vmax.f32 %v1336, %v1340
          %v1353 = vmax.f32 %v1337, %v1341
          %v1354 = vmax.f32 %v1350, %v1342
          %v1355 = vmax.f32 %v1351, %v1343
          %v1356 = vmax.f32 %v1352, %v1344
          %v1357 = vmax.f32 %v1353, %v1345
          %v1358 = vmax.f32 %v1354, %v1346
          %v1359 = vmax.f32 %v1355, %v1347
          %v1360 = vmax.f32 %v1356, %v1348
          %v1361 = vmax.f32 %v1357, %v1349
          %v1362 = vmax.f32 %v1358, %v1359
          %v1363 = vmax.f32 %v1360, %v1361
          %v1364 = vmax.f32 %v1362, %v1363
          %v1365 = vrot.slane %v1364, 4
          %v1366 = vmax.f32 %v1364, %v1365
          %v1367 = vrot.slane %v1366, 2
          %v1368 = vmax.f32 %v1366, %v1367
          %v1369 = vrot.slane %v1368, 1
          %v1370 = vmax.f32 %v1368, %v1369
          %vm1371 = vcmp.eq.s32.totalorder %v1166, 3
          %vm1372 = vcmp.eq.s32.totalorder %v1169, 3
          %vm1373 = vcmp.eq.s32.totalorder %v1172, 3
          %vm1374 = vcmp.eq.s32.totalorder %v1175, 3
          %vm1375 = vcmp.eq.s32.totalorder %v1178, 3
          %vm1376 = vcmp.eq.s32.totalorder %v1181, 3
          %vm1377 = vcmp.eq.s32.totalorder %v1184, 3
          %vm1378 = vcmp.eq.s32.totalorder %v1187, 3
          %vm1379 = vcmp.eq.s32.totalorder %v1190, 3
          %vm1380 = vcmp.eq.s32.totalorder %v1193, 3
          %vm1381 = vcmp.eq.s32.totalorder %v1196, 3
          %vm1382 = vcmp.eq.s32.totalorder %v1199, 3
          %vm1383 = vcmp.eq.s32.totalorder %v1202, 3
          %vm1384 = vcmp.eq.s32.totalorder %v1205, 3
          %vm1385 = vcmp.eq.s32.totalorder %v1208, 3
          %vm1386 = vcmp.eq.s32.totalorder %v1211, 3
          %v1387 = vsel %vm1371, %v894, -3e+38
          %v1388 = vsel %vm1372, %v897, -3e+38
          %v1389 = vsel %vm1373, %v902, -3e+38
          %v1390 = vsel %vm1374, %v905, -3e+38
          %v1391 = vsel %vm1375, %v910, -3e+38
          %v1392 = vsel %vm1376, %v913, -3e+38
          %v1393 = vsel %vm1377, %v918, -3e+38
          %v1394 = vsel %vm1378, %v921, -3e+38
          %v1395 = vsel %vm1379, %v926, -3e+38
          %v1396 = vsel %vm1380, %v929, -3e+38
          %v1397 = vsel %vm1381, %v934, -3e+38
          %v1398 = vsel %vm1382, %v937, -3e+38
          %v1399 = vsel %vm1383, %v942, -3e+38
          %v1400 = vsel %vm1384, %v945, -3e+38
          %v1401 = vsel %vm1385, %v950, -3e+38
          %v1402 = vsel %vm1386, %v953, -3e+38
          %v1403 = vmax.f32 %v1387, %v1391
          %v1404 = vmax.f32 %v1388, %v1392
          %v1405 = vmax.f32 %v1389, %v1393
          %v1406 = vmax.f32 %v1390, %v1394
          %v1407 = vmax.f32 %v1403, %v1395
          %v1408 = vmax.f32 %v1404, %v1396
          %v1409 = vmax.f32 %v1405, %v1397
          %v1410 = vmax.f32 %v1406, %v1398
          %v1411 = vmax.f32 %v1407, %v1399
          %v1412 = vmax.f32 %v1408, %v1400
          %v1413 = vmax.f32 %v1409, %v1401
          %v1414 = vmax.f32 %v1410, %v1402
          %v1415 = vmax.f32 %v1411, %v1412
          %v1416 = vmax.f32 %v1413, %v1414
          %v1417 = vmax.f32 %v1415, %v1416
          %v1418 = vrot.slane %v1417, 4
          %v1419 = vmax.f32 %v1417, %v1418
          %v1420 = vrot.slane %v1419, 2
          %v1421 = vmax.f32 %v1419, %v1420
          %v1422 = vrot.slane %v1421, 1
          %v1423 = vmax.f32 %v1421, %v1422
          %vm1424 = vcmp.eq.s32.totalorder %v1166, 4
          %vm1425 = vcmp.eq.s32.totalorder %v1169, 4
          %vm1426 = vcmp.eq.s32.totalorder %v1172, 4
          %vm1427 = vcmp.eq.s32.totalorder %v1175, 4
          %vm1428 = vcmp.eq.s32.totalorder %v1178, 4
          %vm1429 = vcmp.eq.s32.totalorder %v1181, 4
          %vm1430 = vcmp.eq.s32.totalorder %v1184, 4
          %vm1431 = vcmp.eq.s32.totalorder %v1187, 4
          %vm1432 = vcmp.eq.s32.totalorder %v1190, 4
          %vm1433 = vcmp.eq.s32.totalorder %v1193, 4
          %vm1434 = vcmp.eq.s32.totalorder %v1196, 4
          %vm1435 = vcmp.eq.s32.totalorder %v1199, 4
          %vm1436 = vcmp.eq.s32.totalorder %v1202, 4
          %vm1437 = vcmp.eq.s32.totalorder %v1205, 4
          %vm1438 = vcmp.eq.s32.totalorder %v1208, 4
          %vm1439 = vcmp.eq.s32.totalorder %v1211, 4
          %v1440 = vsel %vm1424, %v894, -3e+38
          %v1441 = vsel %vm1425, %v897, -3e+38
          %v1442 = vsel %vm1426, %v902, -3e+38
          %v1443 = vsel %vm1427, %v905, -3e+38
          %v1444 = vsel %vm1428, %v910, -3e+38
          %v1445 = vsel %vm1429, %v913, -3e+38
          %v1446 = vsel %vm1430, %v918, -3e+38
          %v1447 = vsel %vm1431, %v921, -3e+38
          %v1448 = vsel %vm1432, %v926, -3e+38
          %v1449 = vsel %vm1433, %v929, -3e+38
          %v1450 = vsel %vm1434, %v934, -3e+38
          %v1451 = vsel %vm1435, %v937, -3e+38
          %v1452 = vsel %vm1436, %v942, -3e+38
          %v1453 = vsel %vm1437, %v945, -3e+38
          %v1454 = vsel %vm1438, %v950, -3e+38
          %v1455 = vsel %vm1439, %v953, -3e+38
          %v1456 = vmax.f32 %v1440, %v1444
          %v1457 = vmax.f32 %v1441, %v1445
          %v1458 = vmax.f32 %v1442, %v1446
          %v1459 = vmax.f32 %v1443, %v1447
          %v1460 = vmax.f32 %v1456, %v1448
          %v1461 = vmax.f32 %v1457, %v1449
          %v1462 = vmax.f32 %v1458, %v1450
          %v1463 = vmax.f32 %v1459, %v1451
          %v1464 = vmax.f32 %v1460, %v1452
          %v1465 = vmax.f32 %v1461, %v1453
          %v1466 = vmax.f32 %v1462, %v1454
          %v1467 = vmax.f32 %v1463, %v1455
          %v1468 = vmax.f32 %v1464, %v1465
          %v1469 = vmax.f32 %v1466, %v1467
          %v1470 = vmax.f32 %v1468, %v1469
          %v1471 = vrot.slane %v1470, 4
          %v1472 = vmax.f32 %v1470, %v1471
          %v1473 = vrot.slane %v1472, 2
          %v1474 = vmax.f32 %v1472, %v1473
          %v1475 = vrot.slane %v1474, 1
          %v1476 = vmax.f32 %v1474, %v1475
          %vm1477 = vcmp.eq.s32.totalorder %v1166, 5
          %vm1478 = vcmp.eq.s32.totalorder %v1169, 5
          %vm1479 = vcmp.eq.s32.totalorder %v1172, 5
          %vm1480 = vcmp.eq.s32.totalorder %v1175, 5
          %vm1481 = vcmp.eq.s32.totalorder %v1178, 5
          %vm1482 = vcmp.eq.s32.totalorder %v1181, 5
          %vm1483 = vcmp.eq.s32.totalorder %v1184, 5
          %vm1484 = vcmp.eq.s32.totalorder %v1187, 5
          %vm1485 = vcmp.eq.s32.totalorder %v1190, 5
          %vm1486 = vcmp.eq.s32.totalorder %v1193, 5
          %vm1487 = vcmp.eq.s32.totalorder %v1196, 5
          %vm1488 = vcmp.eq.s32.totalorder %v1199, 5
          %vm1489 = vcmp.eq.s32.totalorder %v1202, 5
          %vm1490 = vcmp.eq.s32.totalorder %v1205, 5
          %vm1491 = vcmp.eq.s32.totalorder %v1208, 5
          %vm1492 = vcmp.eq.s32.totalorder %v1211, 5
          %v1493 = vsel %vm1477, %v894, -3e+38
          %v1494 = vsel %vm1478, %v897, -3e+38
          %v1495 = vsel %vm1479, %v902, -3e+38
          %v1496 = vsel %vm1480, %v905, -3e+38
          %v1497 = vsel %vm1481, %v910, -3e+38
          %v1498 = vsel %vm1482, %v913, -3e+38
          %v1499 = vsel %vm1483, %v918, -3e+38
          %v1500 = vsel %vm1484, %v921, -3e+38
          %v1501 = vsel %vm1485, %v926, -3e+38
          %v1502 = vsel %vm1486, %v929, -3e+38
          %v1503 = vsel %vm1487, %v934, -3e+38
          %v1504 = vsel %vm1488, %v937, -3e+38
          %v1505 = vsel %vm1489, %v942, -3e+38
          %v1506 = vsel %vm1490, %v945, -3e+38
          %v1507 = vsel %vm1491, %v950, -3e+38
          %v1508 = vsel %vm1492, %v953, -3e+38
          %v1509 = vmax.f32 %v1493, %v1497
          %v1510 = vmax.f32 %v1494, %v1498
          %v1511 = vmax.f32 %v1495, %v1499
          %v1512 = vmax.f32 %v1496, %v1500
          %v1513 = vmax.f32 %v1509, %v1501
          %v1514 = vmax.f32 %v1510, %v1502
          %v1515 = vmax.f32 %v1511, %v1503
          %v1516 = vmax.f32 %v1512, %v1504
          %v1517 = vmax.f32 %v1513, %v1505
          %v1518 = vmax.f32 %v1514, %v1506
          %v1519 = vmax.f32 %v1515, %v1507
          %v1520 = vmax.f32 %v1516, %v1508
          %v1521 = vmax.f32 %v1517, %v1518
          %v1522 = vmax.f32 %v1519, %v1520
          %v1523 = vmax.f32 %v1521, %v1522
          %v1524 = vrot.slane %v1523, 4
          %v1525 = vmax.f32 %v1523, %v1524
          %v1526 = vrot.slane %v1525, 2
          %v1527 = vmax.f32 %v1525, %v1526
          %v1528 = vrot.slane %v1527, 1
          %v1529 = vmax.f32 %v1527, %v1528
          %vm1530 = vcmp.eq.s32.totalorder %v1166, 6
          %vm1531 = vcmp.eq.s32.totalorder %v1169, 6
          %vm1532 = vcmp.eq.s32.totalorder %v1172, 6
          %vm1533 = vcmp.eq.s32.totalorder %v1175, 6
          %vm1534 = vcmp.eq.s32.totalorder %v1178, 6
          %vm1535 = vcmp.eq.s32.totalorder %v1181, 6
          %vm1536 = vcmp.eq.s32.totalorder %v1184, 6
          %vm1537 = vcmp.eq.s32.totalorder %v1187, 6
          %vm1538 = vcmp.eq.s32.totalorder %v1190, 6
          %vm1539 = vcmp.eq.s32.totalorder %v1193, 6
          %vm1540 = vcmp.eq.s32.totalorder %v1196, 6
          %vm1541 = vcmp.eq.s32.totalorder %v1199, 6
          %vm1542 = vcmp.eq.s32.totalorder %v1202, 6
          %vm1543 = vcmp.eq.s32.totalorder %v1205, 6
          %vm1544 = vcmp.eq.s32.totalorder %v1208, 6
          %vm1545 = vcmp.eq.s32.totalorder %v1211, 6
          %v1546 = vsel %vm1530, %v894, -3e+38
          %v1547 = vsel %vm1531, %v897, -3e+38
          %v1548 = vsel %vm1532, %v902, -3e+38
          %v1549 = vsel %vm1533, %v905, -3e+38
          %v1550 = vsel %vm1534, %v910, -3e+38
          %v1551 = vsel %vm1535, %v913, -3e+38
          %v1552 = vsel %vm1536, %v918, -3e+38
          %v1553 = vsel %vm1537, %v921, -3e+38
          %v1554 = vsel %vm1538, %v926, -3e+38
          %v1555 = vsel %vm1539, %v929, -3e+38
          %v1556 = vsel %vm1540, %v934, -3e+38
          %v1557 = vsel %vm1541, %v937, -3e+38
          %v1558 = vsel %vm1542, %v942, -3e+38
          %v1559 = vsel %vm1543, %v945, -3e+38
          %v1560 = vsel %vm1544, %v950, -3e+38
          %v1561 = vsel %vm1545, %v953, -3e+38
          %v1562 = vmax.f32 %v1546, %v1550
          %v1563 = vmax.f32 %v1547, %v1551
          %v1564 = vmax.f32 %v1548, %v1552
          %v1565 = vmax.f32 %v1549, %v1553
          %v1566 = vmax.f32 %v1562, %v1554
          %v1567 = vmax.f32 %v1563, %v1555
          %v1568 = vmax.f32 %v1564, %v1556
          %v1569 = vmax.f32 %v1565, %v1557
          %v1570 = vmax.f32 %v1566, %v1558
          %v1571 = vmax.f32 %v1567, %v1559
          %v1572 = vmax.f32 %v1568, %v1560
          %v1573 = vmax.f32 %v1569, %v1561
          %v1574 = vmax.f32 %v1570, %v1571
          %v1575 = vmax.f32 %v1572, %v1573
          %v1576 = vmax.f32 %v1574, %v1575
          %v1577 = vrot.slane %v1576, 4
          %v1578 = vmax.f32 %v1576, %v1577
          %v1579 = vrot.slane %v1578, 2
          %v1580 = vmax.f32 %v1578, %v1579
          %v1581 = vrot.slane %v1580, 1
          %v1582 = vmax.f32 %v1580, %v1581
          %vm1583 = vcmp.eq.s32.totalorder %v1166, 7
          %vm1584 = vcmp.eq.s32.totalorder %v1169, 7
          %vm1585 = vcmp.eq.s32.totalorder %v1172, 7
          %vm1586 = vcmp.eq.s32.totalorder %v1175, 7
          %vm1587 = vcmp.eq.s32.totalorder %v1178, 7
          %vm1588 = vcmp.eq.s32.totalorder %v1181, 7
          %vm1589 = vcmp.eq.s32.totalorder %v1184, 7
          %vm1590 = vcmp.eq.s32.totalorder %v1187, 7
          %vm1591 = vcmp.eq.s32.totalorder %v1190, 7
          %vm1592 = vcmp.eq.s32.totalorder %v1193, 7
          %vm1593 = vcmp.eq.s32.totalorder %v1196, 7
          %vm1594 = vcmp.eq.s32.totalorder %v1199, 7
          %vm1595 = vcmp.eq.s32.totalorder %v1202, 7
          %vm1596 = vcmp.eq.s32.totalorder %v1205, 7
          %vm1597 = vcmp.eq.s32.totalorder %v1208, 7
          %vm1598 = vcmp.eq.s32.totalorder %v1211, 7
          %v1599 = vsel %vm1583, %v894, -3e+38
          %v1600 = vsel %vm1584, %v897, -3e+38
          %v1601 = vsel %vm1585, %v902, -3e+38
          %v1602 = vsel %vm1586, %v905, -3e+38
          %v1603 = vsel %vm1587, %v910, -3e+38
          %v1604 = vsel %vm1588, %v913, -3e+38
          %v1605 = vsel %vm1589, %v918, -3e+38
          %v1606 = vsel %vm1590, %v921, -3e+38
          %v1607 = vsel %vm1591, %v926, -3e+38
          %v1608 = vsel %vm1592, %v929, -3e+38
          %v1609 = vsel %vm1593, %v934, -3e+38
          %v1610 = vsel %vm1594, %v937, -3e+38
          %v1611 = vsel %vm1595, %v942, -3e+38
          %v1612 = vsel %vm1596, %v945, -3e+38
          %v1613 = vsel %vm1597, %v950, -3e+38
          %v1614 = vsel %vm1598, %v953, -3e+38
          %v1615 = vmax.f32 %v1599, %v1603
          %v1616 = vmax.f32 %v1600, %v1604
          %v1617 = vmax.f32 %v1601, %v1605
          %v1618 = vmax.f32 %v1602, %v1606
          %v1619 = vmax.f32 %v1615, %v1607
          %v1620 = vmax.f32 %v1616, %v1608
          %v1621 = vmax.f32 %v1617, %v1609
          %v1622 = vmax.f32 %v1618, %v1610
          %v1623 = vmax.f32 %v1619, %v1611
          %v1624 = vmax.f32 %v1620, %v1612
          %v1625 = vmax.f32 %v1621, %v1613
          %v1626 = vmax.f32 %v1622, %v1614
          %v1627 = vmax.f32 %v1623, %v1624
          %v1628 = vmax.f32 %v1625, %v1626
          %v1629 = vmax.f32 %v1627, %v1628
          %v1630 = vrot.slane %v1629, 4
          %v1631 = vmax.f32 %v1629, %v1630
          %v1632 = vrot.slane %v1631, 2
          %v1633 = vmax.f32 %v1631, %v1632
          %v1634 = vrot.slane %v1633, 1
          %v1635 = vmax.f32 %v1633, %v1634
          %vm1636 = vcmask 1040384
          %v1637 = vsel %vm1636, %v1264, %v1317
          %vm1638 = vcmask 1041408
          %v1639 = vsel %vm1638, %v1637, %v1370
          %vm1640 = vcmask 1042432
          %v1641 = vsel %vm1640, %v1639, %v1423
          %vm1642 = vcmask 1043456
          %v1643 = vsel %vm1642, %v1641, %v1476
          %vm1644 = vcmask 1044480
          %v1645 = vsel %vm1644, %v1643, %v1529
          %vm1646 = vcmask 1045504
          %v1647 = vsel %vm1646, %v1645, %v1582
          %vm1648 = vcmask 1046528
          %v1649 = vsel %vm1648, %v1647, %v1635
          %1650 = vst [vmem:[%s460] sm:$0xff] %v1649
        $region97: #{gnn_forward.3} parent=84 // pred_fallthru
          _
        %s1651 = smul.u32 16, %s24
        %p1652 = scmp.lt.s32.totalorder %s1651, 47
        %s1653 = scalar_select %p1652, %s1651, 47
        %s1654 = smul.addr %s1653, 8
        %s1655 = scalar_lea.vmem %s7, %s1654
        %p1656 = scmp.lt.s32.totalorder %s24, 2
        %s1657 = scalar_select %p1656, %s24, 2
        %s1658 = smul.addr %s1657, 8
        %s1659 = scalar_lea.vmem %s8, %s1658
        // Predicated region
        $region98: #{gnn_forward.3} parent=84 // pred_check
          %p1660 = pneg %p209
        $region99: #{gnn_forward.3} parent=84 // pred_check_branch
          %1662 = sbr.rel (%p1660) target = $region101
        $region100: #{gnn_forward.3} parent=84 // pred_region
          %s1663 = smul.u32 16, %s24
        $region101: #{gnn_forward.3} parent=84 // pred_fallthru
          _
        // Predicated region
        $region102: #{gnn_forward.3} parent=84 // pred_check
          %p1664 = pneg %p235
        $region103: #{gnn_forward.3} parent=84 // pred_check_branch
          %1666 = sbr.rel (%p1664) target = $region105
        $region104: #{gnn_forward.3} parent=84 // pred_region
          _
        $region105: #{gnn_forward.3} parent=84 // pred_fallthru
          _
      $region85: #{gnn_forward.3} parent=5 // pred_fallthru
        _
      %p1667 = scmp.le.s32.totalorder 2, %s15
      // Predicated region
      $region106: #{gnn_forward.3} parent=5 // pred_check
        %p1668 = pneg %p1667
      $region107: #{gnn_forward.3} parent=5 // pred_check_branch
        %1670 = sbr.rel (%p1668) target = $region109
      $region108: #{gnn_forward.3} parent=5 // pred_region
        %s1671 = ssub.s32 %s15, 2
        // Predicated region
        $region110: #{gnn_forward.3} parent=108 // pred_check
          %p1672 = pneg %p215
        $region111: #{gnn_forward.3} parent=108 // pred_check_branch
          %1674 = sbr.rel (%p1672) target = $region113
        $region112: #{gnn_forward.3} parent=108 // pred_region
          %s1675 = smul.u32 16, %s26
          %p1676 = scmp.lt.s32.totalorder %s1675, 47
          %s1677 = scalar_select %p1676, %s1675, 47
          %s1678 = smul.addr %s1677, 8
          %s1679 = scalar_lea.vmem %s7, %s1678
        $region113: #{gnn_forward.3} parent=108 // pred_fallthru
          _
        // Predicated region
        $region114: #{gnn_forward.3} parent=108 // pred_check
          %p1680 = pneg %p241
        $region115: #{gnn_forward.3} parent=108 // pred_check_branch
          %1682 = sbr.rel (%p1680) target = $region117
        $region116: #{gnn_forward.3} parent=108 // pred_region
          %p1683 = scmp.lt.s32.totalorder %s26, 2
          %s1684 = scalar_select %p1683, %s26, 2
          %s1685 = smul.addr %s1684, 8
          %s1686 = scalar_lea.vmem %s8, %s1685
        $region117: #{gnn_forward.3} parent=108 // pred_fallthru
          _
      $region109: #{gnn_forward.3} parent=5 // pred_fallthru
        _
    $region6: #{gnn_forward.3} parent=1 // loop_footer
      %s19 = sadd.s32 1, %s15
    $region7: #{gnn_forward.3} parent=1 // loop_footer_branch
      %14 = sbr.rel target = $region3
    $region8: #{gnn_forward.3} parent=1 // loop_exit
      _

</llo_original>
